<compile_context>
chip_gen: v6e
topology: v6e:2x2x1
jax: 0.10.0
libtpu: 0.0.40
codegen_flags: <defaults>
</compile_context>

<pallas_src>
import jax
import jax.numpy as jnp
from jax.experimental import pallas as pl
from jax.experimental.pallas import tpu as pltpu

NB_FEATURES = 2048
L = 128     # fc1 width
D = 128     # gated-attention hidden width
H2 = 128
H3 = 64


def _attention_kernel(x_ref,
                      w1_ref, b1_ref,
                      wvu_ref, bvu_ref,
                      ww_ref,
                      w2_ref, b2_ref,
                      w3_ref, b3_ref,
                      wc_ref,
                      bc_ref,
                      yprob_ref, a_ref):
    TB, N, F = x_ref.shape
    Lh = w1_ref.shape[1]
    Dg = wvu_ref.shape[1] // 2

    x2 = x_ref[...].reshape(TB * N, F)

    # fc1: (TB*N, F) @ (F, L); compute-dtype operands, f32 accumulation.
    h = jnp.dot(x2, w1_ref[...], preferred_element_type=jnp.float32) + b1_ref[...]

    # Fused gated-attention branches: one (TB*N, L) @ (L, 2D) matmul.  h is
    # cast back to the weight dtype (bf16 fast path) for the MXU; activation
    # math stays f32.
    vu = jnp.dot(h.astype(wvu_ref.dtype), wvu_ref[...],
                 preferred_element_type=jnp.float32) + bvu_ref[...]
    gated = jnp.tanh(vu[:, :Dg]) * jax.nn.sigmoid(vu[:, Dg:])           # (TB*N, D)

    # attention_weights (D -> 1): VPU multiply + lane reduce.  The scalar bias
    # is dropped: softmax is shift-invariant so it cannot change any output.
    scores = jnp.sum((gated * ww_ref[...]).reshape(TB, N, Dg), axis=-1)  # (TB, N)

    # softmax over instances within each bag
    m = jnp.max(scores, axis=1, keepdims=True)
    e = jnp.exp(scores - m)
    attn = e / jnp.sum(e, axis=1, keepdims=True)                        # (TB, N)
    a_ref[...] = attn

    # M = A @ h as a per-bag weighted sum on the VPU (sublane reduction).
    # Replaces the block-diagonal MXU matmul whose cost scaled as TB^2.
    h3 = h.reshape(TB, N, Lh)
    M = jnp.sum(h3 * attn.reshape(TB, N, 1), axis=1)                    # (TB, L)

    # fc2 -> tanh, fc3 -> tanh (tiny matmuls, f32 operands).
    M = jnp.tanh(jnp.dot(M, w2_ref[...], preferred_element_type=jnp.float32)
                 + b2_ref[...])
    M = jnp.tanh(jnp.dot(M, w3_ref[...], preferred_element_type=jnp.float32)
                 + b3_ref[...])

    # classifier (64 -> 1): VPU reduction + sigmoid.
    logit = jnp.sum(M * wc_ref[...], axis=-1, keepdims=True) + bc_ref[0]
    yprob_ref[...] = jax.nn.sigmoid(logit)


def _vmem_capacity_bytes():
    try:
        return int(pltpu.get_tpu_info().vmem_capacity_bytes)
    except Exception:
        return 64 * 1024 * 1024     # conservative (v7x-sized) default


def _choose_tb(B, N, target_rows):
    """Bag-tile so each grid step sees ~target_rows instance rows.

    Result is a multiple of 8 (sublane-aligned output blocks) or the whole
    batch (single tile, full-dim exception to the (8,128) rule).
    """
    tb = max(1, int(target_rows) // max(N, 1))
    if tb >= B:
        return B
    tb = max(8, (tb // 8) * 8)
    return min(tb, B)


def make_params(key):
    """Deterministic nn.Linear-style init: U(-1/sqrt(fan_in), 1/sqrt(fan_in))."""
    def linear(k, fan_in, fan_out):
        kw, kb = jax.random.split(k)
        bound = 1.0 / jnp.sqrt(fan_in)
        w = jax.random.uniform(kw, (fan_in, fan_out), jnp.float32, -bound, bound)
        b = jax.random.uniform(kb, (fan_out,), jnp.float32, -bound, bound)
        return w, b

    keys = jax.random.split(key, 7)
    params = {}
    params["fc1"] = linear(keys[0], NB_FEATURES, L)
    params["att_v"] = linear(keys[1], L, D)
    params["att_u"] = linear(keys[2], L, D)
    params["att_w"] = linear(keys[3], D, 1)
    params["fc2"] = linear(keys[4], L, H2)
    params["fc3"] = linear(keys[5], H2, H3)
    params["clf"] = linear(keys[6], H3, 1)
    return params


def attention_forward(x, params, compute_dtype=jnp.bfloat16, target_rows=None):
    B, N, F = x.shape
    assert F == NB_FEATURES

    w1, b1 = params["fc1"]
    wv, bv = params["att_v"]
    wu, bu = params["att_u"]
    ww, _bw = params["att_w"]      # attention_weights bias unused (softmax shift-inv.)
    w2, b2 = params["fc2"]
    w3, b3 = params["fc3"]
    wc, bc = params["clf"]

    # Cast the HBM-dominant operands; everything downstream stays f32.
    x_c = x.astype(compute_dtype)
    w1_c = w1.astype(compute_dtype)
    wvu_c = jnp.concatenate([wv, wu], axis=1).astype(compute_dtype)    # (L, 2D)
    bvur = jnp.concatenate([bv, bu]).reshape(1, 2 * D)
    ww_row = ww.reshape(1, D)
    wc_row = wc.reshape(1, H3)
    b1r = b1.reshape(1, L)
    b2r = b2.reshape(1, H2)
    b3r = b3.reshape(1, H3)

    # ---- Generation-aware tiling & VMEM budget ------------------------------
    vmem_cap = _vmem_capacity_bytes()
    vmem_limit = min(vmem_cap * 3 // 4, 96 * 1024 * 1024)   # 96 MiB v5e/v6e, 48 MiB v7x
    if target_rows is None:
        target_rows = 4096 if vmem_cap >= 96 * 1024 * 1024 else 2048

    x_itemsize = jnp.dtype(compute_dtype).itemsize
    per_row = 2 * F * x_itemsize + 3 * 1024    # double-buffered x row + f32 intermediates
    fixed = 4 * 1024 * 1024                    # resident weights + slack
    rows_budget = max(N, (vmem_limit - fixed) // per_row)
    target_rows = min(int(target_rows), int(rows_budget))
    # TODO(synk): if a single bag (N rows) exceeds rows_budget, an
    # instance-tiled online-softmax path is needed (currently whole-bag tiles).

    tb = _choose_tb(B, N, target_rows)
    n_blocks = pl.cdiv(B, tb)
    Bp = n_blocks * tb
    if Bp != B:
        x_c = jnp.pad(x_c, ((0, Bp - B), (0, 0), (0, 0)))

    # The 8-row sublane alignment can bump tb above the row target when N is
    # large; make sure the VMEM limit still covers the chosen tile (<=85% cap).
    step_bytes = 2 * tb * N * F * x_itemsize + tb * N * 3 * 1024 + fixed
    vmem_limit = int(max(vmem_limit, min(step_bytes, vmem_cap * 85 // 100)))

    resident = [w1_c, b1r, wvu_c, bvur, ww_row, w2, b2r, w3, b3r, wc_row]
    args = [x_c] + resident + [bc]

    out_shapes = (
        jax.ShapeDtypeStruct((Bp, 1), jnp.float32),
        jax.ShapeDtypeStruct((Bp, N), jnp.float32),
    )
    out_specs = (
        pl.BlockSpec((tb, 1), lambda i: (i, 0)),     # Y_prob
        pl.BlockSpec((tb, N), lambda i: (i, 0)),     # A (lane-dense; reshaped outside)
    )

    bytes_accessed = (sum(int(a.size) * a.dtype.itemsize for a in args)
                      + Bp * (N + 1) * 4)
    flops = (2 * Bp * N * (F * L + L * 2 * D + D + L)
             + 2 * Bp * (L * H2 + H2 * H3 + H3))
    transcendentals = Bp * N * (2 * D + 1) + Bp * (H2 + H3 + 1)

    def _build(single_buffer_weights):
        def wspec(shape):
            idx = lambda i: (0,) * len(shape)
            if single_buffer_weights:
                # Weights are grid-invariant: one VMEM buffer is enough.
                return pl.BlockSpec(shape, idx, pipeline_mode=pl.Buffered(1))
            return pl.BlockSpec(shape, idx)

        in_specs = ([pl.BlockSpec((tb, N, F), lambda i: (i, 0, 0))]
                    + [wspec(w.shape) for w in resident]
                    + [pl.BlockSpec(memory_space=pltpu.MemorySpace.SMEM)])

        return pl.pallas_call(
            _attention_kernel,
            grid=(n_blocks,),
            in_specs=in_specs,
            out_specs=out_specs,
            out_shape=out_shapes,
            compiler_params=pltpu.CompilerParams(
                dimension_semantics=("parallel",),
                vmem_limit_bytes=vmem_limit,
            ),
            cost_estimate=pl.CostEstimate(
                flops=int(flops),
                transcendentals=int(transcendentals),
                bytes_accessed=int(bytes_accessed),
            ),
        )

    try:
        y_prob_p, a_p = _build(True)(*args)
    except Exception:
        # pipeline_mode=pl.Buffered(1) unsupported on this jax version; fall
        # back to default double-buffered resident weights (~1.5 MiB extra).
        y_prob_p, a_p = _build(False)(*args)

    y_prob = y_prob_p[:B]
    y_hat = (y_prob >= 0.5).astype(jnp.float32)   # torch.ge done in the wrapper
    A = a_p[:B].reshape(B, 1, N)
    return y_prob, y_hat, A


def attention_ref(x, params):
    """Pure-JAX f32 reference for correctness checking."""
    w1, b1 = params["fc1"]
    wv, bv = params["att_v"]
    wu, bu = params["att_u"]
    ww, bw = params["att_w"]
    w2, b2 = params["fc2"]
    w3, b3 = params["fc3"]
    wc, bc = params["clf"]

    h = x @ w1 + b1                                        # (B, N, L)
    a_v = jnp.tanh(h @ wv + bv)
    a_u = jax.nn.sigmoid(h @ wu + bu)
    scores = (a_v * a_u) @ ww + bw                         # (B, N, 1)
    a = jnp.swapaxes(scores, 1, 2)                         # (B, 1, N)
    a = jax.nn.softmax(a, axis=2)
    M = jnp.matmul(a, h)[:, 0, :]                          # (B, L)
    M = jnp.tanh(M @ w2 + b2)
    M = jnp.tanh(M @ w3 + b3)
    y_prob = jax.nn.sigmoid(M @ wc + bc)
    y_hat = (y_prob >= 0.5).astype(jnp.float32)
    return y_prob, y_hat, a


if __name__ == "__main__":
    key = jax.random.PRNGKey(0)
    kx, kp, kx2 = jax.random.split(key, 3)

    B, N = 2, 8                                            # 2 bags, 8 instances each
    x = jax.random.normal(kx, (B, N, NB_FEATURES), jnp.float32)
    params = make_params(kp)

    y_prob_r, y_hat_r, A_r = attention_ref(x, params)

    # f32 path: tight correctness check against the pure-JAX reference.
    y_prob, y_hat, A = attention_forward(x, params, compute_dtype=jnp.float32)
    jax.block_until_ready((y_prob, y_hat, A))
    assert jnp.allclose(y_prob, y_prob_r, atol=1e-4, rtol=1e-4)
    assert jnp.allclose(y_hat, y_hat_r)
    assert jnp.allclose(A, A_r, atol=1e-4, rtol=1e-4)

    # bf16 fast path (default, generation-aware tiling): f32 accumulation
    # inside, looser tolerance.
    y_prob_b, y_hat_b, A_b = attention_forward(x, params)
    jax.block_until_ready((y_prob_b, y_hat_b, A_b))
    assert jnp.allclose(y_prob_b, y_prob_r, atol=5e-2, rtol=5e-2)
    assert jnp.allclose(A_b, A_r, atol=5e-2, rtol=5e-2)

    # Multi-block path: forced small row target -> tb=8, 3 grid steps.
    B2, N2 = 24, 16
    x2 = jax.random.normal(kx2, (B2, N2, NB_FEATURES), jnp.float32)
    y2_r, _, A2_r = attention_ref(x2, params)
    y2, _, A2 = attention_forward(x2, params, compute_dtype=jnp.float32,
                                  target_rows=64)
    jax.block_until_ready((y2, A2))
    assert jnp.allclose(y2, y2_r, atol=1e-4, rtol=1e-4)
    assert jnp.allclose(A2, A2_r, atol=1e-4, rtol=1e-4)

    print("KERNEL_OK")
</pallas_src>

<mosaic_0001>
module attributes {stable_mosaic.version = 11 : i64} {
  func.func @_attention_kernel(%arg0: i32, %arg1: memref<2x8x2048xf32, #tpu.memory_space<vmem>>, %arg2: memref<2048x128xf32, #tpu.memory_space<vmem>>, %arg3: memref<1x128xf32, #tpu.memory_space<vmem>>, %arg4: memref<128x256xf32, #tpu.memory_space<vmem>>, %arg5: memref<1x256xf32, #tpu.memory_space<vmem>>, %arg6: memref<1x128xf32, #tpu.memory_space<vmem>>, %arg7: memref<128x128xf32, #tpu.memory_space<vmem>>, %arg8: memref<1x128xf32, #tpu.memory_space<vmem>>, %arg9: memref<128x64xf32, #tpu.memory_space<vmem>>, %arg10: memref<1x64xf32, #tpu.memory_space<vmem>>, %arg11: memref<1x64xf32, #tpu.memory_space<vmem>>, %arg12: memref<1xf32, #tpu.memory_space<smem>>, %arg13: memref<2x1xf32, #tpu.memory_space<vmem>>, %arg14: memref<2x8xf32, #tpu.memory_space<vmem>>) attributes {dimension_semantics = [#tpu.dimension_semantics<parallel>], iteration_bounds = array<i64: 1>, scalar_prefetch = 0 : i64, scratch_operands = 0 : i64, tpu.core_type = #tpu.core_type<tc>, window_params = [{transform_indices = @transform_0, window_bounds = array<i64: 2, 8, 2048>}, {pipeline_mode = #tpu.pipeline_mode<synchronous>, transform_indices = @transform_1, window_bounds = array<i64: 2048, 128>}, {pipeline_mode = #tpu.pipeline_mode<synchronous>, transform_indices = @transform_2, window_bounds = array<i64: 1, 128>}, {pipeline_mode = #tpu.pipeline_mode<synchronous>, transform_indices = @transform_3, window_bounds = array<i64: 128, 256>}, {pipeline_mode = #tpu.pipeline_mode<synchronous>, transform_indices = @transform_4, window_bounds = array<i64: 1, 256>}, {pipeline_mode = #tpu.pipeline_mode<synchronous>, transform_indices = @transform_5, window_bounds = array<i64: 1, 128>}, {pipeline_mode = #tpu.pipeline_mode<synchronous>, transform_indices = @transform_6, window_bounds = array<i64: 128, 128>}, {pipeline_mode = #tpu.pipeline_mode<synchronous>, transform_indices = @transform_7, window_bounds = array<i64: 1, 128>}, {pipeline_mode = #tpu.pipeline_mode<synchronous>, transform_indices = @transform_8, window_bounds = array<i64: 128, 64>}, {pipeline_mode = #tpu.pipeline_mode<synchronous>, transform_indices = @transform_9, window_bounds = array<i64: 1, 64>}, {pipeline_mode = #tpu.pipeline_mode<synchronous>, transform_indices = @transform_10, window_bounds = array<i64: 1, 64>}, {transform_indices = @transform_11, window_bounds = array<i64: 1>}, {transform_indices = @transform_12, window_bounds = array<i64: 2, 1>}, {transform_indices = @transform_13, window_bounds = array<i64: 2, 8>}]} {
    %c0 = arith.constant 0 : index
    %c0_0 = arith.constant 0 : index
    %c0_1 = arith.constant 0 : index
    %0 = vector.load %arg1[%c0, %c0_0, %c0_1] : memref<2x8x2048xf32, #tpu.memory_space<vmem>>, vector<2x8x2048xf32>
    %1 = vector.shape_cast %0 : vector<2x8x2048xf32> to vector<16x2048xf32>
    %c0_2 = arith.constant 0 : index
    %c0_3 = arith.constant 0 : index
    %2 = vector.load %arg2[%c0_2, %c0_3] : memref<2048x128xf32, #tpu.memory_space<vmem>>, vector<2048x128xf32>
    %cst = arith.constant dense<0.000000e+00> : vector<16x128xf32>
    %3 = tpu.matmul %1, %2, %cst {dimension_numbers = #tpu.dot_dimension_numbers<[1], [0], [0], [1], [0, 0, 1, 1], [], []>} : vector<16x2048xf32>, vector<2048x128xf32>, vector<16x128xf32> -> vector<16x128xf32>
    %c0_4 = arith.constant 0 : index
    %c0_5 = arith.constant 0 : index
    %4 = vector.load %arg3[%c0_4, %c0_5] : memref<1x128xf32, #tpu.memory_space<vmem>>, vector<1x128xf32>
    %5 = vector.broadcast %4 : vector<1x128xf32> to vector<16x128xf32>
    %6 = arith.addf %3, %5 : vector<16x128xf32>
    %c0_6 = arith.constant 0 : index
    %c0_7 = arith.constant 0 : index
    %7 = vector.load %arg4[%c0_6, %c0_7] : memref<128x256xf32, #tpu.memory_space<vmem>>, vector<128x256xf32>
    %cst_8 = arith.constant dense<0.000000e+00> : vector<16x256xf32>
    %8 = tpu.matmul %6, %7, %cst_8 {dimension_numbers = #tpu.dot_dimension_numbers<[1], [0], [0], [1], [0, 0, 1, 1], [], []>} : vector<16x128xf32>, vector<128x256xf32>, vector<16x256xf32> -> vector<16x256xf32>
    %c0_9 = arith.constant 0 : index
    %c0_10 = arith.constant 0 : index
    %9 = vector.load %arg5[%c0_9, %c0_10] : memref<1x256xf32, #tpu.memory_space<vmem>>, vector<1x256xf32>
    %10 = vector.broadcast %9 : vector<1x256xf32> to vector<16x256xf32>
    %11 = arith.addf %8, %10 : vector<16x256xf32>
    %12 = vector.extract_strided_slice %11 {offsets = [0, 0], sizes = [16, 128], strides = [1, 1]} : vector<16x256xf32> to vector<16x128xf32>
    %13 = math.tanh %12 : vector<16x128xf32>
    %14 = vector.extract_strided_slice %11 {offsets = [0, 128], sizes = [16, 128], strides = [1, 1]} : vector<16x256xf32> to vector<16x128xf32>
    %15 = arith.negf %14 : vector<16x128xf32>
    %16 = math.exp %15 : vector<16x128xf32>
    %cst_11 = arith.constant 1.000000e+00 : f32
    %17 = vector.broadcast %cst_11 : f32 to vector<16x128xf32>
    %18 = arith.addf %17, %16 : vector<16x128xf32>
    %19 = arith.divf %17, %18 : vector<16x128xf32>
    %20 = arith.mulf %13, %19 : vector<16x128xf32>
    %c0_12 = arith.constant 0 : index
    %c0_13 = arith.constant 0 : index
    %21 = vector.load %arg6[%c0_12, %c0_13] : memref<1x128xf32, #tpu.memory_space<vmem>>, vector<1x128xf32>
    %22 = vector.broadcast %21 : vector<1x128xf32> to vector<16x128xf32>
    %23 = arith.mulf %20, %22 : vector<16x128xf32>
    %24 = vector.shape_cast %23 : vector<16x128xf32> to vector<2x8x128xf32>
    %cst_14 = arith.constant dense<0.000000e+00> : vector<2x8xf32>
    %25 = vector.multi_reduction <add>, %24, %cst_14 [2] : vector<2x8x128xf32> to vector<2x8xf32>
    %cst_15 = arith.constant dense<0xFF800000> : vector<2xf32>
    %26 = vector.multi_reduction <maximumf>, %25, %cst_15 [1] : vector<2x8xf32> to vector<2xf32>
    %27 = vector.shape_cast %26 : vector<2xf32> to vector<2x1xf32>
    %28 = vector.broadcast %27 : vector<2x1xf32> to vector<2x8xf32>
    %29 = arith.subf %25, %28 : vector<2x8xf32>
    %30 = math.exp %29 : vector<2x8xf32>
    %cst_16 = arith.constant dense<0.000000e+00> : vector<2xf32>
    %31 = vector.multi_reduction <add>, %30, %cst_16 [1] : vector<2x8xf32> to vector<2xf32>
    %32 = vector.shape_cast %31 : vector<2xf32> to vector<2x1xf32>
    %33 = vector.broadcast %32 : vector<2x1xf32> to vector<2x8xf32>
    %34 = arith.divf %30, %33 : vector<2x8xf32>
    %c0_17 = arith.constant 0 : index
    %c0_18 = arith.constant 0 : index
    %35 = vector.load %arg14[%c0_17, %c0_18] : memref<2x8xf32, #tpu.memory_space<vmem>>, vector<2x8xf32>
    tpu.vector_store %arg14[%c0_17, %c0_18], %34 {strides = array<i32>} : memref<2x8xf32, #tpu.memory_space<vmem>>, vector<2x8xf32>,
    %36 = vector.shape_cast %6 : vector<16x128xf32> to vector<2x8x128xf32>
    %37 = vector.shape_cast %34 : vector<2x8xf32> to vector<2x8x1xf32>
    %38 = vector.broadcast %37 : vector<2x8x1xf32> to vector<2x8x128xf32>
    %39 = arith.mulf %36, %38 : vector<2x8x128xf32>
    %cst_19 = arith.constant dense<0.000000e+00> : vector<2x128xf32>
    %40 = vector.multi_reduction <add>, %39, %cst_19 [1] : vector<2x8x128xf32> to vector<2x128xf32>
    %c0_20 = arith.constant 0 : index
    %c0_21 = arith.constant 0 : index
    %41 = vector.load %arg7[%c0_20, %c0_21] : memref<128x128xf32, #tpu.memory_space<vmem>>, vector<128x128xf32>
    %cst_22 = arith.constant dense<0.000000e+00> : vector<2x128xf32>
    %42 = tpu.matmul %40, %41, %cst_22 {dimension_numbers = #tpu.dot_dimension_numbers<[1], [0], [0], [1], [0, 0, 1, 1], [], []>} : vector<2x128xf32>, vector<128x128xf32>, vector<2x128xf32> -> vector<2x128xf32>
    %c0_23 = arith.constant 0 : index
    %c0_24 = arith.constant 0 : index
    %43 = vector.load %arg8[%c0_23, %c0_24] : memref<1x128xf32, #tpu.memory_space<vmem>>, vector<1x128xf32>
    %44 = vector.broadcast %43 : vector<1x128xf32> to vector<2x128xf32>
    %45 = arith.addf %42, %44 : vector<2x128xf32>
    %46 = math.tanh %45 : vector<2x128xf32>
    %c0_25 = arith.constant 0 : index
    %c0_26 = arith.constant 0 : index
    %47 = vector.load %arg9[%c0_25, %c0_26] : memref<128x64xf32, #tpu.memory_space<vmem>>, vector<128x64xf32>
    %cst_27 = arith.constant dense<0.000000e+00> : vector<2x64xf32>
    %48 = tpu.matmul %46, %47, %cst_27 {dimension_numbers = #tpu.dot_dimension_numbers<[1], [0], [0], [1], [0, 0, 1, 1], [], []>} : vector<2x128xf32>, vector<128x64xf32>, vector<2x64xf32> -> vector<2x64xf32>
    %c0_28 = arith.constant 0 : index
    %c0_29 = arith.constant 0 : index
    %49 = vector.load %arg10[%c0_28, %c0_29] : memref<1x64xf32, #tpu.memory_space<vmem>>, vector<1x64xf32>
    %50 = vector.broadcast %49 : vector<1x64xf32> to vector<2x64xf32>
    %51 = arith.addf %48, %50 : vector<2x64xf32>
    %52 = math.tanh %51 : vector<2x64xf32>
    %c0_30 = arith.constant 0 : index
    %c0_31 = arith.constant 0 : index
    %53 = vector.load %arg11[%c0_30, %c0_31] : memref<1x64xf32, #tpu.memory_space<vmem>>, vector<1x64xf32>
    %54 = vector.broadcast %53 : vector<1x64xf32> to vector<2x64xf32>
    %55 = arith.mulf %52, %54 : vector<2x64xf32>
    %cst_32 = arith.constant dense<0.000000e+00> : vector<2xf32>
    %56 = vector.multi_reduction <add>, %55, %cst_32 [1] : vector<2x64xf32> to vector<2xf32>
    %57 = vector.shape_cast %56 : vector<2xf32> to vector<2x1xf32>
    %c0_33 = arith.constant 0 : index
    %58 = memref.load %arg12[%c0_33] : memref<1xf32, #tpu.memory_space<smem>>
    %59 = vector.broadcast %58 : f32 to vector<2x1xf32>
    %60 = arith.addf %57, %59 : vector<2x1xf32>
    %61 = arith.negf %60 : vector<2x1xf32>
    %62 = math.exp %61 : vector<2x1xf32>
    %cst_34 = arith.constant 1.000000e+00 : f32
    %63 = vector.broadcast %cst_34 : f32 to vector<2x1xf32>
    %64 = arith.addf %63, %62 : vector<2x1xf32>
    %65 = arith.divf %63, %64 : vector<2x1xf32>
    %c0_35 = arith.constant 0 : index
    %c0_36 = arith.constant 0 : index
    %66 = vector.load %arg13[%c0_35, %c0_36] : memref<2x1xf32, #tpu.memory_space<vmem>>, vector<2x1xf32>
    tpu.vector_store %arg13[%c0_35, %c0_36], %65 {strides = array<i32>} : memref<2x1xf32, #tpu.memory_space<vmem>>, vector<2x1xf32>,
    return
  }
  func.func @transform_0(%arg0: i32) -> (i32, i32, i32) {
    %c0_i32 = arith.constant 0 : i32
    %c0_i32_0 = arith.constant 0 : i32
    %c0_i32_1 = arith.constant 0 : i32
    return %arg0, %c0_i32, %c0_i32_0 : i32, i32, i32
  }
  func.func @transform_1(%arg0: i32) -> (i32, i32) {
    %c0_i32 = arith.constant 0 : i32
    %c0_i32_0 = arith.constant 0 : i32
    %c0_i32_1 = arith.constant 0 : i32
    return %c0_i32, %c0_i32_0 : i32, i32
  }
  func.func @transform_2(%arg0: i32) -> (i32, i32) {
    %c0_i32 = arith.constant 0 : i32
    %c0_i32_0 = arith.constant 0 : i32
    %c0_i32_1 = arith.constant 0 : i32
    return %c0_i32, %c0_i32_0 : i32, i32
  }
  func.func @transform_3(%arg0: i32) -> (i32, i32) {
    %c0_i32 = arith.constant 0 : i32
    %c0_i32_0 = arith.constant 0 : i32
    %c0_i32_1 = arith.constant 0 : i32
    return %c0_i32, %c0_i32_0 : i32, i32
  }
  func.func @transform_4(%arg0: i32) -> (i32, i32) {
    %c0_i32 = arith.constant 0 : i32
    %c0_i32_0 = arith.constant 0 : i32
    %c0_i32_1 = arith.constant 0 : i32
    return %c0_i32, %c0_i32_0 : i32, i32
  }
  func.func @transform_5(%arg0: i32) -> (i32, i32) {
    %c0_i32 = arith.constant 0 : i32
    %c0_i32_0 = arith.constant 0 : i32
    %c0_i32_1 = arith.constant 0 : i32
    return %c0_i32, %c0_i32_0 : i32, i32
  }
  func.func @transform_6(%arg0: i32) -> (i32, i32) {
    %c0_i32 = arith.constant 0 : i32
    %c0_i32_0 = arith.constant 0 : i32
    %c0_i32_1 = arith.constant 0 : i32
    return %c0_i32, %c0_i32_0 : i32, i32
  }
  func.func @transform_7(%arg0: i32) -> (i32, i32) {
    %c0_i32 = arith.constant 0 : i32
    %c0_i32_0 = arith.constant 0 : i32
    %c0_i32_1 = arith.constant 0 : i32
    return %c0_i32, %c0_i32_0 : i32, i32
  }
  func.func @transform_8(%arg0: i32) -> (i32, i32) {
    %c0_i32 = arith.constant 0 : i32
    %c0_i32_0 = arith.constant 0 : i32
    %c0_i32_1 = arith.constant 0 : i32
    return %c0_i32, %c0_i32_0 : i32, i32
  }
  func.func @transform_9(%arg0: i32) -> (i32, i32) {
    %c0_i32 = arith.constant 0 : i32
    %c0_i32_0 = arith.constant 0 : i32
    %c0_i32_1 = arith.constant 0 : i32
    return %c0_i32, %c0_i32_0 : i32, i32
  }
  func.func @transform_10(%arg0: i32) -> (i32, i32) {
    %c0_i32 = arith.constant 0 : i32
    %c0_i32_0 = arith.constant 0 : i32
    %c0_i32_1 = arith.constant 0 : i32
    return %c0_i32, %c0_i32_0 : i32, i32
  }
  func.func @transform_11(%arg0: i32) -> i32 {
    %c0_i32 = arith.constant 0 : i32
    %c0_i32_0 = arith.constant 0 : i32
    return %c0_i32 : i32
  }
  func.func @transform_12(%arg0: i32) -> (i32, i32) {
    %c0_i32 = arith.constant 0 : i32
    %c0_i32_0 = arith.constant 0 : i32
    return %arg0, %c0_i32 : i32, i32
  }
  func.func @transform_13(%arg0: i32) -> (i32, i32) {
    %c0_i32 = arith.constant 0 : i32
    %c0_i32_0 = arith.constant 0 : i32
    return %arg0, %c0_i32 : i32, i32
  }
}

module attributes {stable_mosaic.version = 11 : i64} {
  func.func @_attention_kernel(%arg0: i32, %arg1: memref<2x8x2048xf32, #tpu.memory_space<vmem>>, %arg2: memref<2048x128xf32, #tpu.memory_space<vmem>>, %arg3: memref<1x128xf32, #tpu.memory_space<vmem>>, %arg4: memref<128x256xf32, #tpu.memory_space<vmem>>, %arg5: memref<1x256xf32, #tpu.memory_space<vmem>>, %arg6: memref<1x128xf32, #tpu.memory_space<vmem>>, %arg7: memref<128x128xf32, #tpu.memory_space<vmem>>, %arg8: memref<1x128xf32, #tpu.memory_space<vmem>>, %arg9: memref<128x64xf32, #tpu.memory_space<vmem>>, %arg10: memref<1x64xf32, #tpu.memory_space<vmem>>, %arg11: memref<1x64xf32, #tpu.memory_space<vmem>>, %arg12: memref<1xf32, #tpu.memory_space<smem>>, %arg13: memref<2x1xf32, #tpu.memory_space<vmem>>, %arg14: memref<2x8xf32, #tpu.memory_space<vmem>>) attributes {dimension_semantics = [#tpu.dimension_semantics<parallel>], iteration_bounds = array<i64: 1>, scalar_prefetch = 0 : i64, scratch_operands = 0 : i64, tpu.core_type = #tpu.core_type<tc>, window_params = [{transform_indices = @transform_0, window_bounds = array<i64: 2, 8, 2048>}, {pipeline_mode = #tpu.pipeline_mode<synchronous>, transform_indices = @transform_1, window_bounds = array<i64: 2048, 128>}, {pipeline_mode = #tpu.pipeline_mode<synchronous>, transform_indices = @transform_2, window_bounds = array<i64: 1, 128>}, {pipeline_mode = #tpu.pipeline_mode<synchronous>, transform_indices = @transform_3, window_bounds = array<i64: 128, 256>}, {pipeline_mode = #tpu.pipeline_mode<synchronous>, transform_indices = @transform_4, window_bounds = array<i64: 1, 256>}, {pipeline_mode = #tpu.pipeline_mode<synchronous>, transform_indices = @transform_5, window_bounds = array<i64: 1, 128>}, {pipeline_mode = #tpu.pipeline_mode<synchronous>, transform_indices = @transform_6, window_bounds = array<i64: 128, 128>}, {pipeline_mode = #tpu.pipeline_mode<synchronous>, transform_indices = @transform_7, window_bounds = array<i64: 1, 128>}, {pipeline_mode = #tpu.pipeline_mode<synchronous>, transform_indices = @transform_8, window_bounds = array<i64: 128, 64>}, {pipeline_mode = #tpu.pipeline_mode<synchronous>, transform_indices = @transform_9, window_bounds = array<i64: 1, 64>}, {pipeline_mode = #tpu.pipeline_mode<synchronous>, transform_indices = @transform_10, window_bounds = array<i64: 1, 64>}, {transform_indices = @transform_11, window_bounds = array<i64: 1>}, {transform_indices = @transform_12, window_bounds = array<i64: 2, 1>}, {transform_indices = @transform_13, window_bounds = array<i64: 2, 8>}]} {
    %c0 = arith.constant 0 : index
    %c0_0 = arith.constant 0 : index
    %c0_1 = arith.constant 0 : index
    %0 = vector.load %arg1[%c0, %c0_0, %c0_1] : memref<2x8x2048xf32, #tpu.memory_space<vmem>>, vector<2x8x2048xf32>
    %1 = vector.shape_cast %0 : vector<2x8x2048xf32> to vector<16x2048xf32>
    %c0_2 = arith.constant 0 : index
    %c0_3 = arith.constant 0 : index
    %2 = vector.load %arg2[%c0_2, %c0_3] : memref<2048x128xf32, #tpu.memory_space<vmem>>, vector<2048x128xf32>
    %cst = arith.constant dense<0.000000e+00> : vector<16x128xf32>
    %3 = tpu.matmul %1, %2, %cst {dimension_numbers = #tpu.dot_dimension_numbers<[1], [0], [0], [1], [0, 0, 1, 1], [], []>} : vector<16x2048xf32>, vector<2048x128xf32>, vector<16x128xf32> -> vector<16x128xf32>
    %c0_4 = arith.constant 0 : index
    %c0_5 = arith.constant 0 : index
    %4 = vector.load %arg3[%c0_4, %c0_5] : memref<1x128xf32, #tpu.memory_space<vmem>>, vector<1x128xf32>
    %5 = vector.broadcast %4 : vector<1x128xf32> to vector<16x128xf32>
    %6 = arith.addf %3, %5 : vector<16x128xf32>
    %c0_6 = arith.constant 0 : index
    %c0_7 = arith.constant 0 : index
    %7 = vector.load %arg4[%c0_6, %c0_7] : memref<128x256xf32, #tpu.memory_space<vmem>>, vector<128x256xf32>
    %cst_8 = arith.constant dense<0.000000e+00> : vector<16x256xf32>
    %8 = tpu.matmul %6, %7, %cst_8 {dimension_numbers = #tpu.dot_dimension_numbers<[1], [0], [0], [1], [0, 0, 1, 1], [], []>} : vector<16x128xf32>, vector<128x256xf32>, vector<16x256xf32> -> vector<16x256xf32>
    %c0_9 = arith.constant 0 : index
    %c0_10 = arith.constant 0 : index
    %9 = vector.load %arg5[%c0_9, %c0_10] : memref<1x256xf32, #tpu.memory_space<vmem>>, vector<1x256xf32>
    %10 = vector.broadcast %9 : vector<1x256xf32> to vector<16x256xf32>
    %11 = arith.addf %8, %10 : vector<16x256xf32>
    %12 = vector.extract_strided_slice %11 {offsets = [0, 0], sizes = [16, 128], strides = [1, 1]} : vector<16x256xf32> to vector<16x128xf32>
    %13 = math.tanh %12 : vector<16x128xf32>
    %14 = vector.extract_strided_slice %11 {offsets = [0, 128], sizes = [16, 128], strides = [1, 1]} : vector<16x256xf32> to vector<16x128xf32>
    %15 = arith.negf %14 : vector<16x128xf32>
    %16 = math.exp %15 : vector<16x128xf32>
    %cst_11 = arith.constant 1.000000e+00 : f32
    %17 = vector.broadcast %cst_11 : f32 to vector<16x128xf32>
    %18 = arith.addf %17, %16 : vector<16x128xf32>
    %19 = arith.divf %17, %18 : vector<16x128xf32>
    %20 = arith.mulf %13, %19 : vector<16x128xf32>
    %c0_12 = arith.constant 0 : index
    %c0_13 = arith.constant 0 : index
    %21 = vector.load %arg6[%c0_12, %c0_13] : memref<1x128xf32, #tpu.memory_space<vmem>>, vector<1x128xf32>
    %22 = vector.broadcast %21 : vector<1x128xf32> to vector<16x128xf32>
    %23 = arith.mulf %20, %22 : vector<16x128xf32>
    %24 = vector.shape_cast %23 : vector<16x128xf32> to vector<2x8x128xf32>
    %cst_14 = arith.constant dense<0.000000e+00> : vector<2x8xf32>
    %25 = vector.multi_reduction <add>, %24, %cst_14 [2] : vector<2x8x128xf32> to vector<2x8xf32>
    %cst_15 = arith.constant dense<0xFF800000> : vector<2xf32>
    %26 = vector.multi_reduction <maximumf>, %25, %cst_15 [1] : vector<2x8xf32> to vector<2xf32>
    %27 = vector.shape_cast %26 : vector<2xf32> to vector<2x1xf32>
    %28 = vector.broadcast %27 : vector<2x1xf32> to vector<2x8xf32>
    %29 = arith.subf %25, %28 : vector<2x8xf32>
    %30 = math.exp %29 : vector<2x8xf32>
    %cst_16 = arith.constant dense<0.000000e+00> : vector<2xf32>
    %31 = vector.multi_reduction <add>, %30, %cst_16 [1] : vector<2x8xf32> to vector<2xf32>
    %32 = vector.shape_cast %31 : vector<2xf32> to vector<2x1xf32>
    %33 = vector.broadcast %32 : vector<2x1xf32> to vector<2x8xf32>
    %34 = arith.divf %30, %33 : vector<2x8xf32>
    %c0_17 = arith.constant 0 : index
    %c0_18 = arith.constant 0 : index
    %35 = vector.load %arg14[%c0_17, %c0_18] : memref<2x8xf32, #tpu.memory_space<vmem>>, vector<2x8xf32>
    tpu.vector_store %arg14[%c0_17, %c0_18], %34 {strides = array<i32>} : memref<2x8xf32, #tpu.memory_space<vmem>>, vector<2x8xf32>,
    %36 = vector.shape_cast %6 : vector<16x128xf32> to vector<2x8x128xf32>
    %37 = vector.shape_cast %34 : vector<2x8xf32> to vector<2x8x1xf32>
    %38 = vector.broadcast %37 : vector<2x8x1xf32> to vector<2x8x128xf32>
    %39 = arith.mulf %36, %38 : vector<2x8x128xf32>
    %cst_19 = arith.constant dense<0.000000e+00> : vector<2x128xf32>
    %40 = vector.multi_reduction <add>, %39, %cst_19 [1] : vector<2x8x128xf32> to vector<2x128xf32>
    %c0_20 = arith.constant 0 : index
    %c0_21 = arith.constant 0 : index
    %41 = vector.load %arg7[%c0_20, %c0_21] : memref<128x128xf32, #tpu.memory_space<vmem>>, vector<128x128xf32>
    %cst_22 = arith.constant dense<0.000000e+00> : vector<2x128xf32>
    %42 = tpu.matmul %40, %41, %cst_22 {dimension_numbers = #tpu.dot_dimension_numbers<[1], [0], [0], [1], [0, 0, 1, 1], [], []>} : vector<2x128xf32>, vector<128x128xf32>, vector<2x128xf32> -> vector<2x128xf32>
    %c0_23 = arith.constant 0 : index
    %c0_24 = arith.constant 0 : index
    %43 = vector.load %arg8[%c0_23, %c0_24] : memref<1x128xf32, #tpu.memory_space<vmem>>, vector<1x128xf32>
    %44 = vector.broadcast %43 : vector<1x128xf32> to vector<2x128xf32>
    %45 = arith.addf %42, %44 : vector<2x128xf32>
    %46 = math.tanh %45 : vector<2x128xf32>
    %c0_25 = arith.constant 0 : index
    %c0_26 = arith.constant 0 : index
    %47 = vector.load %arg9[%c0_25, %c0_26] : memref<128x64xf32, #tpu.memory_space<vmem>>, vector<128x64xf32>
    %cst_27 = arith.constant dense<0.000000e+00> : vector<2x64xf32>
    %48 = tpu.matmul %46, %47, %cst_27 {dimension_numbers = #tpu.dot_dimension_numbers<[1], [0], [0], [1], [0, 0, 1, 1], [], []>} : vector<2x128xf32>, vector<128x64xf32>, vector<2x64xf32> -> vector<2x64xf32>
    %c0_28 = arith.constant 0 : index
    %c0_29 = arith.constant 0 : index
    %49 = vector.load %arg10[%c0_28, %c0_29] : memref<1x64xf32, #tpu.memory_space<vmem>>, vector<1x64xf32>
    %50 = vector.broadcast %49 : vector<1x64xf32> to vector<2x64xf32>
    %51 = arith.addf %48, %50 : vector<2x64xf32>
    %52 = math.tanh %51 : vector<2x64xf32>
    %c0_30 = arith.constant 0 : index
    %c0_31 = arith.constant 0 : index
    %53 = vector.load %arg11[%c0_30, %c0_31] : memref<1x64xf32, #tpu.memory_space<vmem>>, vector<1x64xf32>
    %54 = vector.broadcast %53 : vector<1x64xf32> to vector<2x64xf32>
    %55 = arith.mulf %52, %54 : vector<2x64xf32>
    %cst_32 = arith.constant dense<0.000000e+00> : vector<2xf32>
    %56 = vector.multi_reduction <add>, %55, %cst_32 [1] : vector<2x64xf32> to vector<2xf32>
    %57 = vector.shape_cast %56 : vector<2xf32> to vector<2x1xf32>
    %c0_33 = arith.constant 0 : index
    %58 = memref.load %arg12[%c0_33] : memref<1xf32, #tpu.memory_space<smem>>
    %59 = vector.broadcast %58 : f32 to vector<2x1xf32>
    %60 = arith.addf %57, %59 : vector<2x1xf32>
    %61 = arith.negf %60 : vector<2x1xf32>
    %62 = math.exp %61 : vector<2x1xf32>
    %cst_34 = arith.constant 1.000000e+00 : f32
    %63 = vector.broadcast %cst_34 : f32 to vector<2x1xf32>
    %64 = arith.addf %63, %62 : vector<2x1xf32>
    %65 = arith.divf %63, %64 : vector<2x1xf32>
    %c0_35 = arith.constant 0 : index
    %c0_36 = arith.constant 0 : index
    %66 = vector.load %arg13[%c0_35, %c0_36] : memref<2x1xf32, #tpu.memory_space<vmem>>, vector<2x1xf32>
    tpu.vector_store %arg13[%c0_35, %c0_36], %65 {strides = array<i32>} : memref<2x1xf32, #tpu.memory_space<vmem>>, vector<2x1xf32>,
    return
  }
  func.func @transform_0(%arg0: i32) -> (i32, i32, i32) {
    %c0_i32 = arith.constant 0 : i32
    %c0_i32_0 = arith.constant 0 : i32
    %c0_i32_1 = arith.constant 0 : i32
    return %arg0, %c0_i32, %c0_i32_0 : i32, i32, i32
  }
  func.func @transform_1(%arg0: i32) -> (i32, i32) {
    %c0_i32 = arith.constant 0 : i32
    %c0_i32_0 = arith.constant 0 : i32
    %c0_i32_1 = arith.constant 0 : i32
    return %c0_i32, %c0_i32_0 : i32, i32
  }
  func.func @transform_2(%arg0: i32) -> (i32, i32) {
    %c0_i32 = arith.constant 0 : i32
    %c0_i32_0 = arith.constant 0 : i32
    %c0_i32_1 = arith.constant 0 : i32
    return %c0_i32, %c0_i32_0 : i32, i32
  }
  func.func @transform_3(%arg0: i32) -> (i32, i32) {
    %c0_i32 = arith.constant 0 : i32
    %c0_i32_0 = arith.constant 0 : i32
    %c0_i32_1 = arith.constant 0 : i32
    return %c0_i32, %c0_i32_0 : i32, i32
  }
  func.func @transform_4(%arg0: i32) -> (i32, i32) {
    %c0_i32 = arith.constant 0 : i32
    %c0_i32_0 = arith.constant 0 : i32
    %c0_i32_1 = arith.constant 0 : i32
    return %c0_i32, %c0_i32_0 : i32, i32
  }
  func.func @transform_5(%arg0: i32) -> (i32, i32) {
    %c0_i32 = arith.constant 0 : i32
    %c0_i32_0 = arith.constant 0 : i32
    %c0_i32_1 = arith.constant 0 : i32
    return %c0_i32, %c0_i32_0 : i32, i32
  }
  func.func @transform_6(%arg0: i32) -> (i32, i32) {
    %c0_i32 = arith.constant 0 : i32
    %c0_i32_0 = arith.constant 0 : i32
    %c0_i32_1 = arith.constant 0 : i32
    return %c0_i32, %c0_i32_0 : i32, i32
  }
  func.func @transform_7(%arg0: i32) -> (i32, i32) {
    %c0_i32 = arith.constant 0 : i32
    %c0_i32_0 = arith.constant 0 : i32
    %c0_i32_1 = arith.constant 0 : i32
    return %c0_i32, %c0_i32_0 : i32, i32
  }
  func.func @transform_8(%arg0: i32) -> (i32, i32) {
    %c0_i32 = arith.constant 0 : i32
    %c0_i32_0 = arith.constant 0 : i32
    %c0_i32_1 = arith.constant 0 : i32
    return %c0_i32, %c0_i32_0 : i32, i32
  }
  func.func @transform_9(%arg0: i32) -> (i32, i32) {
    %c0_i32 = arith.constant 0 : i32
    %c0_i32_0 = arith.constant 0 : i32
    %c0_i32_1 = arith.constant 0 : i32
    return %c0_i32, %c0_i32_0 : i32, i32
  }
  func.func @transform_10(%arg0: i32) -> (i32, i32) {
    %c0_i32 = arith.constant 0 : i32
    %c0_i32_0 = arith.constant 0 : i32
    %c0_i32_1 = arith.constant 0 : i32
    return %c0_i32, %c0_i32_0 : i32, i32
  }
  func.func @transform_11(%arg0: i32) -> i32 {
    %c0_i32 = arith.constant 0 : i32
    %c0_i32_0 = arith.constant 0 : i32
    return %c0_i32 : i32
  }
  func.func @transform_12(%arg0: i32) -> (i32, i32) {
    %c0_i32 = arith.constant 0 : i32
    %c0_i32_0 = arith.constant 0 : i32
    return %arg0, %c0_i32 : i32, i32
  }
  func.func @transform_13(%arg0: i32) -> (i32, i32) {
    %c0_i32 = arith.constant 0 : i32
    %c0_i32_0 = arith.constant 0 : i32
    return %arg0, %c0_i32 : i32, i32
  }
}

</mosaic_0001>

<llo_original>
// kernel: tpu_custom_call.1
$region0: #{tpu_custom_call.1}
  #allocation0 [shape = 'u32[]', space=smem, size = 0x4, offset = 0x4, fixed_abs, tag = 'smem constant byte address 0x4 - core index']
  #allocation1 [shape = 'u32[144,128]{1,0:T(1,128)}', space=vmem, size = 0x12000, scoped, tag = 'internal scratch']
  #allocation2 [shape = 'f32[1]{0:T(128)S(6)}', space=smem, size = 0x200, scoped, tag = 'scoped memory for tpu_custom_call.1']
  %s0 = inlined_call_operand.hbm [shape: f32[2,8,2048], index: 0, kind: input, shape index: {}]
  %s1 = inlined_call_operand.hbm [shape: f32[2048,128], index: 1, kind: input, shape index: {}]
  %s2 = inlined_call_operand.vmem [shape: f32[1,128], index: 2, kind: input, shape index: {}]
  %s3 = inlined_call_operand.hbm [shape: f32[128,256], index: 3, kind: input, shape index: {}]
  %s4 = inlined_call_operand.vmem [shape: f32[1,256], index: 4, kind: input, shape index: {}]
  %s5 = inlined_call_operand.vmem [shape: f32[1,128], index: 5, kind: input, shape index: {}]
  %s6 = inlined_call_operand.vmem [shape: f32[128,128], index: 6, kind: input, shape index: {}]
  %s7 = inlined_call_operand.vmem [shape: f32[1,128], index: 7, kind: input, shape index: {}]
  %s8 = inlined_call_operand.vmem [shape: f32[128,64], index: 8, kind: input, shape index: {}]
  %s9 = inlined_call_operand.vmem [shape: f32[1,64], index: 9, kind: input, shape index: {}]
  %s10 = inlined_call_operand.vmem [shape: f32[1,64], index: 10, kind: input, shape index: {}]
  %s11 = inlined_call_operand.<no memory space> [shape: f32[1], index: 11, kind: input, shape index: {}]
  %s12 = inlined_call_operand.vmem [shape: f32[2,1], index: 12, kind: output, shape index: {0}]
  %s13 = inlined_call_operand.hbm [shape: f32[2,8], index: 13, kind: output, shape index: {1}]
  %14 = xla_tuple %s12, %s13
  %s15 = sld [smem:[#allocation0]]
  $region78: #{tpu_custom_call.1} parent=0
    _
  %s17 = ssub.s32 1, %s15
  %s18 = scalar_select 0, %s17, %s15
  %19 = sst [smem:[#allocation2]] %s11
  $region1: #{tpu_custom_call.1} parent=0
    #allocation3 [shape = 'u8[131072]{0}', space=vmem, size = 0x20000, scoped, tag = 'input window, operand 0, single buffered']
    #allocation4 [shape = 's32[1]{0}', space=sflag, size = 0x4, scoped, tag = 'scoped memory for tpu_custom_call.1']
    #allocation5 [shape = 's32[1]{0}', space=sflag, size = 0x4, scoped, tag = 'scoped memory for tpu_custom_call.1']
    #allocation6 [shape = 'u8[1048576]{0}', space=vmem, size = 0x100000, scoped, tag = 'input window, operand 1, single buffered']
    #allocation7 [shape = 's32[1]{0}', space=sflag, size = 0x4, scoped, tag = 'scoped memory for tpu_custom_call.1']
    #allocation8 [shape = 'u8[131072]{0}', space=vmem, size = 0x20000, scoped, tag = 'input window, operand 3, single buffered']
    #allocation9 [shape = 'u8[1024]{0}', space=vmem, size = 0x400, scoped, tag = 'output window, operand 1, single buffered']
    %20 = vsyncpa [#allocation4], 0
    %21 = vsyncpa [#allocation7], 0
    %22 = vsyncpa [#allocation5], 0
    // Predicated region
    $region2: #{tpu_custom_call.1} parent=1 // pred_check
      _
    $region3: #{tpu_custom_call.1} parent=1 // pred_check_branch
      %24 = sbr.rel (0) target = $region5
    $region4: #{tpu_custom_call.1} parent=1 // pred_region
      %s26 = ssub.s32 4096, 4096
      %27 = vsyncadd [#allocation4], %s26
      %s28 = sshll.u32 [#allocation3], 4
      %s29 = int_to_ptr.vmem [resolvable:$true] %s28
      %34 = dma.hbm_to_vmem [thread:$0]  %s0, 4096, %s29, [#allocation4], 2048, 2048, 128
    $region5: #{tpu_custom_call.1} parent=1 // pred_fallthru
      _
    // Predicated region
    $region6: #{tpu_custom_call.1} parent=1 // pred_check
      _
    $region7: #{tpu_custom_call.1} parent=1 // pred_check_branch
      %36 = sbr.rel (0) target = $region9
    $region8: #{tpu_custom_call.1} parent=1 // pred_region
      %s38 = ssub.s32 32768, 32768
      %39 = vsyncadd [#allocation7], %s38
      %s40 = sshll.u32 [#allocation6], 4
      %s41 = int_to_ptr.vmem [resolvable:$true] %s40
      %46 = dma.hbm_to_vmem [thread:$0]  %s1, 32768, %s41, [#allocation7], 128, 128, 8
    $region9: #{tpu_custom_call.1} parent=1 // pred_fallthru
      _
    // Predicated region
    $region10: #{tpu_custom_call.1} parent=1 // pred_check
      _
    $region11: #{tpu_custom_call.1} parent=1 // pred_check_branch
      %48 = sbr.rel (0) target = $region13
    $region12: #{tpu_custom_call.1} parent=1 // pred_region
      _
    $region13: #{tpu_custom_call.1} parent=1 // pred_fallthru
      _
    // Predicated region
    $region14: #{tpu_custom_call.1} parent=1 // pred_check
      _
    $region15: #{tpu_custom_call.1} parent=1 // pred_check_branch
      %50 = sbr.rel (0) target = $region17
    $region16: #{tpu_custom_call.1} parent=1 // pred_region
      %s52 = ssub.s32 4096, 4096
      %53 = vsyncadd [#allocation7], %s52
      %s54 = sshll.u32 [#allocation8], 4
      %s55 = int_to_ptr.vmem [resolvable:$true] %s54
      %60 = dma.hbm_to_vmem [thread:$0]  %s3, 4096, %s55, [#allocation7], 256, 256, 16
    $region17: #{tpu_custom_call.1} parent=1 // pred_fallthru
      _
    // Predicated region
    $region18: #{tpu_custom_call.1} parent=1 // pred_check
      _
    $region19: #{tpu_custom_call.1} parent=1 // pred_check_branch
      %62 = sbr.rel (0) target = $region21
    $region20: #{tpu_custom_call.1} parent=1 // pred_region
      _
    $region21: #{tpu_custom_call.1} parent=1 // pred_fallthru
      _
    // Predicated region
    $region22: #{tpu_custom_call.1} parent=1 // pred_check
      _
    $region23: #{tpu_custom_call.1} parent=1 // pred_check_branch
      %64 = sbr.rel (0) target = $region25
    $region24: #{tpu_custom_call.1} parent=1 // pred_region
      _
    $region25: #{tpu_custom_call.1} parent=1 // pred_fallthru
      _
    // Predicated region
    $region26: #{tpu_custom_call.1} parent=1 // pred_check
      _
    $region27: #{tpu_custom_call.1} parent=1 // pred_check_branch
      %66 = sbr.rel (0) target = $region29
    $region28: #{tpu_custom_call.1} parent=1 // pred_region
      _
    $region29: #{tpu_custom_call.1} parent=1 // pred_fallthru
      _
    // Predicated region
    $region30: #{tpu_custom_call.1} parent=1 // pred_check
      _
    $region31: #{tpu_custom_call.1} parent=1 // pred_check_branch
      %68 = sbr.rel (0) target = $region33
    $region32: #{tpu_custom_call.1} parent=1 // pred_region
      _
    $region33: #{tpu_custom_call.1} parent=1 // pred_fallthru
      _
    // Predicated region
    $region34: #{tpu_custom_call.1} parent=1 // pred_check
      _
    $region35: #{tpu_custom_call.1} parent=1 // pred_check_branch
      %70 = sbr.rel (0) target = $region37
    $region36: #{tpu_custom_call.1} parent=1 // pred_region
      _
    $region37: #{tpu_custom_call.1} parent=1 // pred_fallthru
      _
    // Predicated region
    $region38: #{tpu_custom_call.1} parent=1 // pred_check
      _
    $region39: #{tpu_custom_call.1} parent=1 // pred_check_branch
      %72 = sbr.rel (0) target = $region41
    $region40: #{tpu_custom_call.1} parent=1 // pred_region
      _
    $region41: #{tpu_custom_call.1} parent=1 // pred_fallthru
      _
    // Predicated region
    $region42: #{tpu_custom_call.1} parent=1 // pred_check
      _
    $region43: #{tpu_custom_call.1} parent=1 // pred_check_branch
      %74 = sbr.rel (0) target = $region45
    $region44: #{tpu_custom_call.1} parent=1 // pred_region
      _
    $region45: #{tpu_custom_call.1} parent=1 // pred_fallthru
      _
    // Predicated region
    $region46: #{tpu_custom_call.1} parent=1 // pred_check
      _
    $region47: #{tpu_custom_call.1} parent=1 // pred_check_branch
      %76 = sbr.rel (0) target = $region49
    $region48: #{tpu_custom_call.1} parent=1 // pred_region
      _
    $region49: #{tpu_custom_call.1} parent=1 // pred_fallthru
      _
    // Predicated region
    $region50: #{tpu_custom_call.1} parent=1 // pred_check
      _
    $region51: #{tpu_custom_call.1} parent=1 // pred_check_branch
      %78 = sbr.rel (0) target = $region53
    $region52: #{tpu_custom_call.1} parent=1 // pred_region
      %79 = dma.done [#allocation4], 4096
    $region53: #{tpu_custom_call.1} parent=1 // pred_fallthru
      _
    // Predicated region
    $region54: #{tpu_custom_call.1} parent=1 // pred_check
      _
    $region55: #{tpu_custom_call.1} parent=1 // pred_check_branch
      %81 = sbr.rel (0) target = $region57
    $region56: #{tpu_custom_call.1} parent=1 // pred_region
      %82 = dma.done [#allocation7], 32768
    $region57: #{tpu_custom_call.1} parent=1 // pred_fallthru
      _
    // Predicated region
    $region58: #{tpu_custom_call.1} parent=1 // pred_check
      _
    $region59: #{tpu_custom_call.1} parent=1 // pred_check_branch
      %84 = sbr.rel (0) target = $region61
    $region60: #{tpu_custom_call.1} parent=1 // pred_region
      %85 = dma.done [#allocation7], 4096
    $region61: #{tpu_custom_call.1} parent=1 // pred_fallthru
      _
    %v86 = vld [vmem:[#allocation3] sm:$0xff]
    %v87 = vld [vmem:[#allocation3 + $0x8] sm:$0xff]
    %v88 = vld [vmem:[#allocation3 + $0x10] sm:$0xff]
    %v89 = vld [vmem:[#allocation3 + $0x18] sm:$0xff]
    %v90 = vld [vmem:[#allocation3 + $0x20] sm:$0xff]
    %v91 = vld [vmem:[#allocation3 + $0x28] sm:$0xff]
    %v92 = vld [vmem:[#allocation3 + $0x30] sm:$0xff]
    %v93 = vld [vmem:[#allocation3 + $0x38] sm:$0xff]
    %v94 = vld [vmem:[#allocation3 + $0x40] sm:$0xff]
    %v95 = vld [vmem:[#allocation3 + $0x48] sm:$0xff]
    %v96 = vld [vmem:[#allocation3 + $0x50] sm:$0xff]
    %v97 = vld [vmem:[#allocation3 + $0x58] sm:$0xff]
    %v98 = vld [vmem:[#allocation3 + $0x60] sm:$0xff]
    %v99 = vld [vmem:[#allocation3 + $0x68] sm:$0xff]
    %v100 = vld [vmem:[#allocation3 + $0x70] sm:$0xff]
    %v101 = vld [vmem:[#allocation3 + $0x78] sm:$0xff]
    %v102 = vld [vmem:[#allocation3 + $0x80] sm:$0xff]
    %v103 = vld [vmem:[#allocation3 + $0x88] sm:$0xff]
    %v104 = vld [vmem:[#allocation3 + $0x90] sm:$0xff]
    %v105 = vld [vmem:[#allocation3 + $0x98] sm:$0xff]
    %v106 = vld [vmem:[#allocation3 + $0xa0] sm:$0xff]
    %v107 = vld [vmem:[#allocation3 + $0xa8] sm:$0xff]
    %v108 = vld [vmem:[#allocation3 + $0xb0] sm:$0xff]
    %v109 = vld [vmem:[#allocation3 + $0xb8] sm:$0xff]
    %v110 = vld [vmem:[#allocation3 + $0xc0] sm:$0xff]
    %v111 = vld [vmem:[#allocation3 + $0xc8] sm:$0xff]
    %v112 = vld [vmem:[#allocation3 + $0xd0] sm:$0xff]
    %v113 = vld [vmem:[#allocation3 + $0xd8] sm:$0xff]
    %v114 = vld [vmem:[#allocation3 + $0xe0] sm:$0xff]
    %v115 = vld [vmem:[#allocation3 + $0xe8] sm:$0xff]
    %v116 = vld [vmem:[#allocation3 + $0xf0] sm:$0xff]
    %v117 = vld [vmem:[#allocation3 + $0xf8] sm:$0xff]
    %v118 = vld [vmem:[#allocation6] sm:$0xff]
    %v119 = vld [vmem:[#allocation6 + $0x8] sm:$0xff]
    %v120 = vld [vmem:[#allocation6 + $0x10] sm:$0xff]
    %v121 = vld [vmem:[#allocation6 + $0x18] sm:$0xff]
    %v122 = vld [vmem:[#allocation6 + $0x20] sm:$0xff]
    %v123 = vld [vmem:[#allocation6 + $0x28] sm:$0xff]
    %v124 = vld [vmem:[#allocation6 + $0x30] sm:$0xff]
    %v125 = vld [vmem:[#allocation6 + $0x38] sm:$0xff]
    %v126 = vld [vmem:[#allocation6 + $0x40] sm:$0xff]
    %v127 = vld [vmem:[#allocation6 + $0x48] sm:$0xff]
    %v128 = vld [vmem:[#allocation6 + $0x50] sm:$0xff]
    %v129 = vld [vmem:[#allocation6 + $0x58] sm:$0xff]
    %v130 = vld [vmem:[#allocation6 + $0x60] sm:$0xff]
    %v131 = vld [vmem:[#allocation6 + $0x68] sm:$0xff]
    %v132 = vld [vmem:[#allocation6 + $0x70] sm:$0xff]
    %v133 = vld [vmem:[#allocation6 + $0x78] sm:$0xff]
    %v134 = vld [vmem:[#allocation6 + $0x80] sm:$0xff]
    %v135 = vld [vmem:[#allocation6 + $0x88] sm:$0xff]
    %v136 = vld [vmem:[#allocation6 + $0x90] sm:$0xff]
    %v137 = vld [vmem:[#allocation6 + $0x98] sm:$0xff]
    %v138 = vld [vmem:[#allocation6 + $0xa0] sm:$0xff]
    %v139 = vld [vmem:[#allocation6 + $0xa8] sm:$0xff]
    %v140 = vld [vmem:[#allocation6 + $0xb0] sm:$0xff]
    %v141 = vld [vmem:[#allocation6 + $0xb8] sm:$0xff]
    %v142 = vld [vmem:[#allocation6 + $0xc0] sm:$0xff]
    %v143 = vld [vmem:[#allocation6 + $0xc8] sm:$0xff]
    %v144 = vld [vmem:[#allocation6 + $0xd0] sm:$0xff]
    %v145 = vld [vmem:[#allocation6 + $0xd8] sm:$0xff]
    %v146 = vld [vmem:[#allocation6 + $0xe0] sm:$0xff]
    %v147 = vld [vmem:[#allocation6 + $0xe8] sm:$0xff]
    %v148 = vld [vmem:[#allocation6 + $0xf0] sm:$0xff]
    %v149 = vld [vmem:[#allocation6 + $0xf8] sm:$0xff]
    %v150 = vld [vmem:[#allocation6 + $0x100] sm:$0xff]
    %v151 = vld [vmem:[#allocation6 + $0x108] sm:$0xff]
    %v152 = vld [vmem:[#allocation6 + $0x110] sm:$0xff]
    %v153 = vld [vmem:[#allocation6 + $0x118] sm:$0xff]
    %v154 = vld [vmem:[#allocation6 + $0x120] sm:$0xff]
    %v155 = vld [vmem:[#allocation6 + $0x128] sm:$0xff]
    %v156 = vld [vmem:[#allocation6 + $0x130] sm:$0xff]
    %v157 = vld [vmem:[#allocation6 + $0x138] sm:$0xff]
    %v158 = vld [vmem:[#allocation6 + $0x140] sm:$0xff]
    %v159 = vld [vmem:[#allocation6 + $0x148] sm:$0xff]
    %v160 = vld [vmem:[#allocation6 + $0x150] sm:$0xff]
    %v161 = vld [vmem:[#allocation6 + $0x158] sm:$0xff]
    %v162 = vld [vmem:[#allocation6 + $0x160] sm:$0xff]
    %v163 = vld [vmem:[#allocation6 + $0x168] sm:$0xff]
    %v164 = vld [vmem:[#allocation6 + $0x170] sm:$0xff]
    %v165 = vld [vmem:[#allocation6 + $0x178] sm:$0xff]
    %v166 = vld [vmem:[#allocation6 + $0x180] sm:$0xff]
    %v167 = vld [vmem:[#allocation6 + $0x188] sm:$0xff]
    %v168 = vld [vmem:[#allocation6 + $0x190] sm:$0xff]
    %v169 = vld [vmem:[#allocation6 + $0x198] sm:$0xff]
    %v170 = vld [vmem:[#allocation6 + $0x1a0] sm:$0xff]
    %v171 = vld [vmem:[#allocation6 + $0x1a8] sm:$0xff]
    %v172 = vld [vmem:[#allocation6 + $0x1b0] sm:$0xff]
    %v173 = vld [vmem:[#allocation6 + $0x1b8] sm:$0xff]
    %v174 = vld [vmem:[#allocation6 + $0x1c0] sm:$0xff]
    %v175 = vld [vmem:[#allocation6 + $0x1c8] sm:$0xff]
    %v176 = vld [vmem:[#allocation6 + $0x1d0] sm:$0xff]
    %v177 = vld [vmem:[#allocation6 + $0x1d8] sm:$0xff]
    %v178 = vld [vmem:[#allocation6 + $0x1e0] sm:$0xff]
    %v179 = vld [vmem:[#allocation6 + $0x1e8] sm:$0xff]
    %v180 = vld [vmem:[#allocation6 + $0x1f0] sm:$0xff]
    %v181 = vld [vmem:[#allocation6 + $0x1f8] sm:$0xff]
    %v182 = vld [vmem:[#allocation6 + $0x200] sm:$0xff]
    %v183 = vld [vmem:[#allocation6 + $0x208] sm:$0xff]
    %v184 = vld [vmem:[#allocation6 + $0x210] sm:$0xff]
    %v185 = vld [vmem:[#allocation6 + $0x218] sm:$0xff]
    %v186 = vld [vmem:[#allocation6 + $0x220] sm:$0xff]
    %v187 = vld [vmem:[#allocation6 + $0x228] sm:$0xff]
    %v188 = vld [vmem:[#allocation6 + $0x230] sm:$0xff]
    %v189 = vld [vmem:[#allocation6 + $0x238] sm:$0xff]
    %v190 = vld [vmem:[#allocation6 + $0x240] sm:$0xff]
    %v191 = vld [vmem:[#allocation6 + $0x248] sm:$0xff]
    %v192 = vld [vmem:[#allocation6 + $0x250] sm:$0xff]
    %v193 = vld [vmem:[#allocation6 + $0x258] sm:$0xff]
    %v194 = vld [vmem:[#allocation6 + $0x260] sm:$0xff]
    %v195 = vld [vmem:[#allocation6 + $0x268] sm:$0xff]
    %v196 = vld [vmem:[#allocation6 + $0x270] sm:$0xff]
    %v197 = vld [vmem:[#allocation6 + $0x278] sm:$0xff]
    %v198 = vld [vmem:[#allocation6 + $0x280] sm:$0xff]
    %v199 = vld [vmem:[#allocation6 + $0x288] sm:$0xff]
    %v200 = vld [vmem:[#allocation6 + $0x290] sm:$0xff]
    %v201 = vld [vmem:[#allocation6 + $0x298] sm:$0xff]
    %v202 = vld [vmem:[#allocation6 + $0x2a0] sm:$0xff]
    %v203 = vld [vmem:[#allocation6 + $0x2a8] sm:$0xff]
    %v204 = vld [vmem:[#allocation6 + $0x2b0] sm:$0xff]
    %v205 = vld [vmem:[#allocation6 + $0x2b8] sm:$0xff]
    %v206 = vld [vmem:[#allocation6 + $0x2c0] sm:$0xff]
    %v207 = vld [vmem:[#allocation6 + $0x2c8] sm:$0xff]
    %v208 = vld [vmem:[#allocation6 + $0x2d0] sm:$0xff]
    %v209 = vld [vmem:[#allocation6 + $0x2d8] sm:$0xff]
    %v210 = vld [vmem:[#allocation6 + $0x2e0] sm:$0xff]
    %v211 = vld [vmem:[#allocation6 + $0x2e8] sm:$0xff]
    %v212 = vld [vmem:[#allocation6 + $0x2f0] sm:$0xff]
    %v213 = vld [vmem:[#allocation6 + $0x2f8] sm:$0xff]
    %v214 = vld [vmem:[#allocation6 + $0x300] sm:$0xff]
    %v215 = vld [vmem:[#allocation6 + $0x308] sm:$0xff]
    %v216 = vld [vmem:[#allocation6 + $0x310] sm:$0xff]
    %v217 = vld [vmem:[#allocation6 + $0x318] sm:$0xff]
    %v218 = vld [vmem:[#allocation6 + $0x320] sm:$0xff]
    %v219 = vld [vmem:[#allocation6 + $0x328] sm:$0xff]
    %v220 = vld [vmem:[#allocation6 + $0x330] sm:$0xff]
    %v221 = vld [vmem:[#allocation6 + $0x338] sm:$0xff]
    %v222 = vld [vmem:[#allocation6 + $0x340] sm:$0xff]
    %v223 = vld [vmem:[#allocation6 + $0x348] sm:$0xff]
    %v224 = vld [vmem:[#allocation6 + $0x350] sm:$0xff]
    %v225 = vld [vmem:[#allocation6 + $0x358] sm:$0xff]
    %v226 = vld [vmem:[#allocation6 + $0x360] sm:$0xff]
    %v227 = vld [vmem:[#allocation6 + $0x368] sm:$0xff]
    %v228 = vld [vmem:[#allocation6 + $0x370] sm:$0xff]
    %v229 = vld [vmem:[#allocation6 + $0x378] sm:$0xff]
    %v230 = vld [vmem:[#allocation6 + $0x380] sm:$0xff]
    %v231 = vld [vmem:[#allocation6 + $0x388] sm:$0xff]
    %v232 = vld [vmem:[#allocation6 + $0x390] sm:$0xff]
    %v233 = vld [vmem:[#allocation6 + $0x398] sm:$0xff]
    %v234 = vld [vmem:[#allocation6 + $0x3a0] sm:$0xff]
    %v235 = vld [vmem:[#allocation6 + $0x3a8] sm:$0xff]
    %v236 = vld [vmem:[#allocation6 + $0x3b0] sm:$0xff]
    %v237 = vld [vmem:[#allocation6 + $0x3b8] sm:$0xff]
    %v238 = vld [vmem:[#allocation6 + $0x3c0] sm:$0xff]
    %v239 = vld [vmem:[#allocation6 + $0x3c8] sm:$0xff]
    %v240 = vld [vmem:[#allocation6 + $0x3d0] sm:$0xff]
    %v241 = vld [vmem:[#allocation6 + $0x3d8] sm:$0xff]
    %v242 = vld [vmem:[#allocation6 + $0x3e0] sm:$0xff]
    %v243 = vld [vmem:[#allocation6 + $0x3e8] sm:$0xff]
    %v244 = vld [vmem:[#allocation6 + $0x3f0] sm:$0xff]
    %v245 = vld [vmem:[#allocation6 + $0x3f8] sm:$0xff]
    %v246 = vld [vmem:[#allocation6 + $0x400] sm:$0xff]
    %v247 = vld [vmem:[#allocation6 + $0x408] sm:$0xff]
    %v248 = vld [vmem:[#allocation6 + $0x410] sm:$0xff]
    %v249 = vld [vmem:[#allocation6 + $0x418] sm:$0xff]
    %v250 = vld [vmem:[#allocation6 + $0x420] sm:$0xff]
    %v251 = vld [vmem:[#allocation6 + $0x428] sm:$0xff]
    %v252 = vld [vmem:[#allocation6 + $0x430] sm:$0xff]
    %v253 = vld [vmem:[#allocation6 + $0x438] sm:$0xff]
    %v254 = vld [vmem:[#allocation6 + $0x440] sm:$0xff]
    %v255 = vld [vmem:[#allocation6 + $0x448] sm:$0xff]
    %v256 = vld [vmem:[#allocation6 + $0x450] sm:$0xff]
    %v257 = vld [vmem:[#allocation6 + $0x458] sm:$0xff]
    %v258 = vld [vmem:[#allocation6 + $0x460] sm:$0xff]
    %v259 = vld [vmem:[#allocation6 + $0x468] sm:$0xff]
    %v260 = vld [vmem:[#allocation6 + $0x470] sm:$0xff]
    %v261 = vld [vmem:[#allocation6 + $0x478] sm:$0xff]
    %v262 = vld [vmem:[#allocation6 + $0x480] sm:$0xff]
    %v263 = vld [vmem:[#allocation6 + $0x488] sm:$0xff]
    %v264 = vld [vmem:[#allocation6 + $0x490] sm:$0xff]
    %v265 = vld [vmem:[#allocation6 + $0x498] sm:$0xff]
    %v266 = vld [vmem:[#allocation6 + $0x4a0] sm:$0xff]
    %v267 = vld [vmem:[#allocation6 + $0x4a8] sm:$0xff]
    %v268 = vld [vmem:[#allocation6 + $0x4b0] sm:$0xff]
    %v269 = vld [vmem:[#allocation6 + $0x4b8] sm:$0xff]
    %v270 = vld [vmem:[#allocation6 + $0x4c0] sm:$0xff]
    %v271 = vld [vmem:[#allocation6 + $0x4c8] sm:$0xff]
    %v272 = vld [vmem:[#allocation6 + $0x4d0] sm:$0xff]
    %v273 = vld [vmem:[#allocation6 + $0x4d8] sm:$0xff]
    %v274 = vld [vmem:[#allocation6 + $0x4e0] sm:$0xff]
    %v275 = vld [vmem:[#allocation6 + $0x4e8] sm:$0xff]
    %v276 = vld [vmem:[#allocation6 + $0x4f0] sm:$0xff]
    %v277 = vld [vmem:[#allocation6 + $0x4f8] sm:$0xff]
    %v278 = vld [vmem:[#allocation6 + $0x500] sm:$0xff]
    %v279 = vld [vmem:[#allocation6 + $0x508] sm:$0xff]
    %v280 = vld [vmem:[#allocation6 + $0x510] sm:$0xff]
    %v281 = vld [vmem:[#allocation6 + $0x518] sm:$0xff]
    %v282 = vld [vmem:[#allocation6 + $0x520] sm:$0xff]
    %v283 = vld [vmem:[#allocation6 + $0x528] sm:$0xff]
    %v284 = vld [vmem:[#allocation6 + $0x530] sm:$0xff]
    %v285 = vld [vmem:[#allocation6 + $0x538] sm:$0xff]
    %v286 = vld [vmem:[#allocation6 + $0x540] sm:$0xff]
    %v287 = vld [vmem:[#allocation6 + $0x548] sm:$0xff]
    %v288 = vld [vmem:[#allocation6 + $0x550] sm:$0xff]
    %v289 = vld [vmem:[#allocation6 + $0x558] sm:$0xff]
    %v290 = vld [vmem:[#allocation6 + $0x560] sm:$0xff]
    %v291 = vld [vmem:[#allocation6 + $0x568] sm:$0xff]
    %v292 = vld [vmem:[#allocation6 + $0x570] sm:$0xff]
    %v293 = vld [vmem:[#allocation6 + $0x578] sm:$0xff]
    %v294 = vld [vmem:[#allocation6 + $0x580] sm:$0xff]
    %v295 = vld [vmem:[#allocation6 + $0x588] sm:$0xff]
    %v296 = vld [vmem:[#allocation6 + $0x590] sm:$0xff]
    %v297 = vld [vmem:[#allocation6 + $0x598] sm:$0xff]
    %v298 = vld [vmem:[#allocation6 + $0x5a0] sm:$0xff]
    %v299 = vld [vmem:[#allocation6 + $0x5a8] sm:$0xff]
    %v300 = vld [vmem:[#allocation6 + $0x5b0] sm:$0xff]
    %v301 = vld [vmem:[#allocation6 + $0x5b8] sm:$0xff]
    %v302 = vld [vmem:[#allocation6 + $0x5c0] sm:$0xff]
    %v303 = vld [vmem:[#allocation6 + $0x5c8] sm:$0xff]
    %v304 = vld [vmem:[#allocation6 + $0x5d0] sm:$0xff]
    %v305 = vld [vmem:[#allocation6 + $0x5d8] sm:$0xff]
    %v306 = vld [vmem:[#allocation6 + $0x5e0] sm:$0xff]
    %v307 = vld [vmem:[#allocation6 + $0x5e8] sm:$0xff]
    %v308 = vld [vmem:[#allocation6 + $0x5f0] sm:$0xff]
    %v309 = vld [vmem:[#allocation6 + $0x5f8] sm:$0xff]
    %v310 = vld [vmem:[#allocation6 + $0x600] sm:$0xff]
    %v311 = vld [vmem:[#allocation6 + $0x608] sm:$0xff]
    %v312 = vld [vmem:[#allocation6 + $0x610] sm:$0xff]
    %v313 = vld [vmem:[#allocation6 + $0x618] sm:$0xff]
    %v314 = vld [vmem:[#allocation6 + $0x620] sm:$0xff]
    %v315 = vld [vmem:[#allocation6 + $0x628] sm:$0xff]
    %v316 = vld [vmem:[#allocation6 + $0x630] sm:$0xff]
    %v317 = vld [vmem:[#allocation6 + $0x638] sm:$0xff]
    %v318 = vld [vmem:[#allocation6 + $0x640] sm:$0xff]
    %v319 = vld [vmem:[#allocation6 + $0x648] sm:$0xff]
    %v320 = vld [vmem:[#allocation6 + $0x650] sm:$0xff]
    %v321 = vld [vmem:[#allocation6 + $0x658] sm:$0xff]
    %v322 = vld [vmem:[#allocation6 + $0x660] sm:$0xff]
    %v323 = vld [vmem:[#allocation6 + $0x668] sm:$0xff]
    %v324 = vld [vmem:[#allocation6 + $0x670] sm:$0xff]
    %v325 = vld [vmem:[#allocation6 + $0x678] sm:$0xff]
    %v326 = vld [vmem:[#allocation6 + $0x680] sm:$0xff]
    %v327 = vld [vmem:[#allocation6 + $0x688] sm:$0xff]
    %v328 = vld [vmem:[#allocation6 + $0x690] sm:$0xff]
    %v329 = vld [vmem:[#allocation6 + $0x698] sm:$0xff]
    %v330 = vld [vmem:[#allocation6 + $0x6a0] sm:$0xff]
    %v331 = vld [vmem:[#allocation6 + $0x6a8] sm:$0xff]
    %v332 = vld [vmem:[#allocation6 + $0x6b0] sm:$0xff]
    %v333 = vld [vmem:[#allocation6 + $0x6b8] sm:$0xff]
    %v334 = vld [vmem:[#allocation6 + $0x6c0] sm:$0xff]
    %v335 = vld [vmem:[#allocation6 + $0x6c8] sm:$0xff]
    %v336 = vld [vmem:[#allocation6 + $0x6d0] sm:$0xff]
    %v337 = vld [vmem:[#allocation6 + $0x6d8] sm:$0xff]
    %v338 = vld [vmem:[#allocation6 + $0x6e0] sm:$0xff]
    %v339 = vld [vmem:[#allocation6 + $0x6e8] sm:$0xff]
    %v340 = vld [vmem:[#allocation6 + $0x6f0] sm:$0xff]
    %v341 = vld [vmem:[#allocation6 + $0x6f8] sm:$0xff]
    %v342 = vld [vmem:[#allocation6 + $0x700] sm:$0xff]
    %v343 = vld [vmem:[#allocation6 + $0x708] sm:$0xff]
    %v344 = vld [vmem:[#allocation6 + $0x710] sm:$0xff]
    %v345 = vld [vmem:[#allocation6 + $0x718] sm:$0xff]
    %v346 = vld [vmem:[#allocation6 + $0x720] sm:$0xff]
    %v347 = vld [vmem:[#allocation6 + $0x728] sm:$0xff]
    %v348 = vld [vmem:[#allocation6 + $0x730] sm:$0xff]
    %v349 = vld [vmem:[#allocation6 + $0x738] sm:$0xff]
    %v350 = vld [vmem:[#allocation6 + $0x740] sm:$0xff]
    %v351 = vld [vmem:[#allocation6 + $0x748] sm:$0xff]
    %v352 = vld [vmem:[#allocation6 + $0x750] sm:$0xff]
    %v353 = vld [vmem:[#allocation6 + $0x758] sm:$0xff]
    %v354 = vld [vmem:[#allocation6 + $0x760] sm:$0xff]
    %v355 = vld [vmem:[#allocation6 + $0x768] sm:$0xff]
    %v356 = vld [vmem:[#allocation6 + $0x770] sm:$0xff]
    %v357 = vld [vmem:[#allocation6 + $0x778] sm:$0xff]
    %v358 = vld [vmem:[#allocation6 + $0x780] sm:$0xff]
    %v359 = vld [vmem:[#allocation6 + $0x788] sm:$0xff]
    %v360 = vld [vmem:[#allocation6 + $0x790] sm:$0xff]
    %v361 = vld [vmem:[#allocation6 + $0x798] sm:$0xff]
    %v362 = vld [vmem:[#allocation6 + $0x7a0] sm:$0xff]
    %v363 = vld [vmem:[#allocation6 + $0x7a8] sm:$0xff]
    %v364 = vld [vmem:[#allocation6 + $0x7b0] sm:$0xff]
    %v365 = vld [vmem:[#allocation6 + $0x7b8] sm:$0xff]
    %v366 = vld [vmem:[#allocation6 + $0x7c0] sm:$0xff]
    %v367 = vld [vmem:[#allocation6 + $0x7c8] sm:$0xff]
    %v368 = vld [vmem:[#allocation6 + $0x7d0] sm:$0xff]
    %v369 = vld [vmem:[#allocation6 + $0x7d8] sm:$0xff]
    %v370 = vld [vmem:[#allocation6 + $0x7e0] sm:$0xff]
    %v371 = vld [vmem:[#allocation6 + $0x7e8] sm:$0xff]
    %v372 = vld [vmem:[#allocation6 + $0x7f0] sm:$0xff]
    %v373 = vld [vmem:[#allocation6 + $0x7f8] sm:$0xff]
    %v374 = vld [vmem:[%s2] sm:$0x1]
    %v376 = vlaneseq
    %v377 = vshrl.u32 %v376, 7
    %v378 = vsub.s32 0, %v377
    %v379 = vrot.slane %v374, %v378
    %381 = vmatprep.subr.mxu0 0.0
    %382 = vmatpush1.msra.mxu0 %v133
    %383 = vmatprep.subr.mxu0 0.0
    %384 = vmatpush1.msra.mxu0 %v132
    %385 = vmatprep.subr.mxu0 0.0
    %386 = vmatpush1.msra.mxu0 %v131
    %387 = vmatprep.subr.mxu0 0.0
    %388 = vmatpush1.msra.mxu0 %v130
    %389 = vmatprep.subr.mxu0 0.0
    %390 = vmatpush1.msra.mxu0 %v129
    %391 = vmatprep.subr.mxu0 0.0
    %392 = vmatpush1.msra.mxu0 %v128
    %393 = vmatprep.subr.mxu0 0.0
    %394 = vmatpush1.msra.mxu0 %v127
    %395 = vmatprep.subr.mxu0 0.0
    %396 = vmatpush1.msra.mxu0 %v126
    %397 = vmatprep.subr.mxu0 0.0
    %398 = vmatpush1.msra.mxu0 %v125
    %399 = vmatprep.subr.mxu0 0.0
    %400 = vmatpush1.msra.mxu0 %v124
    %401 = vmatprep.subr.mxu0 0.0
    %402 = vmatpush1.msra.mxu0 %v123
    %403 = vmatprep.subr.mxu0 0.0
    %404 = vmatpush1.msra.mxu0 %v122
    %405 = vmatprep.subr.mxu0 0.0
    %406 = vmatpush1.msra.mxu0 %v121
    %407 = vmatprep.subr.mxu0 0.0
    %408 = vmatpush1.msra.mxu0 %v120
    %409 = vmatprep.subr.mxu0 0.0
    %410 = vmatpush1.msra.mxu0 %v119
    %411 = vmatprep.subr.mxu0 0.0
    %412 = vmatpush1.msra.mxu0 %v118
    %413 = vmatprep.subr.mxu0 0.0
    %414 = vmatpush2.msra.mxu0 %v149
    %415 = vmatprep.subr.mxu0 0.0
    %416 = vmatpush2.msra.mxu0 %v148
    %417 = vmatprep.subr.mxu0 0.0
    %418 = vmatpush2.msra.mxu0 %v147
    %419 = vmatprep.subr.mxu0 0.0
    %420 = vmatpush2.msra.mxu0 %v146
    %421 = vmatprep.subr.mxu0 0.0
    %422 = vmatpush2.msra.mxu0 %v145
    %423 = vmatprep.subr.mxu0 0.0
    %424 = vmatpush2.msra.mxu0 %v144
    %425 = vmatprep.subr.mxu0 0.0
    %426 = vmatpush2.msra.mxu0 %v143
    %427 = vmatprep.subr.mxu0 0.0
    %428 = vmatpush2.msra.mxu0 %v142
    %429 = vmatprep.subr.mxu0 0.0
    %430 = vmatpush2.msra.mxu0 %v141
    %431 = vmatprep.subr.mxu0 0.0
    %432 = vmatpush2.msra.mxu0 %v140
    %433 = vmatprep.subr.mxu0 0.0
    %434 = vmatpush2.msra.mxu0 %v139
    %435 = vmatprep.subr.mxu0 0.0
    %436 = vmatpush2.msra.mxu0 %v138
    %437 = vmatprep.subr.mxu0 0.0
    %438 = vmatpush2.msra.mxu0 %v137
    %439 = vmatprep.subr.mxu0 0.0
    %440 = vmatpush2.msra.mxu0 %v136
    %441 = vmatprep.subr.mxu0 0.0
    %442 = vmatpush2.msra.mxu0 %v135
    %443 = vmatprep.subr.mxu0 0.0
    %444 = vmatpush2.msra.mxu0 %v134
    %445 = vmatprep.mubr.f32.mxu0 %v87
    %446 = vmatmul.mubr.f32.gmra.mxu0 %v86
    %v447 = vpop.f32.mrf.mxu0
    %v448 = vadd.f32 %v379, %v447
    %v449 = vpop.f32.mrf.mxu0
    %450 = vmatprep.mubr.f32.mxu0 %v103
    %451 = vmatmul.mubr.f32.gmra.mxu0 %v102
    %v452 = vpop.f32.mrf.mxu0
    %v453 = vadd.f32 %v379, %v452
    %v454 = vpop.f32.mrf.mxu0
    %455 = vdwg.mxu0
    %456 = vmatprep.subr.mxu0 0.0
    %457 = vmatpush1.msra.mxu0 %v165
    %458 = vmatprep.subr.mxu0 0.0
    %459 = vmatpush1.msra.mxu0 %v164
    %460 = vmatprep.subr.mxu0 0.0
    %461 = vmatpush1.msra.mxu0 %v163
    %462 = vmatprep.subr.mxu0 0.0
    %463 = vmatpush1.msra.mxu0 %v162
    %464 = vmatprep.subr.mxu0 0.0
    %465 = vmatpush1.msra.mxu0 %v161
    %466 = vmatprep.subr.mxu0 0.0
    %467 = vmatpush1.msra.mxu0 %v160
    %468 = vmatprep.subr.mxu0 0.0
    %469 = vmatpush1.msra.mxu0 %v159
    %470 = vmatprep.subr.mxu0 0.0
    %471 = vmatpush1.msra.mxu0 %v158
    %472 = vmatprep.subr.mxu0 0.0
    %473 = vmatpush1.msra.mxu0 %v157
    %474 = vmatprep.subr.mxu0 0.0
    %475 = vmatpush1.msra.mxu0 %v156
    %476 = vmatprep.subr.mxu0 0.0
    %477 = vmatpush1.msra.mxu0 %v155
    %478 = vmatprep.subr.mxu0 0.0
    %479 = vmatpush1.msra.mxu0 %v154
    %480 = vmatprep.subr.mxu0 0.0
    %481 = vmatpush1.msra.mxu0 %v153
    %482 = vmatprep.subr.mxu0 0.0
    %483 = vmatpush1.msra.mxu0 %v152
    %484 = vmatprep.subr.mxu0 0.0
    %485 = vmatpush1.msra.mxu0 %v151
    %486 = vmatprep.subr.mxu0 0.0
    %487 = vmatpush1.msra.mxu0 %v150
    %488 = vmatprep.subr.mxu0 0.0
    %489 = vmatpush2.msra.mxu0 %v181
    %490 = vmatprep.subr.mxu0 0.0
    %491 = vmatpush2.msra.mxu0 %v180
    %492 = vmatprep.subr.mxu0 0.0
    %493 = vmatpush2.msra.mxu0 %v179
    %494 = vmatprep.subr.mxu0 0.0
    %495 = vmatpush2.msra.mxu0 %v178
    %496 = vmatprep.subr.mxu0 0.0
    %497 = vmatpush2.msra.mxu0 %v177
    %498 = vmatprep.subr.mxu0 0.0
    %499 = vmatpush2.msra.mxu0 %v176
    %500 = vmatprep.subr.mxu0 0.0
    %501 = vmatpush2.msra.mxu0 %v175
    %502 = vmatprep.subr.mxu0 0.0
    %503 = vmatpush2.msra.mxu0 %v174
    %504 = vmatprep.subr.mxu0 0.0
    %505 = vmatpush2.msra.mxu0 %v173
    %506 = vmatprep.subr.mxu0 0.0
    %507 = vmatpush2.msra.mxu0 %v172
    %508 = vmatprep.subr.mxu0 0.0
    %509 = vmatpush2.msra.mxu0 %v171
    %510 = vmatprep.subr.mxu0 0.0
    %511 = vmatpush2.msra.mxu0 %v170
    %512 = vmatprep.subr.mxu0 0.0
    %513 = vmatpush2.msra.mxu0 %v169
    %514 = vmatprep.subr.mxu0 0.0
    %515 = vmatpush2.msra.mxu0 %v168
    %516 = vmatprep.subr.mxu0 0.0
    %517 = vmatpush2.msra.mxu0 %v167
    %518 = vmatprep.subr.mxu0 0.0
    %519 = vmatpush2.msra.mxu0 %v166
    %520 = vmatprep.mubr.f32.mxu0 %v89
    %521 = vmatmul.mubr.f32.gmra.mxu0 %v88
    %v522 = vpop.f32.mrf.mxu0
    %v523 = vadd.f32 %v448, %v522
    %v524 = vpop.f32.mrf.mxu0
    %525 = vmatprep.mubr.f32.mxu0 %v105
    %526 = vmatmul.mubr.f32.gmra.mxu0 %v104
    %v527 = vpop.f32.mrf.mxu0
    %v528 = vadd.f32 %v453, %v527
    %v529 = vpop.f32.mrf.mxu0
    %530 = vdwg.mxu0
    %531 = vmatprep.subr.mxu0 0.0
    %532 = vmatpush1.msra.mxu0 %v197
    %533 = vmatprep.subr.mxu0 0.0
    %534 = vmatpush1.msra.mxu0 %v196
    %535 = vmatprep.subr.mxu0 0.0
    %536 = vmatpush1.msra.mxu0 %v195
    %537 = vmatprep.subr.mxu0 0.0
    %538 = vmatpush1.msra.mxu0 %v194
    %539 = vmatprep.subr.mxu0 0.0
    %540 = vmatpush1.msra.mxu0 %v193
    %541 = vmatprep.subr.mxu0 0.0
    %542 = vmatpush1.msra.mxu0 %v192
    %543 = vmatprep.subr.mxu0 0.0
    %544 = vmatpush1.msra.mxu0 %v191
    %545 = vmatprep.subr.mxu0 0.0
    %546 = vmatpush1.msra.mxu0 %v190
    %547 = vmatprep.subr.mxu0 0.0
    %548 = vmatpush1.msra.mxu0 %v189
    %549 = vmatprep.subr.mxu0 0.0
    %550 = vmatpush1.msra.mxu0 %v188
    %551 = vmatprep.subr.mxu0 0.0
    %552 = vmatpush1.msra.mxu0 %v187
    %553 = vmatprep.subr.mxu0 0.0
    %554 = vmatpush1.msra.mxu0 %v186
    %555 = vmatprep.subr.mxu0 0.0
    %556 = vmatpush1.msra.mxu0 %v185
    %557 = vmatprep.subr.mxu0 0.0
    %558 = vmatpush1.msra.mxu0 %v184
    %559 = vmatprep.subr.mxu0 0.0
    %560 = vmatpush1.msra.mxu0 %v183
    %561 = vmatprep.subr.mxu0 0.0
    %562 = vmatpush1.msra.mxu0 %v182
    %563 = vmatprep.subr.mxu0 0.0
    %564 = vmatpush2.msra.mxu0 %v213
    %565 = vmatprep.subr.mxu0 0.0
    %566 = vmatpush2.msra.mxu0 %v212
    %567 = vmatprep.subr.mxu0 0.0
    %568 = vmatpush2.msra.mxu0 %v211
    %569 = vmatprep.subr.mxu0 0.0
    %570 = vmatpush2.msra.mxu0 %v210
    %571 = vmatprep.subr.mxu0 0.0
    %572 = vmatpush2.msra.mxu0 %v209
    %573 = vmatprep.subr.mxu0 0.0
    %574 = vmatpush2.msra.mxu0 %v208
    %575 = vmatprep.subr.mxu0 0.0
    %576 = vmatpush2.msra.mxu0 %v207
    %577 = vmatprep.subr.mxu0 0.0
    %578 = vmatpush2.msra.mxu0 %v206
    %579 = vmatprep.subr.mxu0 0.0
    %580 = vmatpush2.msra.mxu0 %v205
    %581 = vmatprep.subr.mxu0 0.0
    %582 = vmatpush2.msra.mxu0 %v204
    %583 = vmatprep.subr.mxu0 0.0
    %584 = vmatpush2.msra.mxu0 %v203
    %585 = vmatprep.subr.mxu0 0.0
    %586 = vmatpush2.msra.mxu0 %v202
    %587 = vmatprep.subr.mxu0 0.0
    %588 = vmatpush2.msra.mxu0 %v201
    %589 = vmatprep.subr.mxu0 0.0
    %590 = vmatpush2.msra.mxu0 %v200
    %591 = vmatprep.subr.mxu0 0.0
    %592 = vmatpush2.msra.mxu0 %v199
    %593 = vmatprep.subr.mxu0 0.0
    %594 = vmatpush2.msra.mxu0 %v198
    %595 = vmatprep.mubr.f32.mxu0 %v91
    %596 = vmatmul.mubr.f32.gmra.mxu0 %v90
    %v597 = vpop.f32.mrf.mxu0
    %v598 = vadd.f32 %v523, %v597
    %v599 = vpop.f32.mrf.mxu0
    %600 = vmatprep.mubr.f32.mxu0 %v107
    %601 = vmatmul.mubr.f32.gmra.mxu0 %v106
    %v602 = vpop.f32.mrf.mxu0
    %v603 = vadd.f32 %v528, %v602
    %v604 = vpop.f32.mrf.mxu0
    %605 = vdwg.mxu0
    %606 = vmatprep.subr.mxu0 0.0
    %607 = vmatpush1.msra.mxu0 %v229
    %608 = vmatprep.subr.mxu0 0.0
    %609 = vmatpush1.msra.mxu0 %v228
    %610 = vmatprep.subr.mxu0 0.0
    %611 = vmatpush1.msra.mxu0 %v227
    %612 = vmatprep.subr.mxu0 0.0
    %613 = vmatpush1.msra.mxu0 %v226
    %614 = vmatprep.subr.mxu0 0.0
    %615 = vmatpush1.msra.mxu0 %v225
    %616 = vmatprep.subr.mxu0 0.0
    %617 = vmatpush1.msra.mxu0 %v224
    %618 = vmatprep.subr.mxu0 0.0
    %619 = vmatpush1.msra.mxu0 %v223
    %620 = vmatprep.subr.mxu0 0.0
    %621 = vmatpush1.msra.mxu0 %v222
    %622 = vmatprep.subr.mxu0 0.0
    %623 = vmatpush1.msra.mxu0 %v221
    %624 = vmatprep.subr.mxu0 0.0
    %625 = vmatpush1.msra.mxu0 %v220
    %626 = vmatprep.subr.mxu0 0.0
    %627 = vmatpush1.msra.mxu0 %v219
    %628 = vmatprep.subr.mxu0 0.0
    %629 = vmatpush1.msra.mxu0 %v218
    %630 = vmatprep.subr.mxu0 0.0
    %631 = vmatpush1.msra.mxu0 %v217
    %632 = vmatprep.subr.mxu0 0.0
    %633 = vmatpush1.msra.mxu0 %v216
    %634 = vmatprep.subr.mxu0 0.0
    %635 = vmatpush1.msra.mxu0 %v215
    %636 = vmatprep.subr.mxu0 0.0
    %637 = vmatpush1.msra.mxu0 %v214
    %638 = vmatprep.subr.mxu0 0.0
    %639 = vmatpush2.msra.mxu0 %v245
    %640 = vmatprep.subr.mxu0 0.0
    %641 = vmatpush2.msra.mxu0 %v244
    %642 = vmatprep.subr.mxu0 0.0
    %643 = vmatpush2.msra.mxu0 %v243
    %644 = vmatprep.subr.mxu0 0.0
    %645 = vmatpush2.msra.mxu0 %v242
    %646 = vmatprep.subr.mxu0 0.0
    %647 = vmatpush2.msra.mxu0 %v241
    %648 = vmatprep.subr.mxu0 0.0
    %649 = vmatpush2.msra.mxu0 %v240
    %650 = vmatprep.subr.mxu0 0.0
    %651 = vmatpush2.msra.mxu0 %v239
    %652 = vmatprep.subr.mxu0 0.0
    %653 = vmatpush2.msra.mxu0 %v238
    %654 = vmatprep.subr.mxu0 0.0
    %655 = vmatpush2.msra.mxu0 %v237
    %656 = vmatprep.subr.mxu0 0.0
    %657 = vmatpush2.msra.mxu0 %v236
    %658 = vmatprep.subr.mxu0 0.0
    %659 = vmatpush2.msra.mxu0 %v235
    %660 = vmatprep.subr.mxu0 0.0
    %661 = vmatpush2.msra.mxu0 %v234
    %662 = vmatprep.subr.mxu0 0.0
    %663 = vmatpush2.msra.mxu0 %v233
    %664 = vmatprep.subr.mxu0 0.0
    %665 = vmatpush2.msra.mxu0 %v232
    %666 = vmatprep.subr.mxu0 0.0
    %667 = vmatpush2.msra.mxu0 %v231
    %668 = vmatprep.subr.mxu0 0.0
    %669 = vmatpush2.msra.mxu0 %v230
    %670 = vmatprep.mubr.f32.mxu0 %v93
    %671 = vmatmul.mubr.f32.gmra.mxu0 %v92
    %v672 = vpop.f32.mrf.mxu0
    %v673 = vadd.f32 %v598, %v672
    %v674 = vpop.f32.mrf.mxu0
    %675 = vmatprep.mubr.f32.mxu0 %v109
    %676 = vmatmul.mubr.f32.gmra.mxu0 %v108
    %v677 = vpop.f32.mrf.mxu0
    %v678 = vadd.f32 %v603, %v677
    %v679 = vpop.f32.mrf.mxu0
    %680 = vdwg.mxu0
    %681 = vmatprep.subr.mxu0 0.0
    %682 = vmatpush1.msra.mxu0 %v261
    %683 = vmatprep.subr.mxu0 0.0
    %684 = vmatpush1.msra.mxu0 %v260
    %685 = vmatprep.subr.mxu0 0.0
    %686 = vmatpush1.msra.mxu0 %v259
    %687 = vmatprep.subr.mxu0 0.0
    %688 = vmatpush1.msra.mxu0 %v258
    %689 = vmatprep.subr.mxu0 0.0
    %690 = vmatpush1.msra.mxu0 %v257
    %691 = vmatprep.subr.mxu0 0.0
    %692 = vmatpush1.msra.mxu0 %v256
    %693 = vmatprep.subr.mxu0 0.0
    %694 = vmatpush1.msra.mxu0 %v255
    %695 = vmatprep.subr.mxu0 0.0
    %696 = vmatpush1.msra.mxu0 %v254
    %697 = vmatprep.subr.mxu0 0.0
    %698 = vmatpush1.msra.mxu0 %v253
    %699 = vmatprep.subr.mxu0 0.0
    %700 = vmatpush1.msra.mxu0 %v252
    %701 = vmatprep.subr.mxu0 0.0
    %702 = vmatpush1.msra.mxu0 %v251
    %703 = vmatprep.subr.mxu0 0.0
    %704 = vmatpush1.msra.mxu0 %v250
    %705 = vmatprep.subr.mxu0 0.0
    %706 = vmatpush1.msra.mxu0 %v249
    %707 = vmatprep.subr.mxu0 0.0
    %708 = vmatpush1.msra.mxu0 %v248
    %709 = vmatprep.subr.mxu0 0.0
    %710 = vmatpush1.msra.mxu0 %v247
    %711 = vmatprep.subr.mxu0 0.0
    %712 = vmatpush1.msra.mxu0 %v246
    %713 = vmatprep.subr.mxu0 0.0
    %714 = vmatpush2.msra.mxu0 %v277
    %715 = vmatprep.subr.mxu0 0.0
    %716 = vmatpush2.msra.mxu0 %v276
    %717 = vmatprep.subr.mxu0 0.0
    %718 = vmatpush2.msra.mxu0 %v275
    %719 = vmatprep.subr.mxu0 0.0
    %720 = vmatpush2.msra.mxu0 %v274
    %721 = vmatprep.subr.mxu0 0.0
    %722 = vmatpush2.msra.mxu0 %v273
    %723 = vmatprep.subr.mxu0 0.0
    %724 = vmatpush2.msra.mxu0 %v272
    %725 = vmatprep.subr.mxu0 0.0
    %726 = vmatpush2.msra.mxu0 %v271
    %727 = vmatprep.subr.mxu0 0.0
    %728 = vmatpush2.msra.mxu0 %v270
    %729 = vmatprep.subr.mxu0 0.0
    %730 = vmatpush2.msra.mxu0 %v269
    %731 = vmatprep.subr.mxu0 0.0
    %732 = vmatpush2.msra.mxu0 %v268
    %733 = vmatprep.subr.mxu0 0.0
    %734 = vmatpush2.msra.mxu0 %v267
    %735 = vmatprep.subr.mxu0 0.0
    %736 = vmatpush2.msra.mxu0 %v266
    %737 = vmatprep.subr.mxu0 0.0
    %738 = vmatpush2.msra.mxu0 %v265
    %739 = vmatprep.subr.mxu0 0.0
    %740 = vmatpush2.msra.mxu0 %v264
    %741 = vmatprep.subr.mxu0 0.0
    %742 = vmatpush2.msra.mxu0 %v263
    %743 = vmatprep.subr.mxu0 0.0
    %744 = vmatpush2.msra.mxu0 %v262
    %745 = vmatprep.mubr.f32.mxu0 %v95
    %746 = vmatmul.mubr.f32.gmra.mxu0 %v94
    %v747 = vpop.f32.mrf.mxu0
    %v748 = vadd.f32 %v673, %v747
    %v749 = vpop.f32.mrf.mxu0
    %750 = vmatprep.mubr.f32.mxu0 %v111
    %751 = vmatmul.mubr.f32.gmra.mxu0 %v110
    %v752 = vpop.f32.mrf.mxu0
    %v753 = vadd.f32 %v678, %v752
    %v754 = vpop.f32.mrf.mxu0
    %755 = vdwg.mxu0
    %756 = vmatprep.subr.mxu0 0.0
    %757 = vmatpush1.msra.mxu0 %v293
    %758 = vmatprep.subr.mxu0 0.0
    %759 = vmatpush1.msra.mxu0 %v292
    %760 = vmatprep.subr.mxu0 0.0
    %761 = vmatpush1.msra.mxu0 %v291
    %762 = vmatprep.subr.mxu0 0.0
    %763 = vmatpush1.msra.mxu0 %v290
    %764 = vmatprep.subr.mxu0 0.0
    %765 = vmatpush1.msra.mxu0 %v289
    %766 = vmatprep.subr.mxu0 0.0
    %767 = vmatpush1.msra.mxu0 %v288
    %768 = vmatprep.subr.mxu0 0.0
    %769 = vmatpush1.msra.mxu0 %v287
    %770 = vmatprep.subr.mxu0 0.0
    %771 = vmatpush1.msra.mxu0 %v286
    %772 = vmatprep.subr.mxu0 0.0
    %773 = vmatpush1.msra.mxu0 %v285
    %774 = vmatprep.subr.mxu0 0.0
    %775 = vmatpush1.msra.mxu0 %v284
    %776 = vmatprep.subr.mxu0 0.0
    %777 = vmatpush1.msra.mxu0 %v283
    %778 = vmatprep.subr.mxu0 0.0
    %779 = vmatpush1.msra.mxu0 %v282
    %780 = vmatprep.subr.mxu0 0.0
    %781 = vmatpush1.msra.mxu0 %v281
    %782 = vmatprep.subr.mxu0 0.0
    %783 = vmatpush1.msra.mxu0 %v280
    %784 = vmatprep.subr.mxu0 0.0
    %785 = vmatpush1.msra.mxu0 %v279
    %786 = vmatprep.subr.mxu0 0.0
    %787 = vmatpush1.msra.mxu0 %v278
    %788 = vmatprep.subr.mxu0 0.0
    %789 = vmatpush2.msra.mxu0 %v309
    %790 = vmatprep.subr.mxu0 0.0
    %791 = vmatpush2.msra.mxu0 %v308
    %792 = vmatprep.subr.mxu0 0.0
    %793 = vmatpush2.msra.mxu0 %v307
    %794 = vmatprep.subr.mxu0 0.0
    %795 = vmatpush2.msra.mxu0 %v306
    %796 = vmatprep.subr.mxu0 0.0
    %797 = vmatpush2.msra.mxu0 %v305
    %798 = vmatprep.subr.mxu0 0.0
    %799 = vmatpush2.msra.mxu0 %v304
    %800 = vmatprep.subr.mxu0 0.0
    %801 = vmatpush2.msra.mxu0 %v303
    %802 = vmatprep.subr.mxu0 0.0
    %803 = vmatpush2.msra.mxu0 %v302
    %804 = vmatprep.subr.mxu0 0.0
    %805 = vmatpush2.msra.mxu0 %v301
    %806 = vmatprep.subr.mxu0 0.0
    %807 = vmatpush2.msra.mxu0 %v300
    %808 = vmatprep.subr.mxu0 0.0
    %809 = vmatpush2.msra.mxu0 %v299
    %810 = vmatprep.subr.mxu0 0.0
    %811 = vmatpush2.msra.mxu0 %v298
    %812 = vmatprep.subr.mxu0 0.0
    %813 = vmatpush2.msra.mxu0 %v297
    %814 = vmatprep.subr.mxu0 0.0
    %815 = vmatpush2.msra.mxu0 %v296
    %816 = vmatprep.subr.mxu0 0.0
    %817 = vmatpush2.msra.mxu0 %v295
    %818 = vmatprep.subr.mxu0 0.0
    %819 = vmatpush2.msra.mxu0 %v294
    %820 = vmatprep.mubr.f32.mxu0 %v97
    %821 = vmatmul.mubr.f32.gmra.mxu0 %v96
    %v822 = vpop.f32.mrf.mxu0
    %v823 = vadd.f32 %v748, %v822
    %v824 = vpop.f32.mrf.mxu0
    %825 = vmatprep.mubr.f32.mxu0 %v113
    %826 = vmatmul.mubr.f32.gmra.mxu0 %v112
    %v827 = vpop.f32.mrf.mxu0
    %v828 = vadd.f32 %v753, %v827
    %v829 = vpop.f32.mrf.mxu0
    %830 = vdwg.mxu0
    %831 = vmatprep.subr.mxu0 0.0
    %832 = vmatpush1.msra.mxu0 %v325
    %833 = vmatprep.subr.mxu0 0.0
    %834 = vmatpush1.msra.mxu0 %v324
    %835 = vmatprep.subr.mxu0 0.0
    %836 = vmatpush1.msra.mxu0 %v323
    %837 = vmatprep.subr.mxu0 0.0
    %838 = vmatpush1.msra.mxu0 %v322
    %839 = vmatprep.subr.mxu0 0.0
    %840 = vmatpush1.msra.mxu0 %v321
    %841 = vmatprep.subr.mxu0 0.0
    %842 = vmatpush1.msra.mxu0 %v320
    %843 = vmatprep.subr.mxu0 0.0
    %844 = vmatpush1.msra.mxu0 %v319
    %845 = vmatprep.subr.mxu0 0.0
    %846 = vmatpush1.msra.mxu0 %v318
    %847 = vmatprep.subr.mxu0 0.0
    %848 = vmatpush1.msra.mxu0 %v317
    %849 = vmatprep.subr.mxu0 0.0
    %850 = vmatpush1.msra.mxu0 %v316
    %851 = vmatprep.subr.mxu0 0.0
    %852 = vmatpush1.msra.mxu0 %v315
    %853 = vmatprep.subr.mxu0 0.0
    %854 = vmatpush1.msra.mxu0 %v314
    %855 = vmatprep.subr.mxu0 0.0
    %856 = vmatpush1.msra.mxu0 %v313
    %857 = vmatprep.subr.mxu0 0.0
    %858 = vmatpush1.msra.mxu0 %v312
    %859 = vmatprep.subr.mxu0 0.0
    %860 = vmatpush1.msra.mxu0 %v311
    %861 = vmatprep.subr.mxu0 0.0
    %862 = vmatpush1.msra.mxu0 %v310
    %863 = vmatprep.subr.mxu0 0.0
    %864 = vmatpush2.msra.mxu0 %v341
    %865 = vmatprep.subr.mxu0 0.0
    %866 = vmatpush2.msra.mxu0 %v340
    %867 = vmatprep.subr.mxu0 0.0
    %868 = vmatpush2.msra.mxu0 %v339
    %869 = vmatprep.subr.mxu0 0.0
    %870 = vmatpush2.msra.mxu0 %v338
    %871 = vmatprep.subr.mxu0 0.0
    %872 = vmatpush2.msra.mxu0 %v337
    %873 = vmatprep.subr.mxu0 0.0
    %874 = vmatpush2.msra.mxu0 %v336
    %875 = vmatprep.subr.mxu0 0.0
    %876 = vmatpush2.msra.mxu0 %v335
    %877 = vmatprep.subr.mxu0 0.0
    %878 = vmatpush2.msra.mxu0 %v334
    %879 = vmatprep.subr.mxu0 0.0
    %880 = vmatpush2.msra.mxu0 %v333
    %881 = vmatprep.subr.mxu0 0.0
    %882 = vmatpush2.msra.mxu0 %v332
    %883 = vmatprep.subr.mxu0 0.0
    %884 = vmatpush2.msra.mxu0 %v331
    %885 = vmatprep.subr.mxu0 0.0
    %886 = vmatpush2.msra.mxu0 %v330
    %887 = vmatprep.subr.mxu0 0.0
    %888 = vmatpush2.msra.mxu0 %v329
    %889 = vmatprep.subr.mxu0 0.0
    %890 = vmatpush2.msra.mxu0 %v328
    %891 = vmatprep.subr.mxu0 0.0
    %892 = vmatpush2.msra.mxu0 %v327
    %893 = vmatprep.subr.mxu0 0.0
    %894 = vmatpush2.msra.mxu0 %v326
    %895 = vmatprep.mubr.f32.mxu0 %v99
    %896 = vmatmul.mubr.f32.gmra.mxu0 %v98
    %v897 = vpop.f32.mrf.mxu0
    %v898 = vadd.f32 %v823, %v897
    %v899 = vpop.f32.mrf.mxu0
    %900 = vmatprep.mubr.f32.mxu0 %v115
    %901 = vmatmul.mubr.f32.gmra.mxu0 %v114
    %v902 = vpop.f32.mrf.mxu0
    %v903 = vadd.f32 %v828, %v902
    %v904 = vpop.f32.mrf.mxu0
    %905 = vdwg.mxu0
    %906 = vmatprep.subr.mxu0 0.0
    %907 = vmatpush1.msra.mxu0 %v357
    %908 = vmatprep.subr.mxu0 0.0
    %909 = vmatpush1.msra.mxu0 %v356
    %910 = vmatprep.subr.mxu0 0.0
    %911 = vmatpush1.msra.mxu0 %v355
    %912 = vmatprep.subr.mxu0 0.0
    %913 = vmatpush1.msra.mxu0 %v354
    %914 = vmatprep.subr.mxu0 0.0
    %915 = vmatpush1.msra.mxu0 %v353
    %916 = vmatprep.subr.mxu0 0.0
    %917 = vmatpush1.msra.mxu0 %v352
    %918 = vmatprep.subr.mxu0 0.0
    %919 = vmatpush1.msra.mxu0 %v351
    %920 = vmatprep.subr.mxu0 0.0
    %921 = vmatpush1.msra.mxu0 %v350
    %922 = vmatprep.subr.mxu0 0.0
    %923 = vmatpush1.msra.mxu0 %v349
    %924 = vmatprep.subr.mxu0 0.0
    %925 = vmatpush1.msra.mxu0 %v348
    %926 = vmatprep.subr.mxu0 0.0
    %927 = vmatpush1.msra.mxu0 %v347
    %928 = vmatprep.subr.mxu0 0.0
    %929 = vmatpush1.msra.mxu0 %v346
    %930 = vmatprep.subr.mxu0 0.0
    %931 = vmatpush1.msra.mxu0 %v345
    %932 = vmatprep.subr.mxu0 0.0
    %933 = vmatpush1.msra.mxu0 %v344
    %934 = vmatprep.subr.mxu0 0.0
    %935 = vmatpush1.msra.mxu0 %v343
    %936 = vmatprep.subr.mxu0 0.0
    %937 = vmatpush1.msra.mxu0 %v342
    %938 = vmatprep.subr.mxu0 0.0
    %939 = vmatpush2.msra.mxu0 %v373
    %940 = vmatprep.subr.mxu0 0.0
    %941 = vmatpush2.msra.mxu0 %v372
    %942 = vmatprep.subr.mxu0 0.0
    %943 = vmatpush2.msra.mxu0 %v371
    %944 = vmatprep.subr.mxu0 0.0
    %945 = vmatpush2.msra.mxu0 %v370
    %946 = vmatprep.subr.mxu0 0.0
    %947 = vmatpush2.msra.mxu0 %v369
    %948 = vmatprep.subr.mxu0 0.0
    %949 = vmatpush2.msra.mxu0 %v368
    %950 = vmatprep.subr.mxu0 0.0
    %951 = vmatpush2.msra.mxu0 %v367
    %952 = vmatprep.subr.mxu0 0.0
    %953 = vmatpush2.msra.mxu0 %v366
    %954 = vmatprep.subr.mxu0 0.0
    %955 = vmatpush2.msra.mxu0 %v365
    %956 = vmatprep.subr.mxu0 0.0
    %957 = vmatpush2.msra.mxu0 %v364
    %958 = vmatprep.subr.mxu0 0.0
    %959 = vmatpush2.msra.mxu0 %v363
    %960 = vmatprep.subr.mxu0 0.0
    %961 = vmatpush2.msra.mxu0 %v362
    %962 = vmatprep.subr.mxu0 0.0
    %963 = vmatpush2.msra.mxu0 %v361
    %964 = vmatprep.subr.mxu0 0.0
    %965 = vmatpush2.msra.mxu0 %v360
    %966 = vmatprep.subr.mxu0 0.0
    %967 = vmatpush2.msra.mxu0 %v359
    %968 = vmatprep.subr.mxu0 0.0
    %969 = vmatpush2.msra.mxu0 %v358
    %970 = vmatprep.mubr.f32.mxu0 %v101
    %971 = vmatmul.mubr.f32.gmra.mxu0 %v100
    %v972 = vpop.f32.mrf.mxu0
    %v973 = vadd.f32 %v898, %v972
    %v974 = vpop.f32.mrf.mxu0
    %975 = vmatprep.mubr.f32.mxu0 %v117
    %976 = vmatmul.mubr.f32.gmra.mxu0 %v116
    %v977 = vpop.f32.mrf.mxu0
    %v978 = vadd.f32 %v903, %v977
    %v979 = vpop.f32.mrf.mxu0
    %980 = vdwg.mxu0
    %v981 = vld [vmem:[#allocation8] sm:$0xff]
    %v982 = vld [vmem:[#allocation8 + $0x8] sm:$0xff]
    %v983 = vld [vmem:[#allocation8 + $0x10] sm:$0xff]
    %v984 = vld [vmem:[#allocation8 + $0x18] sm:$0xff]
    %v985 = vld [vmem:[#allocation8 + $0x20] sm:$0xff]
    %v986 = vld [vmem:[#allocation8 + $0x28] sm:$0xff]
    %v987 = vld [vmem:[#allocation8 + $0x30] sm:$0xff]
    %v988 = vld [vmem:[#allocation8 + $0x38] sm:$0xff]
    %v989 = vld [vmem:[#allocation8 + $0x40] sm:$0xff]
    %v990 = vld [vmem:[#allocation8 + $0x48] sm:$0xff]
    %v991 = vld [vmem:[#allocation8 + $0x50] sm:$0xff]
    %v992 = vld [vmem:[#allocation8 + $0x58] sm:$0xff]
    %v993 = vld [vmem:[#allocation8 + $0x60] sm:$0xff]
    %v994 = vld [vmem:[#allocation8 + $0x68] sm:$0xff]
    %v995 = vld [vmem:[#allocation8 + $0x70] sm:$0xff]
    %v996 = vld [vmem:[#allocation8 + $0x78] sm:$0xff]
    %v997 = vld [vmem:[#allocation8 + $0x80] sm:$0xff]
    %v998 = vld [vmem:[#allocation8 + $0x88] sm:$0xff]
    %v999 = vld [vmem:[#allocation8 + $0x90] sm:$0xff]
    %v1000 = vld [vmem:[#allocation8 + $0x98] sm:$0xff]
    %v1001 = vld [vmem:[#allocation8 + $0xa0] sm:$0xff]
    %v1002 = vld [vmem:[#allocation8 + $0xa8] sm:$0xff]
    %v1003 = vld [vmem:[#allocation8 + $0xb0] sm:$0xff]
    %v1004 = vld [vmem:[#allocation8 + $0xb8] sm:$0xff]
    %v1005 = vld [vmem:[#allocation8 + $0xc0] sm:$0xff]
    %v1006 = vld [vmem:[#allocation8 + $0xc8] sm:$0xff]
    %v1007 = vld [vmem:[#allocation8 + $0xd0] sm:$0xff]
    %v1008 = vld [vmem:[#allocation8 + $0xd8] sm:$0xff]
    %v1009 = vld [vmem:[#allocation8 + $0xe0] sm:$0xff]
    %v1010 = vld [vmem:[#allocation8 + $0xe8] sm:$0xff]
    %v1011 = vld [vmem:[#allocation8 + $0xf0] sm:$0xff]
    %v1012 = vld [vmem:[#allocation8 + $0xf8] sm:$0xff]
    %v1013 = vld [vmem:[%s4] sm:$0x3]
    %v1015 = vlaneseq
    %v1016 = vshrl.u32 %v1015, 7
    %v1017 = vsub.s32 0, %v1016
    %v1018 = vrot.slane %v1013, %v1017
    %v1019 = vlaneseq
    %v1020 = vshrl.u32 %v1019, 7
    %v1021 = vsub.s32 1, %v1020
    %v1022 = vrot.slane %v1013, %v1021
    %1025 = vmatprep.subr.mxu0 %v1012
    %1026 = vmatpush1.msra.mxu0 %v1011
    %1027 = vmatprep.subr.mxu0 %v1010
    %1028 = vmatpush1.msra.mxu0 %v1009
    %1029 = vmatprep.subr.mxu0 %v1008
    %1030 = vmatpush1.msra.mxu0 %v1007
    %1031 = vmatprep.subr.mxu0 %v1006
    %1032 = vmatpush1.msra.mxu0 %v1005
    %1033 = vmatprep.subr.mxu0 %v1004
    %1034 = vmatpush1.msra.mxu0 %v1003
    %1035 = vmatprep.subr.mxu0 %v1002
    %1036 = vmatpush1.msra.mxu0 %v1001
    %1037 = vmatprep.subr.mxu0 %v1000
    %1038 = vmatpush1.msra.mxu0 %v999
    %1039 = vmatprep.subr.mxu0 %v998
    %1040 = vmatpush1.msra.mxu0 %v997
    %1041 = vmatprep.subr.mxu0 %v996
    %1042 = vmatpush1.msra.mxu0 %v995
    %1043 = vmatprep.subr.mxu0 %v994
    %1044 = vmatpush1.msra.mxu0 %v993
    %1045 = vmatprep.subr.mxu0 %v992
    %1046 = vmatpush1.msra.mxu0 %v991
    %1047 = vmatprep.subr.mxu0 %v990
    %1048 = vmatpush1.msra.mxu0 %v989
    %1049 = vmatprep.subr.mxu0 %v988
    %1050 = vmatpush1.msra.mxu0 %v987
    %1051 = vmatprep.subr.mxu0 %v986
    %1052 = vmatpush1.msra.mxu0 %v985
    %1053 = vmatprep.subr.mxu0 %v984
    %1054 = vmatpush1.msra.mxu0 %v983
    %1055 = vmatprep.subr.mxu0 %v982
    %1056 = vmatpush1.msra.mxu0 %v981
    %1057 = vmatprep.subr.mxu0 0.0
    %1058 = vmatpush2.msra.mxu0 0.0
    %1059 = vmatprep.subr.mxu0 0.0
    %1060 = vmatpush2.msra.mxu0 0.0
    %1061 = vmatprep.subr.mxu0 0.0
    %1062 = vmatpush2.msra.mxu0 0.0
    %1063 = vmatprep.subr.mxu0 0.0
    %1064 = vmatpush2.msra.mxu0 0.0
    %1065 = vmatprep.subr.mxu0 0.0
    %1066 = vmatpush2.msra.mxu0 0.0
    %1067 = vmatprep.subr.mxu0 0.0
    %1068 = vmatpush2.msra.mxu0 0.0
    %1069 = vmatprep.subr.mxu0 0.0
    %1070 = vmatpush2.msra.mxu0 0.0
    %1071 = vmatprep.subr.mxu0 0.0
    %1072 = vmatpush2.msra.mxu0 0.0
    %1073 = vmatprep.subr.mxu0 0.0
    %1074 = vmatpush2.msra.mxu0 0.0
    %1075 = vmatprep.subr.mxu0 0.0
    %1076 = vmatpush2.msra.mxu0 0.0
    %1077 = vmatprep.subr.mxu0 0.0
    %1078 = vmatpush2.msra.mxu0 0.0
    %1079 = vmatprep.subr.mxu0 0.0
    %1080 = vmatpush2.msra.mxu0 0.0
    %1081 = vmatprep.subr.mxu0 0.0
    %1082 = vmatpush2.msra.mxu0 0.0
    %1083 = vmatprep.subr.mxu0 0.0
    %1084 = vmatpush2.msra.mxu0 0.0
    %1085 = vmatprep.subr.mxu0 0.0
    %1086 = vmatpush2.msra.mxu0 0.0
    %1087 = vmatprep.subr.mxu0 0.0
    %1088 = vmatpush2.msra.mxu0 0.0
    %1089 = vmatprep.mubr.f32.mxu0 0.0
    %1090 = vmatmul.mubr.f32.gmra.mxu0 %v973
    %v1091 = vpop.f32.mrf.mxu0
    %v1092 = vadd.f32 %v1018, %v1091
    %v1093 = vpop.f32.mrf.mxu0
    %v1094 = vadd.f32 %v1022, %v1093
    %1095 = vmatprep.mubr.f32.mxu0 0.0
    %1096 = vmatmul.mubr.f32.gmra.mxu0 %v978
    %v1097 = vpop.f32.mrf.mxu0
    %v1098 = vadd.f32 %v1018, %v1097
    %v1099 = vpop.f32.mrf.mxu0
    %v1100 = vadd.f32 %v1022, %v1099
    %1101 = vdwg.mxu0
    %v1102 = vtanh.pop %v1092
    %v1103 = vtanh.pop %v1098
    %v1104 = vxor.u32 %v1094, 2147483648
    %v1105 = vxor.u32 %v1100, 2147483648
    %v1106 = vmul.f32 %v1104, 1.442695
    %v1107 = vpow.pop %v1106
    %v1108 = vmul.f32 %v1105, 1.442695
    %v1109 = vpow.pop %v1108
    %v1110 = vadd.f32 %v1107, 1.0
    %v1111 = vadd.f32 %v1109, 1.0
    %v1112 = vrcp.pop %v1110
    %v1113 = vmul.f32 1.0, %v1112
    %v1114 = vrcp.pop %v1111
    %v1115 = vmul.f32 1.0, %v1114
    %v1116 = vmul.f32 %v1102, %v1113
    %v1117 = vmul.f32 %v1103, %v1115
    %v1118 = vld [vmem:[%s5] sm:$0x1]
    %v1120 = vlaneseq
    %v1121 = vshrl.u32 %v1120, 7
    %v1122 = vsub.s32 0, %v1121
    %v1123 = vrot.slane %v1118, %v1122
    %v1125 = vmul.f32 %v1116, %v1123
    %v1126 = vmul.f32 %v1117, %v1123
    %1127 = vadd.xlane.f32.xlu0 %v1125
    %v1128 = vpop.xlane.xlu0 %1127
    %1129 = vadd.xlane.f32.xlu0 %v1126
    %v1130 = vpop.xlane.xlu0 %1129
    %v1133 = vlaneseq
    %v1134 = vand.u32 %v1133, 127
    %v1135 = vlaneseq
    %v1136 = vshrl.u32 %v1135, 7
    %v1137 = vsub.s32 %v1134, %v1136
    %v1138 = vrot.slane %v1128, %v1137
    %v1139 = vlaneseq
    %v1140 = vshrl.u32 %v1139, 7
    %v1141 = vsub.s32 %v1134, %v1140
    %v1142 = vrot.slane %v1130, %v1141
    %vm1143 = vcmask 1041409
    %v1144 = vsel %vm1143, %v1142, %v1138
    %vm1146 = vcmask 58368
    %v1147 = vsel %vm1146, %v1144, -inf
    %1148 = vmax.xlane.f32.xlu0 %v1147
    %v1149 = vpop.xlane.xlu0 %1148
    %v1151 = vlaneseq
    %v1152 = vshrl.u32 %v1151, 7
    %v1153 = vsub.s32 0, %v1152
    %v1154 = vrot.slane %v1149, %v1153
    %v1155 = vlaneseq
    %v1156 = vshrl.u32 %v1155, 7
    %v1157 = vsub.s32 1, %v1156
    %v1158 = vrot.slane %v1149, %v1157
    %v1161 = vsub.f32 %v1128, %v1154
    %v1162 = vsub.f32 %v1130, %v1158
    %v1163 = vmul.f32 %v1161, 1.442695
    %v1164 = vpow.pop %v1163
    %v1165 = vmul.f32 %v1162, 1.442695
    %v1166 = vpow.pop %v1165
    %1169 = vset.pattern.permute.xlu0 0
    %1170 = vperm.xlu0 %1169, %v1164
    %v1171 = vpop.permute.xlu0 %1170
    %1172 = vset.pattern.permute.xlu0 0
    %1173 = vperm.xlu0 %1172, %v1166
    %v1174 = vpop.permute.xlu0 %1173
    %v1175 = vlaneseq
    %v1176 = vshrl.u32 %v1175, 7
    %v1177 = vsub.s32 %v1134, %v1176
    %v1178 = vrot.slane %v1171, %v1177
    %v1179 = vlaneseq
    %v1180 = vshrl.u32 %v1179, 7
    %v1181 = vsub.s32 %v1134, %v1180
    %v1182 = vrot.slane %v1174, %v1181
    %v1183 = vsel %vm1143, %v1182, %v1178
    %v1185 = vsel %vm1146, %v1183, 0.0
    %1186 = vadd.xlane.f32.xlu0 %v1185
    %v1187 = vpop.xlane.xlu0 %1186
    %v1189 = vlaneseq
    %v1190 = vshrl.u32 %v1189, 7
    %v1191 = vsub.s32 0, %v1190
    %v1192 = vrot.slane %v1187, %v1191
    %v1193 = vlaneseq
    %v1194 = vshrl.u32 %v1193, 7
    %v1195 = vsub.s32 1, %v1194
    %v1196 = vrot.slane %v1187, %v1195
    %v1199 = vrcp.pop %v1192
    %v1200 = vmul.f32 %v1164, %v1199
    %v1201 = vrcp.pop %v1196
    %v1202 = vmul.f32 %v1166, %v1201
    %1205 = vset.pattern.permute.xlu0 0
    %1206 = vperm.xlu0 %1205, %v1200
    %v1207 = vpop.permute.xlu0 %1206
    %1208 = vset.pattern.permute.xlu0 0
    %1209 = vperm.xlu0 %1208, %v1202
    %v1210 = vpop.permute.xlu0 %1209
    %v1211 = vlaneseq
    %v1212 = vshrl.u32 %v1211, 7
    %v1213 = vsub.s32 %v1134, %v1212
    %v1214 = vrot.slane %v1207, %v1213
    %v1215 = vlaneseq
    %v1216 = vshrl.u32 %v1215, 7
    %v1217 = vsub.s32 %v1134, %v1216
    %v1218 = vrot.slane %v1210, %v1217
    %v1219 = vsel %vm1143, %v1218, %v1214
    %1221 = vst.msk [vmem:[#allocation9] sm:$0x3] %vm1146, %v1219
    %v1224 = vmul.f32 %v973, %v1207
    %v1225 = vmul.f32 %v978, %v1210
    %v1226 = vrot.slane %v1224, 4
    %v1227 = vadd.f32 %v1224, %v1226
    %v1228 = vrot.slane %v1227, 2
    %v1229 = vadd.f32 %v1227, %v1228
    %v1230 = vrot.slane %v1229, 1
    %v1231 = vadd.f32 %v1229, %v1230
    %v1232 = vrot.slane %v1225, 4
    %v1233 = vadd.f32 %v1225, %v1232
    %v1234 = vrot.slane %v1233, 2
    %v1235 = vadd.f32 %v1233, %v1234
    %v1236 = vrot.slane %v1235, 1
    %v1237 = vadd.f32 %v1235, %v1236
    %v1238 = vld [vmem:[%s6] sm:$0xff]
    %v1239 = vld [vmem:[%s6 + $0x8] sm:$0xff]
    %v1240 = vld [vmem:[%s6 + $0x10] sm:$0xff]
    %v1241 = vld [vmem:[%s6 + $0x18] sm:$0xff]
    %v1242 = vld [vmem:[%s6 + $0x20] sm:$0xff]
    %v1243 = vld [vmem:[%s6 + $0x28] sm:$0xff]
    %v1244 = vld [vmem:[%s6 + $0x30] sm:$0xff]
    %v1245 = vld [vmem:[%s6 + $0x38] sm:$0xff]
    %v1246 = vld [vmem:[%s6 + $0x40] sm:$0xff]
    %v1247 = vld [vmem:[%s6 + $0x48] sm:$0xff]
    %v1248 = vld [vmem:[%s6 + $0x50] sm:$0xff]
    %v1249 = vld [vmem:[%s6 + $0x58] sm:$0xff]
    %v1250 = vld [vmem:[%s6 + $0x60] sm:$0xff]
    %v1251 = vld [vmem:[%s6 + $0x68] sm:$0xff]
    %v1252 = vld [vmem:[%s6 + $0x70] sm:$0xff]
    %v1253 = vld [vmem:[%s6 + $0x78] sm:$0xff]
    %v1254 = vld [vmem:[%s7] sm:$0x1]
    %v1256 = vlaneseq
    %v1257 = vshrl.u32 %v1256, 7
    %v1258 = vsub.s32 0, %v1257
    %v1259 = vrot.slane %v1254, %v1258
    %v1263 = vsel %vm1143, %v1237, %v1231
    %1265 = vmatprep.subr.mxu0 0.0
    %1266 = vmatpush1.msra.mxu0 %v1253
    %1267 = vmatprep.subr.mxu0 0.0
    %1268 = vmatpush1.msra.mxu0 %v1252
    %1269 = vmatprep.subr.mxu0 0.0
    %1270 = vmatpush1.msra.mxu0 %v1251
    %1271 = vmatprep.subr.mxu0 0.0
    %1272 = vmatpush1.msra.mxu0 %v1250
    %1273 = vmatprep.subr.mxu0 0.0
    %1274 = vmatpush1.msra.mxu0 %v1249
    %1275 = vmatprep.subr.mxu0 0.0
    %1276 = vmatpush1.msra.mxu0 %v1248
    %1277 = vmatprep.subr.mxu0 0.0
    %1278 = vmatpush1.msra.mxu0 %v1247
    %1279 = vmatprep.subr.mxu0 0.0
    %1280 = vmatpush1.msra.mxu0 %v1246
    %1281 = vmatprep.subr.mxu0 0.0
    %1282 = vmatpush1.msra.mxu0 %v1245
    %1283 = vmatprep.subr.mxu0 0.0
    %1284 = vmatpush1.msra.mxu0 %v1244
    %1285 = vmatprep.subr.mxu0 0.0
    %1286 = vmatpush1.msra.mxu0 %v1243
    %1287 = vmatprep.subr.mxu0 0.0
    %1288 = vmatpush1.msra.mxu0 %v1242
    %1289 = vmatprep.subr.mxu0 0.0
    %1290 = vmatpush1.msra.mxu0 %v1241
    %1291 = vmatprep.subr.mxu0 0.0
    %1292 = vmatpush1.msra.mxu0 %v1240
    %1293 = vmatprep.subr.mxu0 0.0
    %1294 = vmatpush1.msra.mxu0 %v1239
    %1295 = vmatprep.subr.mxu0 0.0
    %1296 = vmatpush1.msra.mxu0 %v1238
    %1297 = vmatprep.subr.mxu0 0.0
    %1298 = vmatpush2.msra.mxu0 0.0
    %1299 = vmatprep.subr.mxu0 0.0
    %1300 = vmatpush2.msra.mxu0 0.0
    %1301 = vmatprep.subr.mxu0 0.0
    %1302 = vmatpush2.msra.mxu0 0.0
    %1303 = vmatprep.subr.mxu0 0.0
    %1304 = vmatpush2.msra.mxu0 0.0
    %1305 = vmatprep.subr.mxu0 0.0
    %1306 = vmatpush2.msra.mxu0 0.0
    %1307 = vmatprep.subr.mxu0 0.0
    %1308 = vmatpush2.msra.mxu0 0.0
    %1309 = vmatprep.subr.mxu0 0.0
    %1310 = vmatpush2.msra.mxu0 0.0
    %1311 = vmatprep.subr.mxu0 0.0
    %1312 = vmatpush2.msra.mxu0 0.0
    %1313 = vmatprep.subr.mxu0 0.0
    %1314 = vmatpush2.msra.mxu0 0.0
    %1315 = vmatprep.subr.mxu0 0.0
    %1316 = vmatpush2.msra.mxu0 0.0
    %1317 = vmatprep.subr.mxu0 0.0
    %1318 = vmatpush2.msra.mxu0 0.0
    %1319 = vmatprep.subr.mxu0 0.0
    %1320 = vmatpush2.msra.mxu0 0.0
    %1321 = vmatprep.subr.mxu0 0.0
    %1322 = vmatpush2.msra.mxu0 0.0
    %1323 = vmatprep.subr.mxu0 0.0
    %1324 = vmatpush2.msra.mxu0 0.0
    %1325 = vmatprep.subr.mxu0 0.0
    %1326 = vmatpush2.msra.mxu0 0.0
    %1327 = vmatprep.subr.mxu0 0.0
    %1328 = vmatpush2.msra.mxu0 0.0
    %1329 = vmatprep.mubr.f32.mxu0 0.0
    %1330 = vmatmul.mubr.f32.gmra.mxu0 %v1263
    %v1331 = vpop.f32.mrf.mxu0
    %v1332 = vadd.f32 %v1259, %v1331
    %v1333 = vpop.f32.mrf.mxu0
    %1334 = vdwg.mxu0
    %v1335 = vtanh.pop %v1332
    %v1336 = vld [vmem:[%s8] sm:$0xff]
    %v1337 = vld [vmem:[%s8 + $0x8] sm:$0xff]
    %v1338 = vld [vmem:[%s8 + $0x10] sm:$0xff]
    %v1339 = vld [vmem:[%s8 + $0x18] sm:$0xff]
    %v1340 = vld [vmem:[%s8 + $0x20] sm:$0xff]
    %v1341 = vld [vmem:[%s8 + $0x28] sm:$0xff]
    %v1342 = vld [vmem:[%s8 + $0x30] sm:$0xff]
    %v1343 = vld [vmem:[%s8 + $0x38] sm:$0xff]
    %v1344 = vld [vmem:[%s8 + $0x40] sm:$0xff]
    %v1345 = vld [vmem:[%s8 + $0x48] sm:$0xff]
    %v1346 = vld [vmem:[%s8 + $0x50] sm:$0xff]
    %v1347 = vld [vmem:[%s8 + $0x58] sm:$0xff]
    %v1348 = vld [vmem:[%s8 + $0x60] sm:$0xff]
    %v1349 = vld [vmem:[%s8 + $0x68] sm:$0xff]
    %v1350 = vld [vmem:[%s8 + $0x70] sm:$0xff]
    %v1351 = vld [vmem:[%s8 + $0x78] sm:$0xff]
    %v1352 = vld [vmem:[%s9] sm:$0x1]
    %v1354 = vlaneseq
    %v1355 = vshrl.u32 %v1354, 7
    %v1356 = vsub.s32 0, %v1355
    %v1357 = vrot.slane %v1352, %v1356
    %1359 = vmatprep.subr.mxu0 0.0
    %1360 = vmatpush1.msra.mxu0 %v1351
    %1361 = vmatprep.subr.mxu0 0.0
    %1362 = vmatpush1.msra.mxu0 %v1350
    %1363 = vmatprep.subr.mxu0 0.0
    %1364 = vmatpush1.msra.mxu0 %v1349
    %1365 = vmatprep.subr.mxu0 0.0
    %1366 = vmatpush1.msra.mxu0 %v1348
    %1367 = vmatprep.subr.mxu0 0.0
    %1368 = vmatpush1.msra.mxu0 %v1347
    %1369 = vmatprep.subr.mxu0 0.0
    %1370 = vmatpush1.msra.mxu0 %v1346
    %1371 = vmatprep.subr.mxu0 0.0
    %1372 = vmatpush1.msra.mxu0 %v1345
    %1373 = vmatprep.subr.mxu0 0.0
    %1374 = vmatpush1.msra.mxu0 %v1344
    %1375 = vmatprep.subr.mxu0 0.0
    %1376 = vmatpush1.msra.mxu0 %v1343
    %1377 = vmatprep.subr.mxu0 0.0
    %1378 = vmatpush1.msra.mxu0 %v1342
    %1379 = vmatprep.subr.mxu0 0.0
    %1380 = vmatpush1.msra.mxu0 %v1341
    %1381 = vmatprep.subr.mxu0 0.0
    %1382 = vmatpush1.msra.mxu0 %v1340
    %1383 = vmatprep.subr.mxu0 0.0
    %1384 = vmatpush1.msra.mxu0 %v1339
    %1385 = vmatprep.subr.mxu0 0.0
    %1386 = vmatpush1.msra.mxu0 %v1338
    %1387 = vmatprep.subr.mxu0 0.0
    %1388 = vmatpush1.msra.mxu0 %v1337
    %1389 = vmatprep.subr.mxu0 0.0
    %1390 = vmatpush1.msra.mxu0 %v1336
    %1391 = vmatprep.subr.mxu0 0.0
    %1392 = vmatpush2.msra.mxu0 0.0
    %1393 = vmatprep.subr.mxu0 0.0
    %1394 = vmatpush2.msra.mxu0 0.0
    %1395 = vmatprep.subr.mxu0 0.0
    %1396 = vmatpush2.msra.mxu0 0.0
    %1397 = vmatprep.subr.mxu0 0.0
    %1398 = vmatpush2.msra.mxu0 0.0
    %1399 = vmatprep.subr.mxu0 0.0
    %1400 = vmatpush2.msra.mxu0 0.0
    %1401 = vmatprep.subr.mxu0 0.0
    %1402 = vmatpush2.msra.mxu0 0.0
    %1403 = vmatprep.subr.mxu0 0.0
    %1404 = vmatpush2.msra.mxu0 0.0
    %1405 = vmatprep.subr.mxu0 0.0
    %1406 = vmatpush2.msra.mxu0 0.0
    %1407 = vmatprep.subr.mxu0 0.0
    %1408 = vmatpush2.msra.mxu0 0.0
    %1409 = vmatprep.subr.mxu0 0.0
    %1410 = vmatpush2.msra.mxu0 0.0
    %1411 = vmatprep.subr.mxu0 0.0
    %1412 = vmatpush2.msra.mxu0 0.0
    %1413 = vmatprep.subr.mxu0 0.0
    %1414 = vmatpush2.msra.mxu0 0.0
    %1415 = vmatprep.subr.mxu0 0.0
    %1416 = vmatpush2.msra.mxu0 0.0
    %1417 = vmatprep.subr.mxu0 0.0
    %1418 = vmatpush2.msra.mxu0 0.0
    %1419 = vmatprep.subr.mxu0 0.0
    %1420 = vmatpush2.msra.mxu0 0.0
    %1421 = vmatprep.subr.mxu0 0.0
    %1422 = vmatpush2.msra.mxu0 0.0
    %1423 = vmatprep.mubr.f32.mxu0 0.0
    %1424 = vmatmul.mubr.f32.gmra.mxu0 %v1335
    %v1425 = vpop.f32.mrf.mxu0
    %v1426 = vadd.f32 %v1357, %v1425
    %v1427 = vpop.f32.mrf.mxu0
    %1428 = vdwg.mxu0
    %v1429 = vtanh.pop %v1426
    %v1430 = vld [vmem:[%s10] sm:$0x1]
    %v1432 = vlaneseq
    %v1433 = vshrl.u32 %v1432, 7
    %v1434 = vsub.s32 0, %v1433
    %v1435 = vrot.slane %v1430, %v1434
    %v1437 = vmul.f32 %v1429, %v1435
    %vm1438 = vcmask 517120
    %v1439 = vsel %vm1438, %v1437, 0.0
    %1440 = vadd.xlane.f32.xlu0 %v1439
    %v1441 = vpop.xlane.xlu0 %1440
    %s1442 = sld [smem:[#allocation2]]
    %v1443 = vstv %s1442
    %v1444 = vadd.f32 %v1441, %v1443
    %v1445 = vxor.u32 %v1444, 2147483648
    %v1446 = vmul.f32 %v1445, 1.442695
    %v1447 = vpow.pop %v1446
    %v1448 = vadd.f32 %v1447, 1.0
    %v1449 = vrcp.pop %v1448
    %v1450 = vmul.f32 1.0, %v1449
    %vm1451 = vcmask 1024
    %1452 = vst.msk [vmem:[%s12] sm:$0x3] %vm1451, %v1450
    // Predicated region
    $region62: #{tpu_custom_call.1} parent=1 // pred_check
      _
    $region63: #{tpu_custom_call.1} parent=1 // pred_check_branch
      %1454 = sbr.rel (0) target = $region65
    $region64: #{tpu_custom_call.1} parent=1 // pred_region
      _
    $region65: #{tpu_custom_call.1} parent=1 // pred_fallthru
      _
    // Predicated region
    $region66: #{tpu_custom_call.1} parent=1 // pred_check
      _
    $region67: #{tpu_custom_call.1} parent=1 // pred_check_branch
      %1456 = sbr.rel (0) target = $region69
    $region68: #{tpu_custom_call.1} parent=1 // pred_region
      %s1458 = ssub.s32 32, 32
      %1459 = vsyncadd [#allocation5], %s1458
      %s1461 = sshll.u32 [#allocation9], 4
      %s1462 = int_to_ptr.vmem [resolvable:$true] %s1461
      %1464 = dma.vmem_to_hbm [thread:$0]  %s1462, 32, %s13, [#allocation5]
    $region69: #{tpu_custom_call.1} parent=1 // pred_fallthru
      _
    // Predicated region
    $region70: #{tpu_custom_call.1} parent=1 // pred_check
      _
    $region71: #{tpu_custom_call.1} parent=1 // pred_check_branch
      %1466 = sbr.rel (0) target = $region73
    $region72: #{tpu_custom_call.1} parent=1 // pred_region
      _
    $region73: #{tpu_custom_call.1} parent=1 // pred_fallthru
      _
    // Predicated region
    $region74: #{tpu_custom_call.1} parent=1 // pred_check
      _
    $region75: #{tpu_custom_call.1} parent=1 // pred_check_branch
      %1468 = sbr.rel (0) target = $region77
    $region76: #{tpu_custom_call.1} parent=1 // pred_region
      %1469 = dma.done [#allocation5], 32
    $region77: #{tpu_custom_call.1} parent=1 // pred_fallthru
      _
    %1470 = vsyncpa [#allocation4], 1
    %1471 = vsyncpa [#allocation7], 1
    %1472 = vsyncpa [#allocation5], 1

// kernel: tpu_custom_call.1
$region0: #{tpu_custom_call.1}
  #allocation0 [shape = 'u32[]', space=smem, size = 0x4, offset = 0x4, fixed_abs, tag = 'smem constant byte address 0x4 - core index']
  #allocation1 [shape = 'u32[144,128]{1,0:T(1,128)}', space=vmem, size = 0x12000, scoped, tag = 'internal scratch']
  #allocation2 [shape = 'f32[1]{0:T(128)S(6)}', space=smem, size = 0x200, scoped, tag = 'scoped memory for tpu_custom_call.1']
  %s0 = inlined_call_operand.hbm [shape: f32[2,8,2048], index: 0, kind: input, shape index: {}]
  %s1 = inlined_call_operand.hbm [shape: f32[2048,128], index: 1, kind: input, shape index: {}]
  %s2 = inlined_call_operand.vmem [shape: f32[1,128], index: 2, kind: input, shape index: {}]
  %s3 = inlined_call_operand.hbm [shape: f32[128,256], index: 3, kind: input, shape index: {}]
  %s4 = inlined_call_operand.vmem [shape: f32[1,256], index: 4, kind: input, shape index: {}]
  %s5 = inlined_call_operand.vmem [shape: f32[1,128], index: 5, kind: input, shape index: {}]
  %s6 = inlined_call_operand.vmem [shape: f32[128,128], index: 6, kind: input, shape index: {}]
  %s7 = inlined_call_operand.vmem [shape: f32[1,128], index: 7, kind: input, shape index: {}]
  %s8 = inlined_call_operand.vmem [shape: f32[128,64], index: 8, kind: input, shape index: {}]
  %s9 = inlined_call_operand.vmem [shape: f32[1,64], index: 9, kind: input, shape index: {}]
  %s10 = inlined_call_operand.vmem [shape: f32[1,64], index: 10, kind: input, shape index: {}]
  %s11 = inlined_call_operand.<no memory space> [shape: f32[1], index: 11, kind: input, shape index: {}]
  %s12 = inlined_call_operand.vmem [shape: f32[2,1], index: 12, kind: output, shape index: {0}]
  %s13 = inlined_call_operand.hbm [shape: f32[2,8], index: 13, kind: output, shape index: {1}]
  %14 = xla_tuple %s12, %s13
  %s15 = sld [smem:[#allocation0]]
  $region78: #{tpu_custom_call.1} parent=0
    _
  %s17 = ssub.s32 1, %s15
  %s18 = scalar_select 0, %s17, %s15
  %19 = sst [smem:[#allocation2]] %s11
  $region1: #{tpu_custom_call.1} parent=0
    #allocation3 [shape = 'u8[131072]{0}', space=vmem, size = 0x20000, scoped, tag = 'input window, operand 0, single buffered']
    #allocation4 [shape = 's32[1]{0}', space=sflag, size = 0x4, scoped, tag = 'scoped memory for tpu_custom_call.1']
    #allocation5 [shape = 's32[1]{0}', space=sflag, size = 0x4, scoped, tag = 'scoped memory for tpu_custom_call.1']
    #allocation6 [shape = 'u8[1048576]{0}', space=vmem, size = 0x100000, scoped, tag = 'input window, operand 1, single buffered']
    #allocation7 [shape = 's32[1]{0}', space=sflag, size = 0x4, scoped, tag = 'scoped memory for tpu_custom_call.1']
    #allocation8 [shape = 'u8[131072]{0}', space=vmem, size = 0x20000, scoped, tag = 'input window, operand 3, single buffered']
    #allocation9 [shape = 'u8[1024]{0}', space=vmem, size = 0x400, scoped, tag = 'output window, operand 1, single buffered']
    %20 = vsyncpa [#allocation4], 0
    %21 = vsyncpa [#allocation7], 0
    %22 = vsyncpa [#allocation5], 0
    // Predicated region
    $region2: #{tpu_custom_call.1} parent=1 // pred_check
      _
    $region3: #{tpu_custom_call.1} parent=1 // pred_check_branch
      %24 = sbr.rel (0) target = $region5
    $region4: #{tpu_custom_call.1} parent=1 // pred_region
      %s26 = ssub.s32 4096, 4096
      %27 = vsyncadd [#allocation4], %s26
      %s28 = sshll.u32 [#allocation3], 4
      %s29 = int_to_ptr.vmem [resolvable:$true] %s28
      %34 = dma.hbm_to_vmem [thread:$0]  %s0, 4096, %s29, [#allocation4], 2048, 2048, 128
    $region5: #{tpu_custom_call.1} parent=1 // pred_fallthru
      _
    // Predicated region
    $region6: #{tpu_custom_call.1} parent=1 // pred_check
      _
    $region7: #{tpu_custom_call.1} parent=1 // pred_check_branch
      %36 = sbr.rel (0) target = $region9
    $region8: #{tpu_custom_call.1} parent=1 // pred_region
      %s38 = ssub.s32 32768, 32768
      %39 = vsyncadd [#allocation7], %s38
      %s40 = sshll.u32 [#allocation6], 4
      %s41 = int_to_ptr.vmem [resolvable:$true] %s40
      %46 = dma.hbm_to_vmem [thread:$0]  %s1, 32768, %s41, [#allocation7], 128, 128, 8
    $region9: #{tpu_custom_call.1} parent=1 // pred_fallthru
      _
    // Predicated region
    $region10: #{tpu_custom_call.1} parent=1 // pred_check
      _
    $region11: #{tpu_custom_call.1} parent=1 // pred_check_branch
      %48 = sbr.rel (0) target = $region13
    $region12: #{tpu_custom_call.1} parent=1 // pred_region
      _
    $region13: #{tpu_custom_call.1} parent=1 // pred_fallthru
      _
    // Predicated region
    $region14: #{tpu_custom_call.1} parent=1 // pred_check
      _
    $region15: #{tpu_custom_call.1} parent=1 // pred_check_branch
      %50 = sbr.rel (0) target = $region17
    $region16: #{tpu_custom_call.1} parent=1 // pred_region
      %s52 = ssub.s32 4096, 4096
      %53 = vsyncadd [#allocation7], %s52
      %s54 = sshll.u32 [#allocation8], 4
      %s55 = int_to_ptr.vmem [resolvable:$true] %s54
      %60 = dma.hbm_to_vmem [thread:$0]  %s3, 4096, %s55, [#allocation7], 256, 256, 16
    $region17: #{tpu_custom_call.1} parent=1 // pred_fallthru
      _
    // Predicated region
    $region18: #{tpu_custom_call.1} parent=1 // pred_check
      _
    $region19: #{tpu_custom_call.1} parent=1 // pred_check_branch
      %62 = sbr.rel (0) target = $region21
    $region20: #{tpu_custom_call.1} parent=1 // pred_region
      _
    $region21: #{tpu_custom_call.1} parent=1 // pred_fallthru
      _
    // Predicated region
    $region22: #{tpu_custom_call.1} parent=1 // pred_check
      _
    $region23: #{tpu_custom_call.1} parent=1 // pred_check_branch
      %64 = sbr.rel (0) target = $region25
    $region24: #{tpu_custom_call.1} parent=1 // pred_region
      _
    $region25: #{tpu_custom_call.1} parent=1 // pred_fallthru
      _
    // Predicated region
    $region26: #{tpu_custom_call.1} parent=1 // pred_check
      _
    $region27: #{tpu_custom_call.1} parent=1 // pred_check_branch
      %66 = sbr.rel (0) target = $region29
    $region28: #{tpu_custom_call.1} parent=1 // pred_region
      _
    $region29: #{tpu_custom_call.1} parent=1 // pred_fallthru
      _
    // Predicated region
    $region30: #{tpu_custom_call.1} parent=1 // pred_check
      _
    $region31: #{tpu_custom_call.1} parent=1 // pred_check_branch
      %68 = sbr.rel (0) target = $region33
    $region32: #{tpu_custom_call.1} parent=1 // pred_region
      _
    $region33: #{tpu_custom_call.1} parent=1 // pred_fallthru
      _
    // Predicated region
    $region34: #{tpu_custom_call.1} parent=1 // pred_check
      _
    $region35: #{tpu_custom_call.1} parent=1 // pred_check_branch
      %70 = sbr.rel (0) target = $region37
    $region36: #{tpu_custom_call.1} parent=1 // pred_region
      _
    $region37: #{tpu_custom_call.1} parent=1 // pred_fallthru
      _
    // Predicated region
    $region38: #{tpu_custom_call.1} parent=1 // pred_check
      _
    $region39: #{tpu_custom_call.1} parent=1 // pred_check_branch
      %72 = sbr.rel (0) target = $region41
    $region40: #{tpu_custom_call.1} parent=1 // pred_region
      _
    $region41: #{tpu_custom_call.1} parent=1 // pred_fallthru
      _
    // Predicated region
    $region42: #{tpu_custom_call.1} parent=1 // pred_check
      _
    $region43: #{tpu_custom_call.1} parent=1 // pred_check_branch
      %74 = sbr.rel (0) target = $region45
    $region44: #{tpu_custom_call.1} parent=1 // pred_region
      _
    $region45: #{tpu_custom_call.1} parent=1 // pred_fallthru
      _
    // Predicated region
    $region46: #{tpu_custom_call.1} parent=1 // pred_check
      _
    $region47: #{tpu_custom_call.1} parent=1 // pred_check_branch
      %76 = sbr.rel (0) target = $region49
    $region48: #{tpu_custom_call.1} parent=1 // pred_region
      _
    $region49: #{tpu_custom_call.1} parent=1 // pred_fallthru
      _
    // Predicated region
    $region50: #{tpu_custom_call.1} parent=1 // pred_check
      _
    $region51: #{tpu_custom_call.1} parent=1 // pred_check_branch
      %78 = sbr.rel (0) target = $region53
    $region52: #{tpu_custom_call.1} parent=1 // pred_region
      %79 = dma.done [#allocation4], 4096
    $region53: #{tpu_custom_call.1} parent=1 // pred_fallthru
      _
    // Predicated region
    $region54: #{tpu_custom_call.1} parent=1 // pred_check
      _
    $region55: #{tpu_custom_call.1} parent=1 // pred_check_branch
      %81 = sbr.rel (0) target = $region57
    $region56: #{tpu_custom_call.1} parent=1 // pred_region
      %82 = dma.done [#allocation7], 32768
    $region57: #{tpu_custom_call.1} parent=1 // pred_fallthru
      _
    // Predicated region
    $region58: #{tpu_custom_call.1} parent=1 // pred_check
      _
    $region59: #{tpu_custom_call.1} parent=1 // pred_check_branch
      %84 = sbr.rel (0) target = $region61
    $region60: #{tpu_custom_call.1} parent=1 // pred_region
      %85 = dma.done [#allocation7], 4096
    $region61: #{tpu_custom_call.1} parent=1 // pred_fallthru
      _
    %v86 = vld [vmem:[#allocation3] sm:$0xff]
    %v87 = vld [vmem:[#allocation3 + $0x8] sm:$0xff]
    %v88 = vld [vmem:[#allocation3 + $0x10] sm:$0xff]
    %v89 = vld [vmem:[#allocation3 + $0x18] sm:$0xff]
    %v90 = vld [vmem:[#allocation3 + $0x20] sm:$0xff]
    %v91 = vld [vmem:[#allocation3 + $0x28] sm:$0xff]
    %v92 = vld [vmem:[#allocation3 + $0x30] sm:$0xff]
    %v93 = vld [vmem:[#allocation3 + $0x38] sm:$0xff]
    %v94 = vld [vmem:[#allocation3 + $0x40] sm:$0xff]
    %v95 = vld [vmem:[#allocation3 + $0x48] sm:$0xff]
    %v96 = vld [vmem:[#allocation3 + $0x50] sm:$0xff]
    %v97 = vld [vmem:[#allocation3 + $0x58] sm:$0xff]
    %v98 = vld [vmem:[#allocation3 + $0x60] sm:$0xff]
    %v99 = vld [vmem:[#allocation3 + $0x68] sm:$0xff]
    %v100 = vld [vmem:[#allocation3 + $0x70] sm:$0xff]
    %v101 = vld [vmem:[#allocation3 + $0x78] sm:$0xff]
    %v102 = vld [vmem:[#allocation3 + $0x80] sm:$0xff]
    %v103 = vld [vmem:[#allocation3 + $0x88] sm:$0xff]
    %v104 = vld [vmem:[#allocation3 + $0x90] sm:$0xff]
    %v105 = vld [vmem:[#allocation3 + $0x98] sm:$0xff]
    %v106 = vld [vmem:[#allocation3 + $0xa0] sm:$0xff]
    %v107 = vld [vmem:[#allocation3 + $0xa8] sm:$0xff]
    %v108 = vld [vmem:[#allocation3 + $0xb0] sm:$0xff]
    %v109 = vld [vmem:[#allocation3 + $0xb8] sm:$0xff]
    %v110 = vld [vmem:[#allocation3 + $0xc0] sm:$0xff]
    %v111 = vld [vmem:[#allocation3 + $0xc8] sm:$0xff]
    %v112 = vld [vmem:[#allocation3 + $0xd0] sm:$0xff]
    %v113 = vld [vmem:[#allocation3 + $0xd8] sm:$0xff]
    %v114 = vld [vmem:[#allocation3 + $0xe0] sm:$0xff]
    %v115 = vld [vmem:[#allocation3 + $0xe8] sm:$0xff]
    %v116 = vld [vmem:[#allocation3 + $0xf0] sm:$0xff]
    %v117 = vld [vmem:[#allocation3 + $0xf8] sm:$0xff]
    %v118 = vld [vmem:[#allocation6] sm:$0xff]
    %v119 = vld [vmem:[#allocation6 + $0x8] sm:$0xff]
    %v120 = vld [vmem:[#allocation6 + $0x10] sm:$0xff]
    %v121 = vld [vmem:[#allocation6 + $0x18] sm:$0xff]
    %v122 = vld [vmem:[#allocation6 + $0x20] sm:$0xff]
    %v123 = vld [vmem:[#allocation6 + $0x28] sm:$0xff]
    %v124 = vld [vmem:[#allocation6 + $0x30] sm:$0xff]
    %v125 = vld [vmem:[#allocation6 + $0x38] sm:$0xff]
    %v126 = vld [vmem:[#allocation6 + $0x40] sm:$0xff]
    %v127 = vld [vmem:[#allocation6 + $0x48] sm:$0xff]
    %v128 = vld [vmem:[#allocation6 + $0x50] sm:$0xff]
    %v129 = vld [vmem:[#allocation6 + $0x58] sm:$0xff]
    %v130 = vld [vmem:[#allocation6 + $0x60] sm:$0xff]
    %v131 = vld [vmem:[#allocation6 + $0x68] sm:$0xff]
    %v132 = vld [vmem:[#allocation6 + $0x70] sm:$0xff]
    %v133 = vld [vmem:[#allocation6 + $0x78] sm:$0xff]
    %v134 = vld [vmem:[#allocation6 + $0x80] sm:$0xff]
    %v135 = vld [vmem:[#allocation6 + $0x88] sm:$0xff]
    %v136 = vld [vmem:[#allocation6 + $0x90] sm:$0xff]
    %v137 = vld [vmem:[#allocation6 + $0x98] sm:$0xff]
    %v138 = vld [vmem:[#allocation6 + $0xa0] sm:$0xff]
    %v139 = vld [vmem:[#allocation6 + $0xa8] sm:$0xff]
    %v140 = vld [vmem:[#allocation6 + $0xb0] sm:$0xff]
    %v141 = vld [vmem:[#allocation6 + $0xb8] sm:$0xff]
    %v142 = vld [vmem:[#allocation6 + $0xc0] sm:$0xff]
    %v143 = vld [vmem:[#allocation6 + $0xc8] sm:$0xff]
    %v144 = vld [vmem:[#allocation6 + $0xd0] sm:$0xff]
    %v145 = vld [vmem:[#allocation6 + $0xd8] sm:$0xff]
    %v146 = vld [vmem:[#allocation6 + $0xe0] sm:$0xff]
    %v147 = vld [vmem:[#allocation6 + $0xe8] sm:$0xff]
    %v148 = vld [vmem:[#allocation6 + $0xf0] sm:$0xff]
    %v149 = vld [vmem:[#allocation6 + $0xf8] sm:$0xff]
    %v150 = vld [vmem:[#allocation6 + $0x100] sm:$0xff]
    %v151 = vld [vmem:[#allocation6 + $0x108] sm:$0xff]
    %v152 = vld [vmem:[#allocation6 + $0x110] sm:$0xff]
    %v153 = vld [vmem:[#allocation6 + $0x118] sm:$0xff]
    %v154 = vld [vmem:[#allocation6 + $0x120] sm:$0xff]
    %v155 = vld [vmem:[#allocation6 + $0x128] sm:$0xff]
    %v156 = vld [vmem:[#allocation6 + $0x130] sm:$0xff]
    %v157 = vld [vmem:[#allocation6 + $0x138] sm:$0xff]
    %v158 = vld [vmem:[#allocation6 + $0x140] sm:$0xff]
    %v159 = vld [vmem:[#allocation6 + $0x148] sm:$0xff]
    %v160 = vld [vmem:[#allocation6 + $0x150] sm:$0xff]
    %v161 = vld [vmem:[#allocation6 + $0x158] sm:$0xff]
    %v162 = vld [vmem:[#allocation6 + $0x160] sm:$0xff]
    %v163 = vld [vmem:[#allocation6 + $0x168] sm:$0xff]
    %v164 = vld [vmem:[#allocation6 + $0x170] sm:$0xff]
    %v165 = vld [vmem:[#allocation6 + $0x178] sm:$0xff]
    %v166 = vld [vmem:[#allocation6 + $0x180] sm:$0xff]
    %v167 = vld [vmem:[#allocation6 + $0x188] sm:$0xff]
    %v168 = vld [vmem:[#allocation6 + $0x190] sm:$0xff]
    %v169 = vld [vmem:[#allocation6 + $0x198] sm:$0xff]
    %v170 = vld [vmem:[#allocation6 + $0x1a0] sm:$0xff]
    %v171 = vld [vmem:[#allocation6 + $0x1a8] sm:$0xff]
    %v172 = vld [vmem:[#allocation6 + $0x1b0] sm:$0xff]
    %v173 = vld [vmem:[#allocation6 + $0x1b8] sm:$0xff]
    %v174 = vld [vmem:[#allocation6 + $0x1c0] sm:$0xff]
    %v175 = vld [vmem:[#allocation6 + $0x1c8] sm:$0xff]
    %v176 = vld [vmem:[#allocation6 + $0x1d0] sm:$0xff]
    %v177 = vld [vmem:[#allocation6 + $0x1d8] sm:$0xff]
    %v178 = vld [vmem:[#allocation6 + $0x1e0] sm:$0xff]
    %v179 = vld [vmem:[#allocation6 + $0x1e8] sm:$0xff]
    %v180 = vld [vmem:[#allocation6 + $0x1f0] sm:$0xff]
    %v181 = vld [vmem:[#allocation6 + $0x1f8] sm:$0xff]
    %v182 = vld [vmem:[#allocation6 + $0x200] sm:$0xff]
    %v183 = vld [vmem:[#allocation6 + $0x208] sm:$0xff]
    %v184 = vld [vmem:[#allocation6 + $0x210] sm:$0xff]
    %v185 = vld [vmem:[#allocation6 + $0x218] sm:$0xff]
    %v186 = vld [vmem:[#allocation6 + $0x220] sm:$0xff]
    %v187 = vld [vmem:[#allocation6 + $0x228] sm:$0xff]
    %v188 = vld [vmem:[#allocation6 + $0x230] sm:$0xff]
    %v189 = vld [vmem:[#allocation6 + $0x238] sm:$0xff]
    %v190 = vld [vmem:[#allocation6 + $0x240] sm:$0xff]
    %v191 = vld [vmem:[#allocation6 + $0x248] sm:$0xff]
    %v192 = vld [vmem:[#allocation6 + $0x250] sm:$0xff]
    %v193 = vld [vmem:[#allocation6 + $0x258] sm:$0xff]
    %v194 = vld [vmem:[#allocation6 + $0x260] sm:$0xff]
    %v195 = vld [vmem:[#allocation6 + $0x268] sm:$0xff]
    %v196 = vld [vmem:[#allocation6 + $0x270] sm:$0xff]
    %v197 = vld [vmem:[#allocation6 + $0x278] sm:$0xff]
    %v198 = vld [vmem:[#allocation6 + $0x280] sm:$0xff]
    %v199 = vld [vmem:[#allocation6 + $0x288] sm:$0xff]
    %v200 = vld [vmem:[#allocation6 + $0x290] sm:$0xff]
    %v201 = vld [vmem:[#allocation6 + $0x298] sm:$0xff]
    %v202 = vld [vmem:[#allocation6 + $0x2a0] sm:$0xff]
    %v203 = vld [vmem:[#allocation6 + $0x2a8] sm:$0xff]
    %v204 = vld [vmem:[#allocation6 + $0x2b0] sm:$0xff]
    %v205 = vld [vmem:[#allocation6 + $0x2b8] sm:$0xff]
    %v206 = vld [vmem:[#allocation6 + $0x2c0] sm:$0xff]
    %v207 = vld [vmem:[#allocation6 + $0x2c8] sm:$0xff]
    %v208 = vld [vmem:[#allocation6 + $0x2d0] sm:$0xff]
    %v209 = vld [vmem:[#allocation6 + $0x2d8] sm:$0xff]
    %v210 = vld [vmem:[#allocation6 + $0x2e0] sm:$0xff]
    %v211 = vld [vmem:[#allocation6 + $0x2e8] sm:$0xff]
    %v212 = vld [vmem:[#allocation6 + $0x2f0] sm:$0xff]
    %v213 = vld [vmem:[#allocation6 + $0x2f8] sm:$0xff]
    %v214 = vld [vmem:[#allocation6 + $0x300] sm:$0xff]
    %v215 = vld [vmem:[#allocation6 + $0x308] sm:$0xff]
    %v216 = vld [vmem:[#allocation6 + $0x310] sm:$0xff]
    %v217 = vld [vmem:[#allocation6 + $0x318] sm:$0xff]
    %v218 = vld [vmem:[#allocation6 + $0x320] sm:$0xff]
    %v219 = vld [vmem:[#allocation6 + $0x328] sm:$0xff]
    %v220 = vld [vmem:[#allocation6 + $0x330] sm:$0xff]
    %v221 = vld [vmem:[#allocation6 + $0x338] sm:$0xff]
    %v222 = vld [vmem:[#allocation6 + $0x340] sm:$0xff]
    %v223 = vld [vmem:[#allocation6 + $0x348] sm:$0xff]
    %v224 = vld [vmem:[#allocation6 + $0x350] sm:$0xff]
    %v225 = vld [vmem:[#allocation6 + $0x358] sm:$0xff]
    %v226 = vld [vmem:[#allocation6 + $0x360] sm:$0xff]
    %v227 = vld [vmem:[#allocation6 + $0x368] sm:$0xff]
    %v228 = vld [vmem:[#allocation6 + $0x370] sm:$0xff]
    %v229 = vld [vmem:[#allocation6 + $0x378] sm:$0xff]
    %v230 = vld [vmem:[#allocation6 + $0x380] sm:$0xff]
    %v231 = vld [vmem:[#allocation6 + $0x388] sm:$0xff]
    %v232 = vld [vmem:[#allocation6 + $0x390] sm:$0xff]
    %v233 = vld [vmem:[#allocation6 + $0x398] sm:$0xff]
    %v234 = vld [vmem:[#allocation6 + $0x3a0] sm:$0xff]
    %v235 = vld [vmem:[#allocation6 + $0x3a8] sm:$0xff]
    %v236 = vld [vmem:[#allocation6 + $0x3b0] sm:$0xff]
    %v237 = vld [vmem:[#allocation6 + $0x3b8] sm:$0xff]
    %v238 = vld [vmem:[#allocation6 + $0x3c0] sm:$0xff]
    %v239 = vld [vmem:[#allocation6 + $0x3c8] sm:$0xff]
    %v240 = vld [vmem:[#allocation6 + $0x3d0] sm:$0xff]
    %v241 = vld [vmem:[#allocation6 + $0x3d8] sm:$0xff]
    %v242 = vld [vmem:[#allocation6 + $0x3e0] sm:$0xff]
    %v243 = vld [vmem:[#allocation6 + $0x3e8] sm:$0xff]
    %v244 = vld [vmem:[#allocation6 + $0x3f0] sm:$0xff]
    %v245 = vld [vmem:[#allocation6 + $0x3f8] sm:$0xff]
    %v246 = vld [vmem:[#allocation6 + $0x400] sm:$0xff]
    %v247 = vld [vmem:[#allocation6 + $0x408] sm:$0xff]
    %v248 = vld [vmem:[#allocation6 + $0x410] sm:$0xff]
    %v249 = vld [vmem:[#allocation6 + $0x418] sm:$0xff]
    %v250 = vld [vmem:[#allocation6 + $0x420] sm:$0xff]
    %v251 = vld [vmem:[#allocation6 + $0x428] sm:$0xff]
    %v252 = vld [vmem:[#allocation6 + $0x430] sm:$0xff]
    %v253 = vld [vmem:[#allocation6 + $0x438] sm:$0xff]
    %v254 = vld [vmem:[#allocation6 + $0x440] sm:$0xff]
    %v255 = vld [vmem:[#allocation6 + $0x448] sm:$0xff]
    %v256 = vld [vmem:[#allocation6 + $0x450] sm:$0xff]
    %v257 = vld [vmem:[#allocation6 + $0x458] sm:$0xff]
    %v258 = vld [vmem:[#allocation6 + $0x460] sm:$0xff]
    %v259 = vld [vmem:[#allocation6 + $0x468] sm:$0xff]
    %v260 = vld [vmem:[#allocation6 + $0x470] sm:$0xff]
    %v261 = vld [vmem:[#allocation6 + $0x478] sm:$0xff]
    %v262 = vld [vmem:[#allocation6 + $0x480] sm:$0xff]
    %v263 = vld [vmem:[#allocation6 + $0x488] sm:$0xff]
    %v264 = vld [vmem:[#allocation6 + $0x490] sm:$0xff]
    %v265 = vld [vmem:[#allocation6 + $0x498] sm:$0xff]
    %v266 = vld [vmem:[#allocation6 + $0x4a0] sm:$0xff]
    %v267 = vld [vmem:[#allocation6 + $0x4a8] sm:$0xff]
    %v268 = vld [vmem:[#allocation6 + $0x4b0] sm:$0xff]
    %v269 = vld [vmem:[#allocation6 + $0x4b8] sm:$0xff]
    %v270 = vld [vmem:[#allocation6 + $0x4c0] sm:$0xff]
    %v271 = vld [vmem:[#allocation6 + $0x4c8] sm:$0xff]
    %v272 = vld [vmem:[#allocation6 + $0x4d0] sm:$0xff]
    %v273 = vld [vmem:[#allocation6 + $0x4d8] sm:$0xff]
    %v274 = vld [vmem:[#allocation6 + $0x4e0] sm:$0xff]
    %v275 = vld [vmem:[#allocation6 + $0x4e8] sm:$0xff]
    %v276 = vld [vmem:[#allocation6 + $0x4f0] sm:$0xff]
    %v277 = vld [vmem:[#allocation6 + $0x4f8] sm:$0xff]
    %v278 = vld [vmem:[#allocation6 + $0x500] sm:$0xff]
    %v279 = vld [vmem:[#allocation6 + $0x508] sm:$0xff]
    %v280 = vld [vmem:[#allocation6 + $0x510] sm:$0xff]
    %v281 = vld [vmem:[#allocation6 + $0x518] sm:$0xff]
    %v282 = vld [vmem:[#allocation6 + $0x520] sm:$0xff]
    %v283 = vld [vmem:[#allocation6 + $0x528] sm:$0xff]
    %v284 = vld [vmem:[#allocation6 + $0x530] sm:$0xff]
    %v285 = vld [vmem:[#allocation6 + $0x538] sm:$0xff]
    %v286 = vld [vmem:[#allocation6 + $0x540] sm:$0xff]
    %v287 = vld [vmem:[#allocation6 + $0x548] sm:$0xff]
    %v288 = vld [vmem:[#allocation6 + $0x550] sm:$0xff]
    %v289 = vld [vmem:[#allocation6 + $0x558] sm:$0xff]
    %v290 = vld [vmem:[#allocation6 + $0x560] sm:$0xff]
    %v291 = vld [vmem:[#allocation6 + $0x568] sm:$0xff]
    %v292 = vld [vmem:[#allocation6 + $0x570] sm:$0xff]
    %v293 = vld [vmem:[#allocation6 + $0x578] sm:$0xff]
    %v294 = vld [vmem:[#allocation6 + $0x580] sm:$0xff]
    %v295 = vld [vmem:[#allocation6 + $0x588] sm:$0xff]
    %v296 = vld [vmem:[#allocation6 + $0x590] sm:$0xff]
    %v297 = vld [vmem:[#allocation6 + $0x598] sm:$0xff]
    %v298 = vld [vmem:[#allocation6 + $0x5a0] sm:$0xff]
    %v299 = vld [vmem:[#allocation6 + $0x5a8] sm:$0xff]
    %v300 = vld [vmem:[#allocation6 + $0x5b0] sm:$0xff]
    %v301 = vld [vmem:[#allocation6 + $0x5b8] sm:$0xff]
    %v302 = vld [vmem:[#allocation6 + $0x5c0] sm:$0xff]
    %v303 = vld [vmem:[#allocation6 + $0x5c8] sm:$0xff]
    %v304 = vld [vmem:[#allocation6 + $0x5d0] sm:$0xff]
    %v305 = vld [vmem:[#allocation6 + $0x5d8] sm:$0xff]
    %v306 = vld [vmem:[#allocation6 + $0x5e0] sm:$0xff]
    %v307 = vld [vmem:[#allocation6 + $0x5e8] sm:$0xff]
    %v308 = vld [vmem:[#allocation6 + $0x5f0] sm:$0xff]
    %v309 = vld [vmem:[#allocation6 + $0x5f8] sm:$0xff]
    %v310 = vld [vmem:[#allocation6 + $0x600] sm:$0xff]
    %v311 = vld [vmem:[#allocation6 + $0x608] sm:$0xff]
    %v312 = vld [vmem:[#allocation6 + $0x610] sm:$0xff]
    %v313 = vld [vmem:[#allocation6 + $0x618] sm:$0xff]
    %v314 = vld [vmem:[#allocation6 + $0x620] sm:$0xff]
    %v315 = vld [vmem:[#allocation6 + $0x628] sm:$0xff]
    %v316 = vld [vmem:[#allocation6 + $0x630] sm:$0xff]
    %v317 = vld [vmem:[#allocation6 + $0x638] sm:$0xff]
    %v318 = vld [vmem:[#allocation6 + $0x640] sm:$0xff]
    %v319 = vld [vmem:[#allocation6 + $0x648] sm:$0xff]
    %v320 = vld [vmem:[#allocation6 + $0x650] sm:$0xff]
    %v321 = vld [vmem:[#allocation6 + $0x658] sm:$0xff]
    %v322 = vld [vmem:[#allocation6 + $0x660] sm:$0xff]
    %v323 = vld [vmem:[#allocation6 + $0x668] sm:$0xff]
    %v324 = vld [vmem:[#allocation6 + $0x670] sm:$0xff]
    %v325 = vld [vmem:[#allocation6 + $0x678] sm:$0xff]
    %v326 = vld [vmem:[#allocation6 + $0x680] sm:$0xff]
    %v327 = vld [vmem:[#allocation6 + $0x688] sm:$0xff]
    %v328 = vld [vmem:[#allocation6 + $0x690] sm:$0xff]
    %v329 = vld [vmem:[#allocation6 + $0x698] sm:$0xff]
    %v330 = vld [vmem:[#allocation6 + $0x6a0] sm:$0xff]
    %v331 = vld [vmem:[#allocation6 + $0x6a8] sm:$0xff]
    %v332 = vld [vmem:[#allocation6 + $0x6b0] sm:$0xff]
    %v333 = vld [vmem:[#allocation6 + $0x6b8] sm:$0xff]
    %v334 = vld [vmem:[#allocation6 + $0x6c0] sm:$0xff]
    %v335 = vld [vmem:[#allocation6 + $0x6c8] sm:$0xff]
    %v336 = vld [vmem:[#allocation6 + $0x6d0] sm:$0xff]
    %v337 = vld [vmem:[#allocation6 + $0x6d8] sm:$0xff]
    %v338 = vld [vmem:[#allocation6 + $0x6e0] sm:$0xff]
    %v339 = vld [vmem:[#allocation6 + $0x6e8] sm:$0xff]
    %v340 = vld [vmem:[#allocation6 + $0x6f0] sm:$0xff]
    %v341 = vld [vmem:[#allocation6 + $0x6f8] sm:$0xff]
    %v342 = vld [vmem:[#allocation6 + $0x700] sm:$0xff]
    %v343 = vld [vmem:[#allocation6 + $0x708] sm:$0xff]
    %v344 = vld [vmem:[#allocation6 + $0x710] sm:$0xff]
    %v345 = vld [vmem:[#allocation6 + $0x718] sm:$0xff]
    %v346 = vld [vmem:[#allocation6 + $0x720] sm:$0xff]
    %v347 = vld [vmem:[#allocation6 + $0x728] sm:$0xff]
    %v348 = vld [vmem:[#allocation6 + $0x730] sm:$0xff]
    %v349 = vld [vmem:[#allocation6 + $0x738] sm:$0xff]
    %v350 = vld [vmem:[#allocation6 + $0x740] sm:$0xff]
    %v351 = vld [vmem:[#allocation6 + $0x748] sm:$0xff]
    %v352 = vld [vmem:[#allocation6 + $0x750] sm:$0xff]
    %v353 = vld [vmem:[#allocation6 + $0x758] sm:$0xff]
    %v354 = vld [vmem:[#allocation6 + $0x760] sm:$0xff]
    %v355 = vld [vmem:[#allocation6 + $0x768] sm:$0xff]
    %v356 = vld [vmem:[#allocation6 + $0x770] sm:$0xff]
    %v357 = vld [vmem:[#allocation6 + $0x778] sm:$0xff]
    %v358 = vld [vmem:[#allocation6 + $0x780] sm:$0xff]
    %v359 = vld [vmem:[#allocation6 + $0x788] sm:$0xff]
    %v360 = vld [vmem:[#allocation6 + $0x790] sm:$0xff]
    %v361 = vld [vmem:[#allocation6 + $0x798] sm:$0xff]
    %v362 = vld [vmem:[#allocation6 + $0x7a0] sm:$0xff]
    %v363 = vld [vmem:[#allocation6 + $0x7a8] sm:$0xff]
    %v364 = vld [vmem:[#allocation6 + $0x7b0] sm:$0xff]
    %v365 = vld [vmem:[#allocation6 + $0x7b8] sm:$0xff]
    %v366 = vld [vmem:[#allocation6 + $0x7c0] sm:$0xff]
    %v367 = vld [vmem:[#allocation6 + $0x7c8] sm:$0xff]
    %v368 = vld [vmem:[#allocation6 + $0x7d0] sm:$0xff]
    %v369 = vld [vmem:[#allocation6 + $0x7d8] sm:$0xff]
    %v370 = vld [vmem:[#allocation6 + $0x7e0] sm:$0xff]
    %v371 = vld [vmem:[#allocation6 + $0x7e8] sm:$0xff]
    %v372 = vld [vmem:[#allocation6 + $0x7f0] sm:$0xff]
    %v373 = vld [vmem:[#allocation6 + $0x7f8] sm:$0xff]
    %v374 = vld [vmem:[%s2] sm:$0x1]
    %v376 = vlaneseq
    %v377 = vshrl.u32 %v376, 7
    %v378 = vsub.s32 0, %v377
    %v379 = vrot.slane %v374, %v378
    %381 = vmatprep.subr.mxu0 0.0
    %382 = vmatpush1.msra.mxu0 %v133
    %383 = vmatprep.subr.mxu0 0.0
    %384 = vmatpush1.msra.mxu0 %v132
    %385 = vmatprep.subr.mxu0 0.0
    %386 = vmatpush1.msra.mxu0 %v131
    %387 = vmatprep.subr.mxu0 0.0
    %388 = vmatpush1.msra.mxu0 %v130
    %389 = vmatprep.subr.mxu0 0.0
    %390 = vmatpush1.msra.mxu0 %v129
    %391 = vmatprep.subr.mxu0 0.0
    %392 = vmatpush1.msra.mxu0 %v128
    %393 = vmatprep.subr.mxu0 0.0
    %394 = vmatpush1.msra.mxu0 %v127
    %395 = vmatprep.subr.mxu0 0.0
    %396 = vmatpush1.msra.mxu0 %v126
    %397 = vmatprep.subr.mxu0 0.0
    %398 = vmatpush1.msra.mxu0 %v125
    %399 = vmatprep.subr.mxu0 0.0
    %400 = vmatpush1.msra.mxu0 %v124
    %401 = vmatprep.subr.mxu0 0.0
    %402 = vmatpush1.msra.mxu0 %v123
    %403 = vmatprep.subr.mxu0 0.0
    %404 = vmatpush1.msra.mxu0 %v122
    %405 = vmatprep.subr.mxu0 0.0
    %406 = vmatpush1.msra.mxu0 %v121
    %407 = vmatprep.subr.mxu0 0.0
    %408 = vmatpush1.msra.mxu0 %v120
    %409 = vmatprep.subr.mxu0 0.0
    %410 = vmatpush1.msra.mxu0 %v119
    %411 = vmatprep.subr.mxu0 0.0
    %412 = vmatpush1.msra.mxu0 %v118
    %413 = vmatprep.subr.mxu0 0.0
    %414 = vmatpush2.msra.mxu0 %v149
    %415 = vmatprep.subr.mxu0 0.0
    %416 = vmatpush2.msra.mxu0 %v148
    %417 = vmatprep.subr.mxu0 0.0
    %418 = vmatpush2.msra.mxu0 %v147
    %419 = vmatprep.subr.mxu0 0.0
    %420 = vmatpush2.msra.mxu0 %v146
    %421 = vmatprep.subr.mxu0 0.0
    %422 = vmatpush2.msra.mxu0 %v145
    %423 = vmatprep.subr.mxu0 0.0
    %424 = vmatpush2.msra.mxu0 %v144
    %425 = vmatprep.subr.mxu0 0.0
    %426 = vmatpush2.msra.mxu0 %v143
    %427 = vmatprep.subr.mxu0 0.0
    %428 = vmatpush2.msra.mxu0 %v142
    %429 = vmatprep.subr.mxu0 0.0
    %430 = vmatpush2.msra.mxu0 %v141
    %431 = vmatprep.subr.mxu0 0.0
    %432 = vmatpush2.msra.mxu0 %v140
    %433 = vmatprep.subr.mxu0 0.0
    %434 = vmatpush2.msra.mxu0 %v139
    %435 = vmatprep.subr.mxu0 0.0
    %436 = vmatpush2.msra.mxu0 %v138
    %437 = vmatprep.subr.mxu0 0.0
    %438 = vmatpush2.msra.mxu0 %v137
    %439 = vmatprep.subr.mxu0 0.0
    %440 = vmatpush2.msra.mxu0 %v136
    %441 = vmatprep.subr.mxu0 0.0
    %442 = vmatpush2.msra.mxu0 %v135
    %443 = vmatprep.subr.mxu0 0.0
    %444 = vmatpush2.msra.mxu0 %v134
    %445 = vmatprep.mubr.f32.mxu0 %v87
    %446 = vmatmul.mubr.f32.gmra.mxu0 %v86
    %v447 = vpop.f32.mrf.mxu0
    %v448 = vadd.f32 %v379, %v447
    %v449 = vpop.f32.mrf.mxu0
    %450 = vmatprep.mubr.f32.mxu0 %v103
    %451 = vmatmul.mubr.f32.gmra.mxu0 %v102
    %v452 = vpop.f32.mrf.mxu0
    %v453 = vadd.f32 %v379, %v452
    %v454 = vpop.f32.mrf.mxu0
    %455 = vdwg.mxu0
    %456 = vmatprep.subr.mxu0 0.0
    %457 = vmatpush1.msra.mxu0 %v165
    %458 = vmatprep.subr.mxu0 0.0
    %459 = vmatpush1.msra.mxu0 %v164
    %460 = vmatprep.subr.mxu0 0.0
    %461 = vmatpush1.msra.mxu0 %v163
    %462 = vmatprep.subr.mxu0 0.0
    %463 = vmatpush1.msra.mxu0 %v162
    %464 = vmatprep.subr.mxu0 0.0
    %465 = vmatpush1.msra.mxu0 %v161
    %466 = vmatprep.subr.mxu0 0.0
    %467 = vmatpush1.msra.mxu0 %v160
    %468 = vmatprep.subr.mxu0 0.0
    %469 = vmatpush1.msra.mxu0 %v159
    %470 = vmatprep.subr.mxu0 0.0
    %471 = vmatpush1.msra.mxu0 %v158
    %472 = vmatprep.subr.mxu0 0.0
    %473 = vmatpush1.msra.mxu0 %v157
    %474 = vmatprep.subr.mxu0 0.0
    %475 = vmatpush1.msra.mxu0 %v156
    %476 = vmatprep.subr.mxu0 0.0
    %477 = vmatpush1.msra.mxu0 %v155
    %478 = vmatprep.subr.mxu0 0.0
    %479 = vmatpush1.msra.mxu0 %v154
    %480 = vmatprep.subr.mxu0 0.0
    %481 = vmatpush1.msra.mxu0 %v153
    %482 = vmatprep.subr.mxu0 0.0
    %483 = vmatpush1.msra.mxu0 %v152
    %484 = vmatprep.subr.mxu0 0.0
    %485 = vmatpush1.msra.mxu0 %v151
    %486 = vmatprep.subr.mxu0 0.0
    %487 = vmatpush1.msra.mxu0 %v150
    %488 = vmatprep.subr.mxu0 0.0
    %489 = vmatpush2.msra.mxu0 %v181
    %490 = vmatprep.subr.mxu0 0.0
    %491 = vmatpush2.msra.mxu0 %v180
    %492 = vmatprep.subr.mxu0 0.0
    %493 = vmatpush2.msra.mxu0 %v179
    %494 = vmatprep.subr.mxu0 0.0
    %495 = vmatpush2.msra.mxu0 %v178
    %496 = vmatprep.subr.mxu0 0.0
    %497 = vmatpush2.msra.mxu0 %v177
    %498 = vmatprep.subr.mxu0 0.0
    %499 = vmatpush2.msra.mxu0 %v176
    %500 = vmatprep.subr.mxu0 0.0
    %501 = vmatpush2.msra.mxu0 %v175
    %502 = vmatprep.subr.mxu0 0.0
    %503 = vmatpush2.msra.mxu0 %v174
    %504 = vmatprep.subr.mxu0 0.0
    %505 = vmatpush2.msra.mxu0 %v173
    %506 = vmatprep.subr.mxu0 0.0
    %507 = vmatpush2.msra.mxu0 %v172
    %508 = vmatprep.subr.mxu0 0.0
    %509 = vmatpush2.msra.mxu0 %v171
    %510 = vmatprep.subr.mxu0 0.0
    %511 = vmatpush2.msra.mxu0 %v170
    %512 = vmatprep.subr.mxu0 0.0
    %513 = vmatpush2.msra.mxu0 %v169
    %514 = vmatprep.subr.mxu0 0.0
    %515 = vmatpush2.msra.mxu0 %v168
    %516 = vmatprep.subr.mxu0 0.0
    %517 = vmatpush2.msra.mxu0 %v167
    %518 = vmatprep.subr.mxu0 0.0
    %519 = vmatpush2.msra.mxu0 %v166
    %520 = vmatprep.mubr.f32.mxu0 %v89
    %521 = vmatmul.mubr.f32.gmra.mxu0 %v88
    %v522 = vpop.f32.mrf.mxu0
    %v523 = vadd.f32 %v448, %v522
    %v524 = vpop.f32.mrf.mxu0
    %525 = vmatprep.mubr.f32.mxu0 %v105
    %526 = vmatmul.mubr.f32.gmra.mxu0 %v104
    %v527 = vpop.f32.mrf.mxu0
    %v528 = vadd.f32 %v453, %v527
    %v529 = vpop.f32.mrf.mxu0
    %530 = vdwg.mxu0
    %531 = vmatprep.subr.mxu0 0.0
    %532 = vmatpush1.msra.mxu0 %v197
    %533 = vmatprep.subr.mxu0 0.0
    %534 = vmatpush1.msra.mxu0 %v196
    %535 = vmatprep.subr.mxu0 0.0
    %536 = vmatpush1.msra.mxu0 %v195
    %537 = vmatprep.subr.mxu0 0.0
    %538 = vmatpush1.msra.mxu0 %v194
    %539 = vmatprep.subr.mxu0 0.0
    %540 = vmatpush1.msra.mxu0 %v193
    %541 = vmatprep.subr.mxu0 0.0
    %542 = vmatpush1.msra.mxu0 %v192
    %543 = vmatprep.subr.mxu0 0.0
    %544 = vmatpush1.msra.mxu0 %v191
    %545 = vmatprep.subr.mxu0 0.0
    %546 = vmatpush1.msra.mxu0 %v190
    %547 = vmatprep.subr.mxu0 0.0
    %548 = vmatpush1.msra.mxu0 %v189
    %549 = vmatprep.subr.mxu0 0.0
    %550 = vmatpush1.msra.mxu0 %v188
    %551 = vmatprep.subr.mxu0 0.0
    %552 = vmatpush1.msra.mxu0 %v187
    %553 = vmatprep.subr.mxu0 0.0
    %554 = vmatpush1.msra.mxu0 %v186
    %555 = vmatprep.subr.mxu0 0.0
    %556 = vmatpush1.msra.mxu0 %v185
    %557 = vmatprep.subr.mxu0 0.0
    %558 = vmatpush1.msra.mxu0 %v184
    %559 = vmatprep.subr.mxu0 0.0
    %560 = vmatpush1.msra.mxu0 %v183
    %561 = vmatprep.subr.mxu0 0.0
    %562 = vmatpush1.msra.mxu0 %v182
    %563 = vmatprep.subr.mxu0 0.0
    %564 = vmatpush2.msra.mxu0 %v213
    %565 = vmatprep.subr.mxu0 0.0
    %566 = vmatpush2.msra.mxu0 %v212
    %567 = vmatprep.subr.mxu0 0.0
    %568 = vmatpush2.msra.mxu0 %v211
    %569 = vmatprep.subr.mxu0 0.0
    %570 = vmatpush2.msra.mxu0 %v210
    %571 = vmatprep.subr.mxu0 0.0
    %572 = vmatpush2.msra.mxu0 %v209
    %573 = vmatprep.subr.mxu0 0.0
    %574 = vmatpush2.msra.mxu0 %v208
    %575 = vmatprep.subr.mxu0 0.0
    %576 = vmatpush2.msra.mxu0 %v207
    %577 = vmatprep.subr.mxu0 0.0
    %578 = vmatpush2.msra.mxu0 %v206
    %579 = vmatprep.subr.mxu0 0.0
    %580 = vmatpush2.msra.mxu0 %v205
    %581 = vmatprep.subr.mxu0 0.0
    %582 = vmatpush2.msra.mxu0 %v204
    %583 = vmatprep.subr.mxu0 0.0
    %584 = vmatpush2.msra.mxu0 %v203
    %585 = vmatprep.subr.mxu0 0.0
    %586 = vmatpush2.msra.mxu0 %v202
    %587 = vmatprep.subr.mxu0 0.0
    %588 = vmatpush2.msra.mxu0 %v201
    %589 = vmatprep.subr.mxu0 0.0
    %590 = vmatpush2.msra.mxu0 %v200
    %591 = vmatprep.subr.mxu0 0.0
    %592 = vmatpush2.msra.mxu0 %v199
    %593 = vmatprep.subr.mxu0 0.0
    %594 = vmatpush2.msra.mxu0 %v198
    %595 = vmatprep.mubr.f32.mxu0 %v91
    %596 = vmatmul.mubr.f32.gmra.mxu0 %v90
    %v597 = vpop.f32.mrf.mxu0
    %v598 = vadd.f32 %v523, %v597
    %v599 = vpop.f32.mrf.mxu0
    %600 = vmatprep.mubr.f32.mxu0 %v107
    %601 = vmatmul.mubr.f32.gmra.mxu0 %v106
    %v602 = vpop.f32.mrf.mxu0
    %v603 = vadd.f32 %v528, %v602
    %v604 = vpop.f32.mrf.mxu0
    %605 = vdwg.mxu0
    %606 = vmatprep.subr.mxu0 0.0
    %607 = vmatpush1.msra.mxu0 %v229
    %608 = vmatprep.subr.mxu0 0.0
    %609 = vmatpush1.msra.mxu0 %v228
    %610 = vmatprep.subr.mxu0 0.0
    %611 = vmatpush1.msra.mxu0 %v227
    %612 = vmatprep.subr.mxu0 0.0
    %613 = vmatpush1.msra.mxu0 %v226
    %614 = vmatprep.subr.mxu0 0.0
    %615 = vmatpush1.msra.mxu0 %v225
    %616 = vmatprep.subr.mxu0 0.0
    %617 = vmatpush1.msra.mxu0 %v224
    %618 = vmatprep.subr.mxu0 0.0
    %619 = vmatpush1.msra.mxu0 %v223
    %620 = vmatprep.subr.mxu0 0.0
    %621 = vmatpush1.msra.mxu0 %v222
    %622 = vmatprep.subr.mxu0 0.0
    %623 = vmatpush1.msra.mxu0 %v221
    %624 = vmatprep.subr.mxu0 0.0
    %625 = vmatpush1.msra.mxu0 %v220
    %626 = vmatprep.subr.mxu0 0.0
    %627 = vmatpush1.msra.mxu0 %v219
    %628 = vmatprep.subr.mxu0 0.0
    %629 = vmatpush1.msra.mxu0 %v218
    %630 = vmatprep.subr.mxu0 0.0
    %631 = vmatpush1.msra.mxu0 %v217
    %632 = vmatprep.subr.mxu0 0.0
    %633 = vmatpush1.msra.mxu0 %v216
    %634 = vmatprep.subr.mxu0 0.0
    %635 = vmatpush1.msra.mxu0 %v215
    %636 = vmatprep.subr.mxu0 0.0
    %637 = vmatpush1.msra.mxu0 %v214
    %638 = vmatprep.subr.mxu0 0.0
    %639 = vmatpush2.msra.mxu0 %v245
    %640 = vmatprep.subr.mxu0 0.0
    %641 = vmatpush2.msra.mxu0 %v244
    %642 = vmatprep.subr.mxu0 0.0
    %643 = vmatpush2.msra.mxu0 %v243
    %644 = vmatprep.subr.mxu0 0.0
    %645 = vmatpush2.msra.mxu0 %v242
    %646 = vmatprep.subr.mxu0 0.0
    %647 = vmatpush2.msra.mxu0 %v241
    %648 = vmatprep.subr.mxu0 0.0
    %649 = vmatpush2.msra.mxu0 %v240
    %650 = vmatprep.subr.mxu0 0.0
    %651 = vmatpush2.msra.mxu0 %v239
    %652 = vmatprep.subr.mxu0 0.0
    %653 = vmatpush2.msra.mxu0 %v238
    %654 = vmatprep.subr.mxu0 0.0
    %655 = vmatpush2.msra.mxu0 %v237
    %656 = vmatprep.subr.mxu0 0.0
    %657 = vmatpush2.msra.mxu0 %v236
    %658 = vmatprep.subr.mxu0 0.0
    %659 = vmatpush2.msra.mxu0 %v235
    %660 = vmatprep.subr.mxu0 0.0
    %661 = vmatpush2.msra.mxu0 %v234
    %662 = vmatprep.subr.mxu0 0.0
    %663 = vmatpush2.msra.mxu0 %v233
    %664 = vmatprep.subr.mxu0 0.0
    %665 = vmatpush2.msra.mxu0 %v232
    %666 = vmatprep.subr.mxu0 0.0
    %667 = vmatpush2.msra.mxu0 %v231
    %668 = vmatprep.subr.mxu0 0.0
    %669 = vmatpush2.msra.mxu0 %v230
    %670 = vmatprep.mubr.f32.mxu0 %v93
    %671 = vmatmul.mubr.f32.gmra.mxu0 %v92
    %v672 = vpop.f32.mrf.mxu0
    %v673 = vadd.f32 %v598, %v672
    %v674 = vpop.f32.mrf.mxu0
    %675 = vmatprep.mubr.f32.mxu0 %v109
    %676 = vmatmul.mubr.f32.gmra.mxu0 %v108
    %v677 = vpop.f32.mrf.mxu0
    %v678 = vadd.f32 %v603, %v677
    %v679 = vpop.f32.mrf.mxu0
    %680 = vdwg.mxu0
    %681 = vmatprep.subr.mxu0 0.0
    %682 = vmatpush1.msra.mxu0 %v261
    %683 = vmatprep.subr.mxu0 0.0
    %684 = vmatpush1.msra.mxu0 %v260
    %685 = vmatprep.subr.mxu0 0.0
    %686 = vmatpush1.msra.mxu0 %v259
    %687 = vmatprep.subr.mxu0 0.0
    %688 = vmatpush1.msra.mxu0 %v258
    %689 = vmatprep.subr.mxu0 0.0
    %690 = vmatpush1.msra.mxu0 %v257
    %691 = vmatprep.subr.mxu0 0.0
    %692 = vmatpush1.msra.mxu0 %v256
    %693 = vmatprep.subr.mxu0 0.0
    %694 = vmatpush1.msra.mxu0 %v255
    %695 = vmatprep.subr.mxu0 0.0
    %696 = vmatpush1.msra.mxu0 %v254
    %697 = vmatprep.subr.mxu0 0.0
    %698 = vmatpush1.msra.mxu0 %v253
    %699 = vmatprep.subr.mxu0 0.0
    %700 = vmatpush1.msra.mxu0 %v252
    %701 = vmatprep.subr.mxu0 0.0
    %702 = vmatpush1.msra.mxu0 %v251
    %703 = vmatprep.subr.mxu0 0.0
    %704 = vmatpush1.msra.mxu0 %v250
    %705 = vmatprep.subr.mxu0 0.0
    %706 = vmatpush1.msra.mxu0 %v249
    %707 = vmatprep.subr.mxu0 0.0
    %708 = vmatpush1.msra.mxu0 %v248
    %709 = vmatprep.subr.mxu0 0.0
    %710 = vmatpush1.msra.mxu0 %v247
    %711 = vmatprep.subr.mxu0 0.0
    %712 = vmatpush1.msra.mxu0 %v246
    %713 = vmatprep.subr.mxu0 0.0
    %714 = vmatpush2.msra.mxu0 %v277
    %715 = vmatprep.subr.mxu0 0.0
    %716 = vmatpush2.msra.mxu0 %v276
    %717 = vmatprep.subr.mxu0 0.0
    %718 = vmatpush2.msra.mxu0 %v275
    %719 = vmatprep.subr.mxu0 0.0
    %720 = vmatpush2.msra.mxu0 %v274
    %721 = vmatprep.subr.mxu0 0.0
    %722 = vmatpush2.msra.mxu0 %v273
    %723 = vmatprep.subr.mxu0 0.0
    %724 = vmatpush2.msra.mxu0 %v272
    %725 = vmatprep.subr.mxu0 0.0
    %726 = vmatpush2.msra.mxu0 %v271
    %727 = vmatprep.subr.mxu0 0.0
    %728 = vmatpush2.msra.mxu0 %v270
    %729 = vmatprep.subr.mxu0 0.0
    %730 = vmatpush2.msra.mxu0 %v269
    %731 = vmatprep.subr.mxu0 0.0
    %732 = vmatpush2.msra.mxu0 %v268
    %733 = vmatprep.subr.mxu0 0.0
    %734 = vmatpush2.msra.mxu0 %v267
    %735 = vmatprep.subr.mxu0 0.0
    %736 = vmatpush2.msra.mxu0 %v266
    %737 = vmatprep.subr.mxu0 0.0
    %738 = vmatpush2.msra.mxu0 %v265
    %739 = vmatprep.subr.mxu0 0.0
    %740 = vmatpush2.msra.mxu0 %v264
    %741 = vmatprep.subr.mxu0 0.0
    %742 = vmatpush2.msra.mxu0 %v263
    %743 = vmatprep.subr.mxu0 0.0
    %744 = vmatpush2.msra.mxu0 %v262
    %745 = vmatprep.mubr.f32.mxu0 %v95
    %746 = vmatmul.mubr.f32.gmra.mxu0 %v94
    %v747 = vpop.f32.mrf.mxu0
    %v748 = vadd.f32 %v673, %v747
    %v749 = vpop.f32.mrf.mxu0
    %750 = vmatprep.mubr.f32.mxu0 %v111
    %751 = vmatmul.mubr.f32.gmra.mxu0 %v110
    %v752 = vpop.f32.mrf.mxu0
    %v753 = vadd.f32 %v678, %v752
    %v754 = vpop.f32.mrf.mxu0
    %755 = vdwg.mxu0
    %756 = vmatprep.subr.mxu0 0.0
    %757 = vmatpush1.msra.mxu0 %v293
    %758 = vmatprep.subr.mxu0 0.0
    %759 = vmatpush1.msra.mxu0 %v292
    %760 = vmatprep.subr.mxu0 0.0
    %761 = vmatpush1.msra.mxu0 %v291
    %762 = vmatprep.subr.mxu0 0.0
    %763 = vmatpush1.msra.mxu0 %v290
    %764 = vmatprep.subr.mxu0 0.0
    %765 = vmatpush1.msra.mxu0 %v289
    %766 = vmatprep.subr.mxu0 0.0
    %767 = vmatpush1.msra.mxu0 %v288
    %768 = vmatprep.subr.mxu0 0.0
    %769 = vmatpush1.msra.mxu0 %v287
    %770 = vmatprep.subr.mxu0 0.0
    %771 = vmatpush1.msra.mxu0 %v286
    %772 = vmatprep.subr.mxu0 0.0
    %773 = vmatpush1.msra.mxu0 %v285
    %774 = vmatprep.subr.mxu0 0.0
    %775 = vmatpush1.msra.mxu0 %v284
    %776 = vmatprep.subr.mxu0 0.0
    %777 = vmatpush1.msra.mxu0 %v283
    %778 = vmatprep.subr.mxu0 0.0
    %779 = vmatpush1.msra.mxu0 %v282
    %780 = vmatprep.subr.mxu0 0.0
    %781 = vmatpush1.msra.mxu0 %v281
    %782 = vmatprep.subr.mxu0 0.0
    %783 = vmatpush1.msra.mxu0 %v280
    %784 = vmatprep.subr.mxu0 0.0
    %785 = vmatpush1.msra.mxu0 %v279
    %786 = vmatprep.subr.mxu0 0.0
    %787 = vmatpush1.msra.mxu0 %v278
    %788 = vmatprep.subr.mxu0 0.0
    %789 = vmatpush2.msra.mxu0 %v309
    %790 = vmatprep.subr.mxu0 0.0
    %791 = vmatpush2.msra.mxu0 %v308
    %792 = vmatprep.subr.mxu0 0.0
    %793 = vmatpush2.msra.mxu0 %v307
    %794 = vmatprep.subr.mxu0 0.0
    %795 = vmatpush2.msra.mxu0 %v306
    %796 = vmatprep.subr.mxu0 0.0
    %797 = vmatpush2.msra.mxu0 %v305
    %798 = vmatprep.subr.mxu0 0.0
    %799 = vmatpush2.msra.mxu0 %v304
    %800 = vmatprep.subr.mxu0 0.0
    %801 = vmatpush2.msra.mxu0 %v303
    %802 = vmatprep.subr.mxu0 0.0
    %803 = vmatpush2.msra.mxu0 %v302
    %804 = vmatprep.subr.mxu0 0.0
    %805 = vmatpush2.msra.mxu0 %v301
    %806 = vmatprep.subr.mxu0 0.0
    %807 = vmatpush2.msra.mxu0 %v300
    %808 = vmatprep.subr.mxu0 0.0
    %809 = vmatpush2.msra.mxu0 %v299
    %810 = vmatprep.subr.mxu0 0.0
    %811 = vmatpush2.msra.mxu0 %v298
    %812 = vmatprep.subr.mxu0 0.0
    %813 = vmatpush2.msra.mxu0 %v297
    %814 = vmatprep.subr.mxu0 0.0
    %815 = vmatpush2.msra.mxu0 %v296
    %816 = vmatprep.subr.mxu0 0.0
    %817 = vmatpush2.msra.mxu0 %v295
    %818 = vmatprep.subr.mxu0 0.0
    %819 = vmatpush2.msra.mxu0 %v294
    %820 = vmatprep.mubr.f32.mxu0 %v97
    %821 = vmatmul.mubr.f32.gmra.mxu0 %v96
    %v822 = vpop.f32.mrf.mxu0
    %v823 = vadd.f32 %v748, %v822
    %v824 = vpop.f32.mrf.mxu0
    %825 = vmatprep.mubr.f32.mxu0 %v113
    %826 = vmatmul.mubr.f32.gmra.mxu0 %v112
    %v827 = vpop.f32.mrf.mxu0
    %v828 = vadd.f32 %v753, %v827
    %v829 = vpop.f32.mrf.mxu0
    %830 = vdwg.mxu0
    %831 = vmatprep.subr.mxu0 0.0
    %832 = vmatpush1.msra.mxu0 %v325
    %833 = vmatprep.subr.mxu0 0.0
    %834 = vmatpush1.msra.mxu0 %v324
    %835 = vmatprep.subr.mxu0 0.0
    %836 = vmatpush1.msra.mxu0 %v323
    %837 = vmatprep.subr.mxu0 0.0
    %838 = vmatpush1.msra.mxu0 %v322
    %839 = vmatprep.subr.mxu0 0.0
    %840 = vmatpush1.msra.mxu0 %v321
    %841 = vmatprep.subr.mxu0 0.0
    %842 = vmatpush1.msra.mxu0 %v320
    %843 = vmatprep.subr.mxu0 0.0
    %844 = vmatpush1.msra.mxu0 %v319
    %845 = vmatprep.subr.mxu0 0.0
    %846 = vmatpush1.msra.mxu0 %v318
    %847 = vmatprep.subr.mxu0 0.0
    %848 = vmatpush1.msra.mxu0 %v317
    %849 = vmatprep.subr.mxu0 0.0
    %850 = vmatpush1.msra.mxu0 %v316
    %851 = vmatprep.subr.mxu0 0.0
    %852 = vmatpush1.msra.mxu0 %v315
    %853 = vmatprep.subr.mxu0 0.0
    %854 = vmatpush1.msra.mxu0 %v314
    %855 = vmatprep.subr.mxu0 0.0
    %856 = vmatpush1.msra.mxu0 %v313
    %857 = vmatprep.subr.mxu0 0.0
    %858 = vmatpush1.msra.mxu0 %v312
    %859 = vmatprep.subr.mxu0 0.0
    %860 = vmatpush1.msra.mxu0 %v311
    %861 = vmatprep.subr.mxu0 0.0
    %862 = vmatpush1.msra.mxu0 %v310
    %863 = vmatprep.subr.mxu0 0.0
    %864 = vmatpush2.msra.mxu0 %v341
    %865 = vmatprep.subr.mxu0 0.0
    %866 = vmatpush2.msra.mxu0 %v340
    %867 = vmatprep.subr.mxu0 0.0
    %868 = vmatpush2.msra.mxu0 %v339
    %869 = vmatprep.subr.mxu0 0.0
    %870 = vmatpush2.msra.mxu0 %v338
    %871 = vmatprep.subr.mxu0 0.0
    %872 = vmatpush2.msra.mxu0 %v337
    %873 = vmatprep.subr.mxu0 0.0
    %874 = vmatpush2.msra.mxu0 %v336
    %875 = vmatprep.subr.mxu0 0.0
    %876 = vmatpush2.msra.mxu0 %v335
    %877 = vmatprep.subr.mxu0 0.0
    %878 = vmatpush2.msra.mxu0 %v334
    %879 = vmatprep.subr.mxu0 0.0
    %880 = vmatpush2.msra.mxu0 %v333
    %881 = vmatprep.subr.mxu0 0.0
    %882 = vmatpush2.msra.mxu0 %v332
    %883 = vmatprep.subr.mxu0 0.0
    %884 = vmatpush2.msra.mxu0 %v331
    %885 = vmatprep.subr.mxu0 0.0
    %886 = vmatpush2.msra.mxu0 %v330
    %887 = vmatprep.subr.mxu0 0.0
    %888 = vmatpush2.msra.mxu0 %v329
    %889 = vmatprep.subr.mxu0 0.0
    %890 = vmatpush2.msra.mxu0 %v328
    %891 = vmatprep.subr.mxu0 0.0
    %892 = vmatpush2.msra.mxu0 %v327
    %893 = vmatprep.subr.mxu0 0.0
    %894 = vmatpush2.msra.mxu0 %v326
    %895 = vmatprep.mubr.f32.mxu0 %v99
    %896 = vmatmul.mubr.f32.gmra.mxu0 %v98
    %v897 = vpop.f32.mrf.mxu0
    %v898 = vadd.f32 %v823, %v897
    %v899 = vpop.f32.mrf.mxu0
    %900 = vmatprep.mubr.f32.mxu0 %v115
    %901 = vmatmul.mubr.f32.gmra.mxu0 %v114
    %v902 = vpop.f32.mrf.mxu0
    %v903 = vadd.f32 %v828, %v902
    %v904 = vpop.f32.mrf.mxu0
    %905 = vdwg.mxu0
    %906 = vmatprep.subr.mxu0 0.0
    %907 = vmatpush1.msra.mxu0 %v357
    %908 = vmatprep.subr.mxu0 0.0
    %909 = vmatpush1.msra.mxu0 %v356
    %910 = vmatprep.subr.mxu0 0.0
    %911 = vmatpush1.msra.mxu0 %v355
    %912 = vmatprep.subr.mxu0 0.0
    %913 = vmatpush1.msra.mxu0 %v354
    %914 = vmatprep.subr.mxu0 0.0
    %915 = vmatpush1.msra.mxu0 %v353
    %916 = vmatprep.subr.mxu0 0.0
    %917 = vmatpush1.msra.mxu0 %v352
    %918 = vmatprep.subr.mxu0 0.0
    %919 = vmatpush1.msra.mxu0 %v351
    %920 = vmatprep.subr.mxu0 0.0
    %921 = vmatpush1.msra.mxu0 %v350
    %922 = vmatprep.subr.mxu0 0.0
    %923 = vmatpush1.msra.mxu0 %v349
    %924 = vmatprep.subr.mxu0 0.0
    %925 = vmatpush1.msra.mxu0 %v348
    %926 = vmatprep.subr.mxu0 0.0
    %927 = vmatpush1.msra.mxu0 %v347
    %928 = vmatprep.subr.mxu0 0.0
    %929 = vmatpush1.msra.mxu0 %v346
    %930 = vmatprep.subr.mxu0 0.0
    %931 = vmatpush1.msra.mxu0 %v345
    %932 = vmatprep.subr.mxu0 0.0
    %933 = vmatpush1.msra.mxu0 %v344
    %934 = vmatprep.subr.mxu0 0.0
    %935 = vmatpush1.msra.mxu0 %v343
    %936 = vmatprep.subr.mxu0 0.0
    %937 = vmatpush1.msra.mxu0 %v342
    %938 = vmatprep.subr.mxu0 0.0
    %939 = vmatpush2.msra.mxu0 %v373
    %940 = vmatprep.subr.mxu0 0.0
    %941 = vmatpush2.msra.mxu0 %v372
    %942 = vmatprep.subr.mxu0 0.0
    %943 = vmatpush2.msra.mxu0 %v371
    %944 = vmatprep.subr.mxu0 0.0
    %945 = vmatpush2.msra.mxu0 %v370
    %946 = vmatprep.subr.mxu0 0.0
    %947 = vmatpush2.msra.mxu0 %v369
    %948 = vmatprep.subr.mxu0 0.0
    %949 = vmatpush2.msra.mxu0 %v368
    %950 = vmatprep.subr.mxu0 0.0
    %951 = vmatpush2.msra.mxu0 %v367
    %952 = vmatprep.subr.mxu0 0.0
    %953 = vmatpush2.msra.mxu0 %v366
    %954 = vmatprep.subr.mxu0 0.0
    %955 = vmatpush2.msra.mxu0 %v365
    %956 = vmatprep.subr.mxu0 0.0
    %957 = vmatpush2.msra.mxu0 %v364
    %958 = vmatprep.subr.mxu0 0.0
    %959 = vmatpush2.msra.mxu0 %v363
    %960 = vmatprep.subr.mxu0 0.0
    %961 = vmatpush2.msra.mxu0 %v362
    %962 = vmatprep.subr.mxu0 0.0
    %963 = vmatpush2.msra.mxu0 %v361
    %964 = vmatprep.subr.mxu0 0.0
    %965 = vmatpush2.msra.mxu0 %v360
    %966 = vmatprep.subr.mxu0 0.0
    %967 = vmatpush2.msra.mxu0 %v359
    %968 = vmatprep.subr.mxu0 0.0
    %969 = vmatpush2.msra.mxu0 %v358
    %970 = vmatprep.mubr.f32.mxu0 %v101
    %971 = vmatmul.mubr.f32.gmra.mxu0 %v100
    %v972 = vpop.f32.mrf.mxu0
    %v973 = vadd.f32 %v898, %v972
    %v974 = vpop.f32.mrf.mxu0
    %975 = vmatprep.mubr.f32.mxu0 %v117
    %976 = vmatmul.mubr.f32.gmra.mxu0 %v116
    %v977 = vpop.f32.mrf.mxu0
    %v978 = vadd.f32 %v903, %v977
    %v979 = vpop.f32.mrf.mxu0
    %980 = vdwg.mxu0
    %v981 = vld [vmem:[#allocation8] sm:$0xff]
    %v982 = vld [vmem:[#allocation8 + $0x8] sm:$0xff]
    %v983 = vld [vmem:[#allocation8 + $0x10] sm:$0xff]
    %v984 = vld [vmem:[#allocation8 + $0x18] sm:$0xff]
    %v985 = vld [vmem:[#allocation8 + $0x20] sm:$0xff]
    %v986 = vld [vmem:[#allocation8 + $0x28] sm:$0xff]
    %v987 = vld [vmem:[#allocation8 + $0x30] sm:$0xff]
    %v988 = vld [vmem:[#allocation8 + $0x38] sm:$0xff]
    %v989 = vld [vmem:[#allocation8 + $0x40] sm:$0xff]
    %v990 = vld [vmem:[#allocation8 + $0x48] sm:$0xff]
    %v991 = vld [vmem:[#allocation8 + $0x50] sm:$0xff]
    %v992 = vld [vmem:[#allocation8 + $0x58] sm:$0xff]
    %v993 = vld [vmem:[#allocation8 + $0x60] sm:$0xff]
    %v994 = vld [vmem:[#allocation8 + $0x68] sm:$0xff]
    %v995 = vld [vmem:[#allocation8 + $0x70] sm:$0xff]
    %v996 = vld [vmem:[#allocation8 + $0x78] sm:$0xff]
    %v997 = vld [vmem:[#allocation8 + $0x80] sm:$0xff]
    %v998 = vld [vmem:[#allocation8 + $0x88] sm:$0xff]
    %v999 = vld [vmem:[#allocation8 + $0x90] sm:$0xff]
    %v1000 = vld [vmem:[#allocation8 + $0x98] sm:$0xff]
    %v1001 = vld [vmem:[#allocation8 + $0xa0] sm:$0xff]
    %v1002 = vld [vmem:[#allocation8 + $0xa8] sm:$0xff]
    %v1003 = vld [vmem:[#allocation8 + $0xb0] sm:$0xff]
    %v1004 = vld [vmem:[#allocation8 + $0xb8] sm:$0xff]
    %v1005 = vld [vmem:[#allocation8 + $0xc0] sm:$0xff]
    %v1006 = vld [vmem:[#allocation8 + $0xc8] sm:$0xff]
    %v1007 = vld [vmem:[#allocation8 + $0xd0] sm:$0xff]
    %v1008 = vld [vmem:[#allocation8 + $0xd8] sm:$0xff]
    %v1009 = vld [vmem:[#allocation8 + $0xe0] sm:$0xff]
    %v1010 = vld [vmem:[#allocation8 + $0xe8] sm:$0xff]
    %v1011 = vld [vmem:[#allocation8 + $0xf0] sm:$0xff]
    %v1012 = vld [vmem:[#allocation8 + $0xf8] sm:$0xff]
    %v1013 = vld [vmem:[%s4] sm:$0x3]
    %v1015 = vlaneseq
    %v1016 = vshrl.u32 %v1015, 7
    %v1017 = vsub.s32 0, %v1016
    %v1018 = vrot.slane %v1013, %v1017
    %v1019 = vlaneseq
    %v1020 = vshrl.u32 %v1019, 7
    %v1021 = vsub.s32 1, %v1020
    %v1022 = vrot.slane %v1013, %v1021
    %1025 = vmatprep.subr.mxu0 %v1012
    %1026 = vmatpush1.msra.mxu0 %v1011
    %1027 = vmatprep.subr.mxu0 %v1010
    %1028 = vmatpush1.msra.mxu0 %v1009
    %1029 = vmatprep.subr.mxu0 %v1008
    %1030 = vmatpush1.msra.mxu0 %v1007
    %1031 = vmatprep.subr.mxu0 %v1006
    %1032 = vmatpush1.msra.mxu0 %v1005
    %1033 = vmatprep.subr.mxu0 %v1004
    %1034 = vmatpush1.msra.mxu0 %v1003
    %1035 = vmatprep.subr.mxu0 %v1002
    %1036 = vmatpush1.msra.mxu0 %v1001
    %1037 = vmatprep.subr.mxu0 %v1000
    %1038 = vmatpush1.msra.mxu0 %v999
    %1039 = vmatprep.subr.mxu0 %v998
    %1040 = vmatpush1.msra.mxu0 %v997
    %1041 = vmatprep.subr.mxu0 %v996
    %1042 = vmatpush1.msra.mxu0 %v995
    %1043 = vmatprep.subr.mxu0 %v994
    %1044 = vmatpush1.msra.mxu0 %v993
    %1045 = vmatprep.subr.mxu0 %v992
    %1046 = vmatpush1.msra.mxu0 %v991
    %1047 = vmatprep.subr.mxu0 %v990
    %1048 = vmatpush1.msra.mxu0 %v989
    %1049 = vmatprep.subr.mxu0 %v988
    %1050 = vmatpush1.msra.mxu0 %v987
    %1051 = vmatprep.subr.mxu0 %v986
    %1052 = vmatpush1.msra.mxu0 %v985
    %1053 = vmatprep.subr.mxu0 %v984
    %1054 = vmatpush1.msra.mxu0 %v983
    %1055 = vmatprep.subr.mxu0 %v982
    %1056 = vmatpush1.msra.mxu0 %v981
    %1057 = vmatprep.subr.mxu0 0.0
    %1058 = vmatpush2.msra.mxu0 0.0
    %1059 = vmatprep.subr.mxu0 0.0
    %1060 = vmatpush2.msra.mxu0 0.0
    %1061 = vmatprep.subr.mxu0 0.0
    %1062 = vmatpush2.msra.mxu0 0.0
    %1063 = vmatprep.subr.mxu0 0.0
    %1064 = vmatpush2.msra.mxu0 0.0
    %1065 = vmatprep.subr.mxu0 0.0
    %1066 = vmatpush2.msra.mxu0 0.0
    %1067 = vmatprep.subr.mxu0 0.0
    %1068 = vmatpush2.msra.mxu0 0.0
    %1069 = vmatprep.subr.mxu0 0.0
    %1070 = vmatpush2.msra.mxu0 0.0
    %1071 = vmatprep.subr.mxu0 0.0
    %1072 = vmatpush2.msra.mxu0 0.0
    %1073 = vmatprep.subr.mxu0 0.0
    %1074 = vmatpush2.msra.mxu0 0.0
    %1075 = vmatprep.subr.mxu0 0.0
    %1076 = vmatpush2.msra.mxu0 0.0
    %1077 = vmatprep.subr.mxu0 0.0
    %1078 = vmatpush2.msra.mxu0 0.0
    %1079 = vmatprep.subr.mxu0 0.0
    %1080 = vmatpush2.msra.mxu0 0.0
    %1081 = vmatprep.subr.mxu0 0.0
    %1082 = vmatpush2.msra.mxu0 0.0
    %1083 = vmatprep.subr.mxu0 0.0
    %1084 = vmatpush2.msra.mxu0 0.0
    %1085 = vmatprep.subr.mxu0 0.0
    %1086 = vmatpush2.msra.mxu0 0.0
    %1087 = vmatprep.subr.mxu0 0.0
    %1088 = vmatpush2.msra.mxu0 0.0
    %1089 = vmatprep.mubr.f32.mxu0 0.0
    %1090 = vmatmul.mubr.f32.gmra.mxu0 %v973
    %v1091 = vpop.f32.mrf.mxu0
    %v1092 = vadd.f32 %v1018, %v1091
    %v1093 = vpop.f32.mrf.mxu0
    %v1094 = vadd.f32 %v1022, %v1093
    %1095 = vmatprep.mubr.f32.mxu0 0.0
    %1096 = vmatmul.mubr.f32.gmra.mxu0 %v978
    %v1097 = vpop.f32.mrf.mxu0
    %v1098 = vadd.f32 %v1018, %v1097
    %v1099 = vpop.f32.mrf.mxu0
    %v1100 = vadd.f32 %v1022, %v1099
    %1101 = vdwg.mxu0
    %v1102 = vtanh.pop %v1092
    %v1103 = vtanh.pop %v1098
    %v1104 = vxor.u32 %v1094, 2147483648
    %v1105 = vxor.u32 %v1100, 2147483648
    %v1106 = vmul.f32 %v1104, 1.442695
    %v1107 = vpow.pop %v1106
    %v1108 = vmul.f32 %v1105, 1.442695
    %v1109 = vpow.pop %v1108
    %v1110 = vadd.f32 %v1107, 1.0
    %v1111 = vadd.f32 %v1109, 1.0
    %v1112 = vrcp.pop %v1110
    %v1113 = vmul.f32 1.0, %v1112
    %v1114 = vrcp.pop %v1111
    %v1115 = vmul.f32 1.0, %v1114
    %v1116 = vmul.f32 %v1102, %v1113
    %v1117 = vmul.f32 %v1103, %v1115
    %v1118 = vld [vmem:[%s5] sm:$0x1]
    %v1120 = vlaneseq
    %v1121 = vshrl.u32 %v1120, 7
    %v1122 = vsub.s32 0, %v1121
    %v1123 = vrot.slane %v1118, %v1122
    %v1125 = vmul.f32 %v1116, %v1123
    %v1126 = vmul.f32 %v1117, %v1123
    %1127 = vadd.xlane.f32.xlu0 %v1125
    %v1128 = vpop.xlane.xlu0 %1127
    %1129 = vadd.xlane.f32.xlu0 %v1126
    %v1130 = vpop.xlane.xlu0 %1129
    %v1133 = vlaneseq
    %v1134 = vand.u32 %v1133, 127
    %v1135 = vlaneseq
    %v1136 = vshrl.u32 %v1135, 7
    %v1137 = vsub.s32 %v1134, %v1136
    %v1138 = vrot.slane %v1128, %v1137
    %v1139 = vlaneseq
    %v1140 = vshrl.u32 %v1139, 7
    %v1141 = vsub.s32 %v1134, %v1140
    %v1142 = vrot.slane %v1130, %v1141
    %vm1143 = vcmask 1041409
    %v1144 = vsel %vm1143, %v1142, %v1138
    %vm1146 = vcmask 58368
    %v1147 = vsel %vm1146, %v1144, -inf
    %1148 = vmax.xlane.f32.xlu0 %v1147
    %v1149 = vpop.xlane.xlu0 %1148
    %v1151 = vlaneseq
    %v1152 = vshrl.u32 %v1151, 7
    %v1153 = vsub.s32 0, %v1152
    %v1154 = vrot.slane %v1149, %v1153
    %v1155 = vlaneseq
    %v1156 = vshrl.u32 %v1155, 7
    %v1157 = vsub.s32 1, %v1156
    %v1158 = vrot.slane %v1149, %v1157
    %v1161 = vsub.f32 %v1128, %v1154
    %v1162 = vsub.f32 %v1130, %v1158
    %v1163 = vmul.f32 %v1161, 1.442695
    %v1164 = vpow.pop %v1163
    %v1165 = vmul.f32 %v1162, 1.442695
    %v1166 = vpow.pop %v1165
    %1169 = vset.pattern.permute.xlu0 0
    %1170 = vperm.xlu0 %1169, %v1164
    %v1171 = vpop.permute.xlu0 %1170
    %1172 = vset.pattern.permute.xlu0 0
    %1173 = vperm.xlu0 %1172, %v1166
    %v1174 = vpop.permute.xlu0 %1173
    %v1175 = vlaneseq
    %v1176 = vshrl.u32 %v1175, 7
    %v1177 = vsub.s32 %v1134, %v1176
    %v1178 = vrot.slane %v1171, %v1177
    %v1179 = vlaneseq
    %v1180 = vshrl.u32 %v1179, 7
    %v1181 = vsub.s32 %v1134, %v1180
    %v1182 = vrot.slane %v1174, %v1181
    %v1183 = vsel %vm1143, %v1182, %v1178
    %v1185 = vsel %vm1146, %v1183, 0.0
    %1186 = vadd.xlane.f32.xlu0 %v1185
    %v1187 = vpop.xlane.xlu0 %1186
    %v1189 = vlaneseq
    %v1190 = vshrl.u32 %v1189, 7
    %v1191 = vsub.s32 0, %v1190
    %v1192 = vrot.slane %v1187, %v1191
    %v1193 = vlaneseq
    %v1194 = vshrl.u32 %v1193, 7
    %v1195 = vsub.s32 1, %v1194
    %v1196 = vrot.slane %v1187, %v1195
    %v1199 = vrcp.pop %v1192
    %v1200 = vmul.f32 %v1164, %v1199
    %v1201 = vrcp.pop %v1196
    %v1202 = vmul.f32 %v1166, %v1201
    %1205 = vset.pattern.permute.xlu0 0
    %1206 = vperm.xlu0 %1205, %v1200
    %v1207 = vpop.permute.xlu0 %1206
    %1208 = vset.pattern.permute.xlu0 0
    %1209 = vperm.xlu0 %1208, %v1202
    %v1210 = vpop.permute.xlu0 %1209
    %v1211 = vlaneseq
    %v1212 = vshrl.u32 %v1211, 7
    %v1213 = vsub.s32 %v1134, %v1212
    %v1214 = vrot.slane %v1207, %v1213
    %v1215 = vlaneseq
    %v1216 = vshrl.u32 %v1215, 7
    %v1217 = vsub.s32 %v1134, %v1216
    %v1218 = vrot.slane %v1210, %v1217
    %v1219 = vsel %vm1143, %v1218, %v1214
    %1221 = vst.msk [vmem:[#allocation9] sm:$0x3] %vm1146, %v1219
    %v1224 = vmul.f32 %v973, %v1207
    %v1225 = vmul.f32 %v978, %v1210
    %v1226 = vrot.slane %v1224, 4
    %v1227 = vadd.f32 %v1224, %v1226
    %v1228 = vrot.slane %v1227, 2
    %v1229 = vadd.f32 %v1227, %v1228
    %v1230 = vrot.slane %v1229, 1
    %v1231 = vadd.f32 %v1229, %v1230
    %v1232 = vrot.slane %v1225, 4
    %v1233 = vadd.f32 %v1225, %v1232
    %v1234 = vrot.slane %v1233, 2
    %v1235 = vadd.f32 %v1233, %v1234
    %v1236 = vrot.slane %v1235, 1
    %v1237 = vadd.f32 %v1235, %v1236
    %v1238 = vld [vmem:[%s6] sm:$0xff]
    %v1239 = vld [vmem:[%s6 + $0x8] sm:$0xff]
    %v1240 = vld [vmem:[%s6 + $0x10] sm:$0xff]
    %v1241 = vld [vmem:[%s6 + $0x18] sm:$0xff]
    %v1242 = vld [vmem:[%s6 + $0x20] sm:$0xff]
    %v1243 = vld [vmem:[%s6 + $0x28] sm:$0xff]
    %v1244 = vld [vmem:[%s6 + $0x30] sm:$0xff]
    %v1245 = vld [vmem:[%s6 + $0x38] sm:$0xff]
    %v1246 = vld [vmem:[%s6 + $0x40] sm:$0xff]
    %v1247 = vld [vmem:[%s6 + $0x48] sm:$0xff]
    %v1248 = vld [vmem:[%s6 + $0x50] sm:$0xff]
    %v1249 = vld [vmem:[%s6 + $0x58] sm:$0xff]
    %v1250 = vld [vmem:[%s6 + $0x60] sm:$0xff]
    %v1251 = vld [vmem:[%s6 + $0x68] sm:$0xff]
    %v1252 = vld [vmem:[%s6 + $0x70] sm:$0xff]
    %v1253 = vld [vmem:[%s6 + $0x78] sm:$0xff]
    %v1254 = vld [vmem:[%s7] sm:$0x1]
    %v1256 = vlaneseq
    %v1257 = vshrl.u32 %v1256, 7
    %v1258 = vsub.s32 0, %v1257
    %v1259 = vrot.slane %v1254, %v1258
    %v1263 = vsel %vm1143, %v1237, %v1231
    %1265 = vmatprep.subr.mxu0 0.0
    %1266 = vmatpush1.msra.mxu0 %v1253
    %1267 = vmatprep.subr.mxu0 0.0
    %1268 = vmatpush1.msra.mxu0 %v1252
    %1269 = vmatprep.subr.mxu0 0.0
    %1270 = vmatpush1.msra.mxu0 %v1251
    %1271 = vmatprep.subr.mxu0 0.0
    %1272 = vmatpush1.msra.mxu0 %v1250
    %1273 = vmatprep.subr.mxu0 0.0
    %1274 = vmatpush1.msra.mxu0 %v1249
    %1275 = vmatprep.subr.mxu0 0.0
    %1276 = vmatpush1.msra.mxu0 %v1248
    %1277 = vmatprep.subr.mxu0 0.0
    %1278 = vmatpush1.msra.mxu0 %v1247
    %1279 = vmatprep.subr.mxu0 0.0
    %1280 = vmatpush1.msra.mxu0 %v1246
    %1281 = vmatprep.subr.mxu0 0.0
    %1282 = vmatpush1.msra.mxu0 %v1245
    %1283 = vmatprep.subr.mxu0 0.0
    %1284 = vmatpush1.msra.mxu0 %v1244
    %1285 = vmatprep.subr.mxu0 0.0
    %1286 = vmatpush1.msra.mxu0 %v1243
    %1287 = vmatprep.subr.mxu0 0.0
    %1288 = vmatpush1.msra.mxu0 %v1242
    %1289 = vmatprep.subr.mxu0 0.0
    %1290 = vmatpush1.msra.mxu0 %v1241
    %1291 = vmatprep.subr.mxu0 0.0
    %1292 = vmatpush1.msra.mxu0 %v1240
    %1293 = vmatprep.subr.mxu0 0.0
    %1294 = vmatpush1.msra.mxu0 %v1239
    %1295 = vmatprep.subr.mxu0 0.0
    %1296 = vmatpush1.msra.mxu0 %v1238
    %1297 = vmatprep.subr.mxu0 0.0
    %1298 = vmatpush2.msra.mxu0 0.0
    %1299 = vmatprep.subr.mxu0 0.0
    %1300 = vmatpush2.msra.mxu0 0.0
    %1301 = vmatprep.subr.mxu0 0.0
    %1302 = vmatpush2.msra.mxu0 0.0
    %1303 = vmatprep.subr.mxu0 0.0
    %1304 = vmatpush2.msra.mxu0 0.0
    %1305 = vmatprep.subr.mxu0 0.0
    %1306 = vmatpush2.msra.mxu0 0.0
    %1307 = vmatprep.subr.mxu0 0.0
    %1308 = vmatpush2.msra.mxu0 0.0
    %1309 = vmatprep.subr.mxu0 0.0
    %1310 = vmatpush2.msra.mxu0 0.0
    %1311 = vmatprep.subr.mxu0 0.0
    %1312 = vmatpush2.msra.mxu0 0.0
    %1313 = vmatprep.subr.mxu0 0.0
    %1314 = vmatpush2.msra.mxu0 0.0
    %1315 = vmatprep.subr.mxu0 0.0
    %1316 = vmatpush2.msra.mxu0 0.0
    %1317 = vmatprep.subr.mxu0 0.0
    %1318 = vmatpush2.msra.mxu0 0.0
    %1319 = vmatprep.subr.mxu0 0.0
    %1320 = vmatpush2.msra.mxu0 0.0
    %1321 = vmatprep.subr.mxu0 0.0
    %1322 = vmatpush2.msra.mxu0 0.0
    %1323 = vmatprep.subr.mxu0 0.0
    %1324 = vmatpush2.msra.mxu0 0.0
    %1325 = vmatprep.subr.mxu0 0.0
    %1326 = vmatpush2.msra.mxu0 0.0
    %1327 = vmatprep.subr.mxu0 0.0
    %1328 = vmatpush2.msra.mxu0 0.0
    %1329 = vmatprep.mubr.f32.mxu0 0.0
    %1330 = vmatmul.mubr.f32.gmra.mxu0 %v1263
    %v1331 = vpop.f32.mrf.mxu0
    %v1332 = vadd.f32 %v1259, %v1331
    %v1333 = vpop.f32.mrf.mxu0
    %1334 = vdwg.mxu0
    %v1335 = vtanh.pop %v1332
    %v1336 = vld [vmem:[%s8] sm:$0xff]
    %v1337 = vld [vmem:[%s8 + $0x8] sm:$0xff]
    %v1338 = vld [vmem:[%s8 + $0x10] sm:$0xff]
    %v1339 = vld [vmem:[%s8 + $0x18] sm:$0xff]
    %v1340 = vld [vmem:[%s8 + $0x20] sm:$0xff]
    %v1341 = vld [vmem:[%s8 + $0x28] sm:$0xff]
    %v1342 = vld [vmem:[%s8 + $0x30] sm:$0xff]
    %v1343 = vld [vmem:[%s8 + $0x38] sm:$0xff]
    %v1344 = vld [vmem:[%s8 + $0x40] sm:$0xff]
    %v1345 = vld [vmem:[%s8 + $0x48] sm:$0xff]
    %v1346 = vld [vmem:[%s8 + $0x50] sm:$0xff]
    %v1347 = vld [vmem:[%s8 + $0x58] sm:$0xff]
    %v1348 = vld [vmem:[%s8 + $0x60] sm:$0xff]
    %v1349 = vld [vmem:[%s8 + $0x68] sm:$0xff]
    %v1350 = vld [vmem:[%s8 + $0x70] sm:$0xff]
    %v1351 = vld [vmem:[%s8 + $0x78] sm:$0xff]
    %v1352 = vld [vmem:[%s9] sm:$0x1]
    %v1354 = vlaneseq
    %v1355 = vshrl.u32 %v1354, 7
    %v1356 = vsub.s32 0, %v1355
    %v1357 = vrot.slane %v1352, %v1356
    %1359 = vmatprep.subr.mxu0 0.0
    %1360 = vmatpush1.msra.mxu0 %v1351
    %1361 = vmatprep.subr.mxu0 0.0
    %1362 = vmatpush1.msra.mxu0 %v1350
    %1363 = vmatprep.subr.mxu0 0.0
    %1364 = vmatpush1.msra.mxu0 %v1349
    %1365 = vmatprep.subr.mxu0 0.0
    %1366 = vmatpush1.msra.mxu0 %v1348
    %1367 = vmatprep.subr.mxu0 0.0
    %1368 = vmatpush1.msra.mxu0 %v1347
    %1369 = vmatprep.subr.mxu0 0.0
    %1370 = vmatpush1.msra.mxu0 %v1346
    %1371 = vmatprep.subr.mxu0 0.0
    %1372 = vmatpush1.msra.mxu0 %v1345
    %1373 = vmatprep.subr.mxu0 0.0
    %1374 = vmatpush1.msra.mxu0 %v1344
    %1375 = vmatprep.subr.mxu0 0.0
    %1376 = vmatpush1.msra.mxu0 %v1343
    %1377 = vmatprep.subr.mxu0 0.0
    %1378 = vmatpush1.msra.mxu0 %v1342
    %1379 = vmatprep.subr.mxu0 0.0
    %1380 = vmatpush1.msra.mxu0 %v1341
    %1381 = vmatprep.subr.mxu0 0.0
    %1382 = vmatpush1.msra.mxu0 %v1340
    %1383 = vmatprep.subr.mxu0 0.0
    %1384 = vmatpush1.msra.mxu0 %v1339
    %1385 = vmatprep.subr.mxu0 0.0
    %1386 = vmatpush1.msra.mxu0 %v1338
    %1387 = vmatprep.subr.mxu0 0.0
    %1388 = vmatpush1.msra.mxu0 %v1337
    %1389 = vmatprep.subr.mxu0 0.0
    %1390 = vmatpush1.msra.mxu0 %v1336
    %1391 = vmatprep.subr.mxu0 0.0
    %1392 = vmatpush2.msra.mxu0 0.0
    %1393 = vmatprep.subr.mxu0 0.0
    %1394 = vmatpush2.msra.mxu0 0.0
    %1395 = vmatprep.subr.mxu0 0.0
    %1396 = vmatpush2.msra.mxu0 0.0
    %1397 = vmatprep.subr.mxu0 0.0
    %1398 = vmatpush2.msra.mxu0 0.0
    %1399 = vmatprep.subr.mxu0 0.0
    %1400 = vmatpush2.msra.mxu0 0.0
    %1401 = vmatprep.subr.mxu0 0.0
    %1402 = vmatpush2.msra.mxu0 0.0
    %1403 = vmatprep.subr.mxu0 0.0
    %1404 = vmatpush2.msra.mxu0 0.0
    %1405 = vmatprep.subr.mxu0 0.0
    %1406 = vmatpush2.msra.mxu0 0.0
    %1407 = vmatprep.subr.mxu0 0.0
    %1408 = vmatpush2.msra.mxu0 0.0
    %1409 = vmatprep.subr.mxu0 0.0
    %1410 = vmatpush2.msra.mxu0 0.0
    %1411 = vmatprep.subr.mxu0 0.0
    %1412 = vmatpush2.msra.mxu0 0.0
    %1413 = vmatprep.subr.mxu0 0.0
    %1414 = vmatpush2.msra.mxu0 0.0
    %1415 = vmatprep.subr.mxu0 0.0
    %1416 = vmatpush2.msra.mxu0 0.0
    %1417 = vmatprep.subr.mxu0 0.0
    %1418 = vmatpush2.msra.mxu0 0.0
    %1419 = vmatprep.subr.mxu0 0.0
    %1420 = vmatpush2.msra.mxu0 0.0
    %1421 = vmatprep.subr.mxu0 0.0
    %1422 = vmatpush2.msra.mxu0 0.0
    %1423 = vmatprep.mubr.f32.mxu0 0.0
    %1424 = vmatmul.mubr.f32.gmra.mxu0 %v1335
    %v1425 = vpop.f32.mrf.mxu0
    %v1426 = vadd.f32 %v1357, %v1425
    %v1427 = vpop.f32.mrf.mxu0
    %1428 = vdwg.mxu0
    %v1429 = vtanh.pop %v1426
    %v1430 = vld [vmem:[%s10] sm:$0x1]
    %v1432 = vlaneseq
    %v1433 = vshrl.u32 %v1432, 7
    %v1434 = vsub.s32 0, %v1433
    %v1435 = vrot.slane %v1430, %v1434
    %v1437 = vmul.f32 %v1429, %v1435
    %vm1438 = vcmask 517120
    %v1439 = vsel %vm1438, %v1437, 0.0
    %1440 = vadd.xlane.f32.xlu0 %v1439
    %v1441 = vpop.xlane.xlu0 %1440
    %s1442 = sld [smem:[#allocation2]]
    %v1443 = vstv %s1442
    %v1444 = vadd.f32 %v1441, %v1443
    %v1445 = vxor.u32 %v1444, 2147483648
    %v1446 = vmul.f32 %v1445, 1.442695
    %v1447 = vpow.pop %v1446
    %v1448 = vadd.f32 %v1447, 1.0
    %v1449 = vrcp.pop %v1448
    %v1450 = vmul.f32 1.0, %v1449
    %vm1451 = vcmask 1024
    %1452 = vst.msk [vmem:[%s12] sm:$0x3] %vm1451, %v1450
    // Predicated region
    $region62: #{tpu_custom_call.1} parent=1 // pred_check
      _
    $region63: #{tpu_custom_call.1} parent=1 // pred_check_branch
      %1454 = sbr.rel (0) target = $region65
    $region64: #{tpu_custom_call.1} parent=1 // pred_region
      _
    $region65: #{tpu_custom_call.1} parent=1 // pred_fallthru
      _
    // Predicated region
    $region66: #{tpu_custom_call.1} parent=1 // pred_check
      _
    $region67: #{tpu_custom_call.1} parent=1 // pred_check_branch
      %1456 = sbr.rel (0) target = $region69
    $region68: #{tpu_custom_call.1} parent=1 // pred_region
      %s1458 = ssub.s32 32, 32
      %1459 = vsyncadd [#allocation5], %s1458
      %s1461 = sshll.u32 [#allocation9], 4
      %s1462 = int_to_ptr.vmem [resolvable:$true] %s1461
      %1464 = dma.vmem_to_hbm [thread:$0]  %s1462, 32, %s13, [#allocation5]
    $region69: #{tpu_custom_call.1} parent=1 // pred_fallthru
      _
    // Predicated region
    $region70: #{tpu_custom_call.1} parent=1 // pred_check
      _
    $region71: #{tpu_custom_call.1} parent=1 // pred_check_branch
      %1466 = sbr.rel (0) target = $region73
    $region72: #{tpu_custom_call.1} parent=1 // pred_region
      _
    $region73: #{tpu_custom_call.1} parent=1 // pred_fallthru
      _
    // Predicated region
    $region74: #{tpu_custom_call.1} parent=1 // pred_check
      _
    $region75: #{tpu_custom_call.1} parent=1 // pred_check_branch
      %1468 = sbr.rel (0) target = $region77
    $region76: #{tpu_custom_call.1} parent=1 // pred_region
      %1469 = dma.done [#allocation5], 32
    $region77: #{tpu_custom_call.1} parent=1 // pred_fallthru
      _
    %1470 = vsyncpa [#allocation4], 1
    %1471 = vsyncpa [#allocation7], 1
    %1472 = vsyncpa [#allocation5], 1

</llo_original>
